<compile_context>
chip_gen: v5e
topology: v5e:2x2
jax: 0.10.0
libtpu: 0.0.40
codegen_flags: <defaults>
</compile_context>

<pallas_src>
import functools

import jax
import jax.numpy as jnp
from jax.experimental import pallas as pl
from jax.experimental.pallas import tpu as pltpu

# ----------------------------- configuration -----------------------------
B, IN_CH, H, W = 2, 3, 16, 16      # input image (NCHW)
ENC_DIM = 8                        # encoder out_dim
Q = 64                             # number of query coordinates
HID = 32                           # imnet hidden width
OUT_DIM = 3                        # imnet output (RGB)
C9 = ENC_DIM * 9                   # feat_unfold channels
D_IN = C9 + 2 + 2                  # + rel_coord + rel_cell = 76
# Row-tile cap; sweep toward 1024-2048 at real LIIF sizes (VMEM budget per step:
# ~(4*tm*76*2B)*2buf input + (tm*8*4B)*2buf output -> well under v7x's 64 MiB
# even at tm=2048, so the default scoped VMEM limit is left untouched here).
TM_MAX = 512


def _round_up(x, m):
    return ((x + m - 1) // m) * m


def _num_tensorcores():
    """Best-effort TensorCore count (v7x has 2, v5e/v6e have 1)."""
    try:
        info = pltpu.get_tpu_info()
        for name in ("num_cores", "core_count", "num_tensor_cores",
                     "tensorcore_count", "num_tensorcores"):
            v = getattr(info, name, None)
            if isinstance(v, int) and v > 0:
                return v
    except Exception:
        pass
    return 1


def _choose_row_tile(n):
    """Largest row tile (amortizes ~0.35us/step), capped at TM_MAX.

    Single-TC chips (v5e/v6e): one full-size tile for small/medium N.
    Multi-TC chips (v7x): keep >=2 'parallel' grid steps, but only once N is
    big enough that each tile still has >=256 rows (M = 4*tm stays a multiple
    of 256, native for the v6e/v7x MXU; v5e only needs multiples of 128).
    """
    tm = min(TM_MAX, _round_up(n, 8))
    if _num_tensorcores() > 1 and n >= 512:
        tm = min(tm, _round_up((n + 1) // 2, 64))
    return tm


# ----------------------------- Pallas query kernel -----------------------------
def _liif_query_kernel(x_ref, wq_ref, w1_ref, b1_ref, w2_ref, b2_ref,
                       w3_ref, b3_ref, o_ref):
    """x_ref:  (4*tm, 76)  query-major imnet inputs (rows 4q+j = shift j of query q)
       wq_ref: (tm, 4)     f32 pre-normalized, pre-swapped local-ensemble weights
       w1/w2:  bf16 (or f32), b1/b2/w3/b3: f32
       o_ref:  (tm, 8)     f32 (lanes >= OUT_DIM are zero via the padded w3/b3)
    """
    tm = wq_ref.shape[0]
    hid = w1_ref.shape[1]

    # 4 ensemble shifts fused into the matmul M dimension; bf16 operands,
    # f32 accumulation on the MXU.
    h = jnp.dot(x_ref[...], w1_ref[...],
                preferred_element_type=jnp.float32) + b1_ref[...]
    h = jnp.maximum(h, 0.0)
    h = jnp.dot(h.astype(w2_ref.dtype), w2_ref[...],
                preferred_element_type=jnp.float32) + b2_ref[...]
    h = jnp.maximum(h, 0.0)                                   # (4*tm, hid) f32

    # Local-ensemble combine at the hidden layer (valid since sum_j wq_j == 1 and
    # the last layer is affine): no per-shift predictions, no in-kernel divide,
    # and a 4x smaller final matmul.  Weights stay f32.
    h3 = h.reshape(tm, 4, hid)
    wq = wq_ref[...]
    hw = (h3[:, 0] * wq[:, 0:1] + h3[:, 1] * wq[:, 1:2]
          + h3[:, 2] * wq[:, 2:3] + h3[:, 3] * wq[:, 3:4])    # (tm, hid) f32

    o_ref[...] = (jnp.dot(hw, w3_ref[...], preferred_element_type=jnp.float32)
                  + b3_ref[...]).astype(o_ref.dtype)


def pallas_liif_query(x_all, wq, w1, b1, w2, b2, w3, b3,
                      *, operand_dtype=jnp.bfloat16):
    """x_all: (N*4, D) f32 query-major; wq: (N, 4) f32 normalized swapped weights.
    Returns (N, OUT_DIM) f32."""
    N4, D = x_all.shape
    assert N4 % 4 == 0
    N = N4 // 4
    hid = w1.shape[1]
    out_dim = w3.shape[1]
    OP = _round_up(out_dim, 8)           # 3 -> 8: full-last-dim block (compact writeback)
    tm = _choose_row_tile(N)
    Np = _round_up(N, tm)

    # bf16 operands for the dominant HBM read; weights/bias for the combine stay f32.
    x_p = jnp.pad(x_all, ((0, 4 * (Np - N)), (0, 0))).astype(operand_dtype)
    wq_p = jnp.pad(wq, ((0, Np - N), (0, 0))).astype(jnp.float32)
    w3_p = jnp.pad(w3, ((0, 0), (0, OP - out_dim))).astype(jnp.float32)
    b3_p = jnp.pad(b3, (0, OP - out_dim)).reshape(1, OP).astype(jnp.float32)

    out = pl.pallas_call(
        _liif_query_kernel,
        out_shape=jax.ShapeDtypeStruct((Np, OP), jnp.float32),
        grid_spec=pltpu.PrefetchScalarGridSpec(
            num_scalar_prefetch=0,
            grid=(Np // tm,),
            in_specs=[
                pl.BlockSpec((4 * tm, D), lambda i: (i, 0)),   # unpadded 76-lane slab
                pl.BlockSpec((tm, 4), lambda i: (i, 0)),       # ensemble weights
                pl.BlockSpec((D, hid), lambda i: (0, 0)),
                pl.BlockSpec((1, hid), lambda i: (0, 0)),
                pl.BlockSpec((hid, hid), lambda i: (0, 0)),
                pl.BlockSpec((1, hid), lambda i: (0, 0)),
                pl.BlockSpec((hid, OP), lambda i: (0, 0)),
                pl.BlockSpec((1, OP), lambda i: (0, 0)),
            ],
            out_specs=pl.BlockSpec((tm, OP), lambda i: (i, 0)),
        ),
        compiler_params=pltpu.CompilerParams(dimension_semantics=("parallel",)),
    )(x_p, wq_p,
      w1.astype(operand_dtype), b1.reshape(1, hid).astype(jnp.float32),
      w2.astype(operand_dtype), b2.reshape(1, hid).astype(jnp.float32),
      w3_p, b3_p)
    return out[:N, :out_dim]


# ----------------------------- plain-JAX glue -----------------------------
def unfold3x3(x):
    """F.unfold(x, 3, padding=1).view(B, C*9, H, W) — channel-major, then (kh,kw)."""
    Bb, C, Hh, Ww = x.shape
    xp = jnp.pad(x, ((0, 0), (0, 0), (1, 1), (1, 1)))
    cols = []
    for kh in range(3):
        for kw in range(3):
            cols.append(xp[:, :, kh:kh + Hh, kw:kw + Ww])
    out = jnp.stack(cols, axis=2)                       # (B, C, 9, H, W)
    return out.reshape(Bb, C * 9, Hh, Ww)


def _nearest_idx(g, size):
    """grid_sample(mode='nearest', align_corners=False) source index."""
    pix = ((g + 1.0) * size - 1.0) * 0.5
    return jnp.clip(jnp.round(pix).astype(jnp.int32), 0, size - 1)


def _build_query_inputs(feat_nhwc, coord, cell):
    """Build query-major imnet inputs (B*Q*4, D_IN) and pre-normalized, already
    area-swapped ensemble weights (B*Q, 4), all f32.

    feat_unfold is NOT materialized: the 3x3 neighborhood is gathered directly
    from the zero-padded feature map (same values as F.unfold with padding=1,
    channel layout c*9 + kh*3 + kw, matching the PyTorch module).
    """
    Bb, Hh, Ww, C = feat_nhwc.shape
    Qq = coord.shape[1]
    rx = 2.0 / Hh / 2.0
    ry = 2.0 / Ww / 2.0
    eps = 1e-6

    rel_cell = cell * jnp.array([Hh, Ww], cell.dtype)            # (B, Q, 2)
    feat_pad = jnp.pad(feat_nhwc, ((0, 0), (1, 1), (1, 1), (0, 0)))
    b_idx = jnp.arange(Bb)[:, None]                              # (B, 1)

    inps, areas = [], []
    for vx in (-1, 1):
        for vy in (-1, 1):
            c_ = coord + jnp.array([vx * rx + eps, vy * ry + eps], coord.dtype)
            c_ = jnp.clip(c_, -1.0 + 1e-6, 1.0 - 1e-6)
            iy = _nearest_idx(c_[..., 0], Hh)                    # (B, Q) row index
            ix = _nearest_idx(c_[..., 1], Ww)                    # (B, Q) col index
            taps = []
            for dy in (-1, 0, 1):
                for dx in (-1, 0, 1):
                    taps.append(feat_pad[b_idx, iy + 1 + dy, ix + 1 + dx, :])
            # c-major then (kh,kw): matches F.unfold(...).view(B, C*9, H, W)
            q_feat = jnp.stack(taps, axis=-1).reshape(Bb, Qq, C * 9)
            # make_coord values at the sampled pixel
            qy = -1.0 + (2.0 * iy.astype(coord.dtype) + 1.0) / Hh
            qx = -1.0 + (2.0 * ix.astype(coord.dtype) + 1.0) / Ww
            rel = jnp.stack([(coord[..., 0] - qy) * Hh,
                             (coord[..., 1] - qx) * Ww], axis=-1)
            inps.append(jnp.concatenate([q_feat, rel, rel_cell], axis=-1))
            areas.append(jnp.abs(rel[..., 0] * rel[..., 1]) + 1e-9)

    x_all = jnp.stack(inps, axis=2).reshape(Bb * Qq * 4, -1)     # query-major rows
    tot = areas[0] + areas[1] + areas[2] + areas[3]
    # local_ensemble swap (0<->3, 1<->2) + normalization done once here, in f32.
    wq = jnp.stack([areas[3], areas[2], areas[1], areas[0]], axis=-1) / tot[..., None]
    return x_all, wq.reshape(Bb * Qq, 4)


def _ref_query_f32(x_all, wq, w1, b1, w2, b2, w3, b3):
    """Pure-JAX f32 reference using the original LIIF formulation
    (per-shift predictions, weights applied after the full MLP)."""
    hp = jax.lax.Precision.HIGHEST
    h = jnp.maximum(jnp.dot(x_all, w1, precision=hp) + b1, 0.0)
    h = jnp.maximum(jnp.dot(h, w2, precision=hp) + b2, 0.0)
    p = jnp.dot(h, w3, precision=hp) + b3                        # (N*4, 3)
    p = p.reshape(-1, 4, p.shape[-1])
    return jnp.sum(p * wq[:, :, None], axis=1)                   # (N, 3)


# ----------------------------- LIIF forward -----------------------------
def liif_forward(params, inp, coord, cell, *, use_pallas=True,
                 operand_dtype=jnp.bfloat16):
    conv_w, conv_b, w1, b1, w2, b2, w3, b3 = params
    Bb, Cin, Hh, Ww = inp.shape

    # ---- encoder: synthetic 3x3 conv (padding=1), stand-in for models.make(encoder_spec) ----
    # TODO(synk): the real encoder (e.g. EDSR) is an external module; at production
    # sizes this becomes a K-tiled Pallas matmul/conv with a VMEM f32 accumulator and
    # bf16 operands.  At (512,27)@(27,8) a Pallas call is pure overhead (perf review),
    # so plain jnp.dot is used (identical in both validation paths).
    patches = unfold3x3(inp).transpose(0, 2, 3, 1).reshape(Bb * Hh * Ww, Cin * 9)
    w_mat = conv_w.reshape(conv_w.shape[0], -1).T                # (Cin*9, ENC_DIM)
    feat_flat = jnp.dot(patches, w_mat, precision=jax.lax.Precision.HIGHEST) + conv_b
    feat_nhwc = feat_flat.reshape(Bb, Hh, Ww, -1)

    # ---- local-ensemble gather + imnet inputs (glue; see TODO at top for fusion) ----
    x_all, wq = _build_query_inputs(feat_nhwc, coord, cell)

    # ---- imnet MLP + area-weighted ensemble (hot path) ----
    if use_pallas:
        out = pallas_liif_query(x_all, wq, w1, b1, w2, b2, w3, b3,
                                operand_dtype=operand_dtype)
    else:
        out = _ref_query_f32(x_all, wq, w1, b1, w2, b2, w3, b3)
    return out.reshape(Bb, coord.shape[1], -1)


# ----------------------------- main -----------------------------
if __name__ == "__main__":
    key = jax.random.PRNGKey(0)
    ks = jax.random.split(key, 12)

    # deterministic synthetic parameters
    conv_w = 0.1 * jax.random.normal(ks[0], (ENC_DIM, IN_CH, 3, 3), jnp.float32)
    conv_b = 0.1 * jax.random.normal(ks[1], (ENC_DIM,), jnp.float32)
    w1 = 0.1 * jax.random.normal(ks[2], (D_IN, HID), jnp.float32)
    b1 = 0.1 * jax.random.normal(ks[3], (HID,), jnp.float32)
    w2 = 0.1 * jax.random.normal(ks[4], (HID, HID), jnp.float32)
    b2 = 0.1 * jax.random.normal(ks[5], (HID,), jnp.float32)
    w3 = 0.1 * jax.random.normal(ks[6], (HID, OUT_DIM), jnp.float32)
    b3 = 0.1 * jax.random.normal(ks[7], (OUT_DIM,), jnp.float32)
    params = (conv_w, conv_b, w1, b1, w2, b2, w3, b3)

    # deterministic example inputs
    inp = jax.random.normal(ks[8], (B, IN_CH, H, W), jnp.float32)
    coord = jax.random.uniform(ks[9], (B, Q, 2), jnp.float32, minval=-1.0, maxval=1.0)
    cell = jnp.full((B, Q, 2), 2.0 / 32.0, jnp.float32) \
        + 0.01 * jax.random.normal(ks[10], (B, Q, 2), jnp.float32)

    # default perf path: bf16 operands, f32 accumulation
    fwd = jax.jit(functools.partial(liif_forward, use_pallas=True,
                                    operand_dtype=jnp.bfloat16))
    out = jax.block_until_ready(fwd(params, inp, coord, cell))
    assert out.shape == (B, Q, OUT_DIM), out.shape

    # structural check: f32-operand Pallas path vs pure-JAX f32 reference (tight)
    out_f32 = jax.block_until_ready(
        jax.jit(functools.partial(liif_forward, use_pallas=True,
                                  operand_dtype=jnp.float32))(params, inp, coord, cell))
    ref = jax.block_until_ready(
        jax.jit(functools.partial(liif_forward, use_pallas=False))(params, inp, coord, cell))
    assert jnp.allclose(out_f32, ref, atol=2e-3, rtol=2e-3), \
        float(jnp.max(jnp.abs(out_f32 - ref)))

    # semantic check: bf16 perf path vs f32 reference (loose: bf16 operand rounding)
    assert jnp.allclose(out, ref, atol=5e-2, rtol=5e-2), \
        float(jnp.max(jnp.abs(out - ref)))

    print("KERNEL_OK")
</pallas_src>

<mosaic_0001>
module attributes {stable_mosaic.version = 11 : i64} {
  func.func @_liif_query_kernel(%arg0: i32, %arg1: memref<512x76xbf16, #tpu.memory_space<vmem>>, %arg2: memref<128x4xf32, #tpu.memory_space<vmem>>, %arg3: memref<76x32xbf16, #tpu.memory_space<vmem>>, %arg4: memref<1x32xf32, #tpu.memory_space<vmem>>, %arg5: memref<32x32xbf16, #tpu.memory_space<vmem>>, %arg6: memref<1x32xf32, #tpu.memory_space<vmem>>, %arg7: memref<32x8xf32, #tpu.memory_space<vmem>>, %arg8: memref<1x8xf32, #tpu.memory_space<vmem>>, %arg9: memref<128x8xf32, #tpu.memory_space<vmem>>) attributes {dimension_semantics = [#tpu.dimension_semantics<parallel>], iteration_bounds = array<i64: 1>, scalar_prefetch = 0 : i64, scratch_operands = 0 : i64, tpu.core_type = #tpu.core_type<tc>, window_params = [{transform_indices = @transform_0, window_bounds = array<i64: 512, 76>}, {transform_indices = @transform_1, window_bounds = array<i64: 128, 4>}, {pipeline_mode = #tpu.pipeline_mode<synchronous>, transform_indices = @transform_2, window_bounds = array<i64: 76, 32>}, {pipeline_mode = #tpu.pipeline_mode<synchronous>, transform_indices = @transform_3, window_bounds = array<i64: 1, 32>}, {pipeline_mode = #tpu.pipeline_mode<synchronous>, transform_indices = @transform_4, window_bounds = array<i64: 32, 32>}, {pipeline_mode = #tpu.pipeline_mode<synchronous>, transform_indices = @transform_5, window_bounds = array<i64: 1, 32>}, {pipeline_mode = #tpu.pipeline_mode<synchronous>, transform_indices = @transform_6, window_bounds = array<i64: 32, 8>}, {pipeline_mode = #tpu.pipeline_mode<synchronous>, transform_indices = @transform_7, window_bounds = array<i64: 1, 8>}, {transform_indices = @transform_8, window_bounds = array<i64: 128, 8>}]} {
    %c0 = arith.constant 0 : index
    %c0_0 = arith.constant 0 : index
    %0 = vector.load %arg1[%c0, %c0_0] : memref<512x76xbf16, #tpu.memory_space<vmem>>, vector<512x76xbf16>
    %c0_1 = arith.constant 0 : index
    %c0_2 = arith.constant 0 : index
    %1 = vector.load %arg3[%c0_1, %c0_2] : memref<76x32xbf16, #tpu.memory_space<vmem>>, vector<76x32xbf16>
    %cst = arith.constant dense<0.000000e+00> : vector<512x32xf32>
    %2 = tpu.matmul %0, %1, %cst {dimension_numbers = #tpu.dot_dimension_numbers<[1], [0], [0], [1], [0, 0, 1, 1], [], []>} : vector<512x76xbf16>, vector<76x32xbf16>, vector<512x32xf32> -> vector<512x32xf32>
    %c0_3 = arith.constant 0 : index
    %c0_4 = arith.constant 0 : index
    %3 = vector.load %arg4[%c0_3, %c0_4] : memref<1x32xf32, #tpu.memory_space<vmem>>, vector<1x32xf32>
    %4 = vector.broadcast %3 : vector<1x32xf32> to vector<512x32xf32>
    %5 = arith.addf %2, %4 : vector<512x32xf32>
    %cst_5 = arith.constant 0.000000e+00 : f32
    %6 = vector.broadcast %cst_5 : f32 to vector<512x32xf32>
    %7 = arith.maximumf %5, %6 : vector<512x32xf32>
    %8 = arith.truncf %7 : vector<512x32xf32> to vector<512x32xbf16>
    %c0_6 = arith.constant 0 : index
    %c0_7 = arith.constant 0 : index
    %9 = vector.load %arg5[%c0_6, %c0_7] : memref<32x32xbf16, #tpu.memory_space<vmem>>, vector<32x32xbf16>
    %cst_8 = arith.constant dense<0.000000e+00> : vector<512x32xf32>
    %10 = tpu.matmul %8, %9, %cst_8 {dimension_numbers = #tpu.dot_dimension_numbers<[1], [0], [0], [1], [0, 0, 1, 1], [], []>} : vector<512x32xbf16>, vector<32x32xbf16>, vector<512x32xf32> -> vector<512x32xf32>
    %c0_9 = arith.constant 0 : index
    %c0_10 = arith.constant 0 : index
    %11 = vector.load %arg6[%c0_9, %c0_10] : memref<1x32xf32, #tpu.memory_space<vmem>>, vector<1x32xf32>
    %12 = vector.broadcast %11 : vector<1x32xf32> to vector<512x32xf32>
    %13 = arith.addf %10, %12 : vector<512x32xf32>
    %cst_11 = arith.constant 0.000000e+00 : f32
    %14 = vector.broadcast %cst_11 : f32 to vector<512x32xf32>
    %15 = arith.maximumf %13, %14 : vector<512x32xf32>
    %16 = vector.shape_cast %15 : vector<512x32xf32> to vector<128x4x32xf32>
    %c0_12 = arith.constant 0 : index
    %c0_13 = arith.constant 0 : index
    %17 = vector.load %arg2[%c0_12, %c0_13] : memref<128x4xf32, #tpu.memory_space<vmem>>, vector<128x4xf32>
    %18 = vector.extract_strided_slice %16 {offsets = [0, 0, 0], sizes = [128, 1, 32], strides = [1, 1, 1]} : vector<128x4x32xf32> to vector<128x1x32xf32>
    %19 = vector.shape_cast %18 : vector<128x1x32xf32> to vector<128x32xf32>
    %20 = vector.extract_strided_slice %17 {offsets = [0, 0], sizes = [128, 1], strides = [1, 1]} : vector<128x4xf32> to vector<128x1xf32>
    %21 = vector.broadcast %20 : vector<128x1xf32> to vector<128x32xf32>
    %22 = arith.mulf %19, %21 : vector<128x32xf32>
    %23 = vector.extract_strided_slice %16 {offsets = [0, 1, 0], sizes = [128, 1, 32], strides = [1, 1, 1]} : vector<128x4x32xf32> to vector<128x1x32xf32>
    %24 = vector.shape_cast %23 : vector<128x1x32xf32> to vector<128x32xf32>
    %25 = vector.extract_strided_slice %17 {offsets = [0, 1], sizes = [128, 1], strides = [1, 1]} : vector<128x4xf32> to vector<128x1xf32>
    %26 = vector.broadcast %25 : vector<128x1xf32> to vector<128x32xf32>
    %27 = arith.mulf %24, %26 : vector<128x32xf32>
    %28 = arith.addf %22, %27 : vector<128x32xf32>
    %29 = vector.extract_strided_slice %16 {offsets = [0, 2, 0], sizes = [128, 1, 32], strides = [1, 1, 1]} : vector<128x4x32xf32> to vector<128x1x32xf32>
    %30 = vector.shape_cast %29 : vector<128x1x32xf32> to vector<128x32xf32>
    %31 = vector.extract_strided_slice %17 {offsets = [0, 2], sizes = [128, 1], strides = [1, 1]} : vector<128x4xf32> to vector<128x1xf32>
    %32 = vector.broadcast %31 : vector<128x1xf32> to vector<128x32xf32>
    %33 = arith.mulf %30, %32 : vector<128x32xf32>
    %34 = arith.addf %28, %33 : vector<128x32xf32>
    %35 = vector.extract_strided_slice %16 {offsets = [0, 3, 0], sizes = [128, 1, 32], strides = [1, 1, 1]} : vector<128x4x32xf32> to vector<128x1x32xf32>
    %36 = vector.shape_cast %35 : vector<128x1x32xf32> to vector<128x32xf32>
    %37 = vector.extract_strided_slice %17 {offsets = [0, 3], sizes = [128, 1], strides = [1, 1]} : vector<128x4xf32> to vector<128x1xf32>
    %38 = vector.broadcast %37 : vector<128x1xf32> to vector<128x32xf32>
    %39 = arith.mulf %36, %38 : vector<128x32xf32>
    %40 = arith.addf %34, %39 : vector<128x32xf32>
    %c0_14 = arith.constant 0 : index
    %c0_15 = arith.constant 0 : index
    %41 = vector.load %arg7[%c0_14, %c0_15] : memref<32x8xf32, #tpu.memory_space<vmem>>, vector<32x8xf32>
    %cst_16 = arith.constant dense<0.000000e+00> : vector<128x8xf32>
    %42 = tpu.matmul %40, %41, %cst_16 {dimension_numbers = #tpu.dot_dimension_numbers<[1], [0], [0], [1], [0, 0, 1, 1], [], []>} : vector<128x32xf32>, vector<32x8xf32>, vector<128x8xf32> -> vector<128x8xf32>
    %c0_17 = arith.constant 0 : index
    %c0_18 = arith.constant 0 : index
    %43 = vector.load %arg8[%c0_17, %c0_18] : memref<1x8xf32, #tpu.memory_space<vmem>>, vector<1x8xf32>
    %44 = vector.broadcast %43 : vector<1x8xf32> to vector<128x8xf32>
    %45 = arith.addf %42, %44 : vector<128x8xf32>
    %c0_19 = arith.constant 0 : index
    %c0_20 = arith.constant 0 : index
    %46 = vector.load %arg9[%c0_19, %c0_20] : memref<128x8xf32, #tpu.memory_space<vmem>>, vector<128x8xf32>
    tpu.vector_store %arg9[%c0_19, %c0_20], %45 {strides = array<i32>} : memref<128x8xf32, #tpu.memory_space<vmem>>, vector<128x8xf32>,
    return
  }
  func.func @transform_0(%arg0: i32) -> (i32, i32) {
    %c0_i32 = arith.constant 0 : i32
    %c0_i32_0 = arith.constant 0 : i32
    return %arg0, %c0_i32 : i32, i32
  }
  func.func @transform_1(%arg0: i32) -> (i32, i32) {
    %c0_i32 = arith.constant 0 : i32
    %c0_i32_0 = arith.constant 0 : i32
    return %arg0, %c0_i32 : i32, i32
  }
  func.func @transform_2(%arg0: i32) -> (i32, i32) {
    %c0_i32 = arith.constant 0 : i32
    %c0_i32_0 = arith.constant 0 : i32
    %c0_i32_1 = arith.constant 0 : i32
    return %c0_i32, %c0_i32_0 : i32, i32
  }
  func.func @transform_3(%arg0: i32) -> (i32, i32) {
    %c0_i32 = arith.constant 0 : i32
    %c0_i32_0 = arith.constant 0 : i32
    %c0_i32_1 = arith.constant 0 : i32
    return %c0_i32, %c0_i32_0 : i32, i32
  }
  func.func @transform_4(%arg0: i32) -> (i32, i32) {
    %c0_i32 = arith.constant 0 : i32
    %c0_i32_0 = arith.constant 0 : i32
    %c0_i32_1 = arith.constant 0 : i32
    return %c0_i32, %c0_i32_0 : i32, i32
  }
  func.func @transform_5(%arg0: i32) -> (i32, i32) {
    %c0_i32 = arith.constant 0 : i32
    %c0_i32_0 = arith.constant 0 : i32
    %c0_i32_1 = arith.constant 0 : i32
    return %c0_i32, %c0_i32_0 : i32, i32
  }
  func.func @transform_6(%arg0: i32) -> (i32, i32) {
    %c0_i32 = arith.constant 0 : i32
    %c0_i32_0 = arith.constant 0 : i32
    %c0_i32_1 = arith.constant 0 : i32
    return %c0_i32, %c0_i32_0 : i32, i32
  }
  func.func @transform_7(%arg0: i32) -> (i32, i32) {
    %c0_i32 = arith.constant 0 : i32
    %c0_i32_0 = arith.constant 0 : i32
    %c0_i32_1 = arith.constant 0 : i32
    return %c0_i32, %c0_i32_0 : i32, i32
  }
  func.func @transform_8(%arg0: i32) -> (i32, i32) {
    %c0_i32 = arith.constant 0 : i32
    %c0_i32_0 = arith.constant 0 : i32
    return %arg0, %c0_i32 : i32, i32
  }
}

</mosaic_0001>

<llo_original>
// kernel: liif_forward.1
$region0: #{liif_forward.1}
  #allocation0 [shape = 'u32[]', space=smem, size = 0x4, offset = 0x4, fixed_abs, tag = 'smem constant byte address 0x4 - core index']
  #allocation1 [shape = 'u32[72,128]{1,0:T(1,128)}', space=vmem, size = 0x9000, scoped, tag = 'internal scratch']
  %s0 = inlined_call_operand.vmem [shape: bf16[512,76], index: 0, kind: input, shape index: {}]
  %s1 = inlined_call_operand.vmem [shape: f32[128,4], index: 1, kind: input, shape index: {}]
  %s2 = inlined_call_operand.vmem [shape: bf16[76,32], index: 2, kind: input, shape index: {}]
  %s3 = inlined_call_operand.vmem [shape: f32[1,32], index: 3, kind: input, shape index: {}]
  %s4 = inlined_call_operand.vmem [shape: bf16[32,32], index: 4, kind: input, shape index: {}]
  %s5 = inlined_call_operand.vmem [shape: f32[1,32], index: 5, kind: input, shape index: {}]
  %s6 = inlined_call_operand.vmem [shape: f32[32,8], index: 6, kind: input, shape index: {}]
  %s7 = inlined_call_operand.vmem [shape: f32[1,8], index: 7, kind: input, shape index: {}]
  %s8 = inlined_call_operand.vmem [shape: f32[128,8], index: 8, kind: output, shape index: {}]
  %s9 = sld [smem:[#allocation0]]
  $region42: #{liif_forward.1} parent=0
    _
  %s11 = ssub.s32 1, %s9
  %s12 = scalar_select 0, %s11, %s9
  // Predicated region
  $region2: #{liif_forward.1} parent=0 // pred_check
    _
  $region3: #{liif_forward.1} parent=0 // pred_check_branch
    %14 = sbr.rel (0) target = $region5
  $region4: #{liif_forward.1} parent=0 // pred_region
    _
  $region5: #{liif_forward.1} parent=0 // pred_fallthru
    _
  // Predicated region
  $region6: #{liif_forward.1} parent=0 // pred_check
    _
  $region7: #{liif_forward.1} parent=0 // pred_check_branch
    %16 = sbr.rel (0) target = $region9
  $region8: #{liif_forward.1} parent=0 // pred_region
    _
  $region9: #{liif_forward.1} parent=0 // pred_fallthru
    _
  // Predicated region
  $region10: #{liif_forward.1} parent=0 // pred_check
    _
  $region11: #{liif_forward.1} parent=0 // pred_check_branch
    %18 = sbr.rel (0) target = $region13
  $region12: #{liif_forward.1} parent=0 // pred_region
    _
  $region13: #{liif_forward.1} parent=0 // pred_fallthru
    _
  // Predicated region
  $region14: #{liif_forward.1} parent=0 // pred_check
    _
  $region15: #{liif_forward.1} parent=0 // pred_check_branch
    %20 = sbr.rel (0) target = $region17
  $region16: #{liif_forward.1} parent=0 // pred_region
    _
  $region17: #{liif_forward.1} parent=0 // pred_fallthru
    _
  // Predicated region
  $region18: #{liif_forward.1} parent=0 // pred_check
    _
  $region19: #{liif_forward.1} parent=0 // pred_check_branch
    %22 = sbr.rel (0) target = $region21
  $region20: #{liif_forward.1} parent=0 // pred_region
    _
  $region21: #{liif_forward.1} parent=0 // pred_fallthru
    _
  // Predicated region
  $region22: #{liif_forward.1} parent=0 // pred_check
    _
  $region23: #{liif_forward.1} parent=0 // pred_check_branch
    %24 = sbr.rel (0) target = $region25
  $region24: #{liif_forward.1} parent=0 // pred_region
    _
  $region25: #{liif_forward.1} parent=0 // pred_fallthru
    _
  // Predicated region
  $region26: #{liif_forward.1} parent=0 // pred_check
    _
  $region27: #{liif_forward.1} parent=0 // pred_check_branch
    %26 = sbr.rel (0) target = $region29
  $region28: #{liif_forward.1} parent=0 // pred_region
    _
  $region29: #{liif_forward.1} parent=0 // pred_fallthru
    _
  // Predicated region
  $region30: #{liif_forward.1} parent=0 // pred_check
    _
  $region31: #{liif_forward.1} parent=0 // pred_check_branch
    %28 = sbr.rel (0) target = $region33
  $region32: #{liif_forward.1} parent=0 // pred_region
    _
  $region33: #{liif_forward.1} parent=0 // pred_fallthru
    _
  %v30 = vld [vmem:[%s0] sm:$0xf]
  %v31 = vld [vmem:[%s0 + $0x4] sm:$0xf]
  %v32 = vld [vmem:[%s0 + $0x8] sm:$0xf]
  %v33 = vld [vmem:[%s0 + $0xc] sm:$0xf]
  %v34 = vld [vmem:[%s0 + $0x10] sm:$0xf]
  %v35 = vld [vmem:[%s0 + $0x14] sm:$0xf]
  %v36 = vld [vmem:[%s0 + $0x18] sm:$0xf]
  %v37 = vld [vmem:[%s0 + $0x1c] sm:$0xf]
  %v38 = vld [vmem:[%s0 + $0x20] sm:$0xf]
  %v39 = vld [vmem:[%s0 + $0x24] sm:$0xf]
  %v40 = vld [vmem:[%s0 + $0x28] sm:$0xf]
  %v41 = vld [vmem:[%s0 + $0x2c] sm:$0xf]
  %v42 = vld [vmem:[%s0 + $0x30] sm:$0xf]
  %v43 = vld [vmem:[%s0 + $0x34] sm:$0xf]
  %v44 = vld [vmem:[%s0 + $0x38] sm:$0xf]
  %v45 = vld [vmem:[%s0 + $0x3c] sm:$0xf]
  %v46 = vld [vmem:[%s0 + $0x40] sm:$0xf]
  %v47 = vld [vmem:[%s0 + $0x44] sm:$0xf]
  %v48 = vld [vmem:[%s0 + $0x48] sm:$0xf]
  %v49 = vld [vmem:[%s0 + $0x4c] sm:$0xf]
  %v50 = vld [vmem:[%s0 + $0x50] sm:$0xf]
  %v51 = vld [vmem:[%s0 + $0x54] sm:$0xf]
  %v52 = vld [vmem:[%s0 + $0x58] sm:$0xf]
  %v53 = vld [vmem:[%s0 + $0x5c] sm:$0xf]
  %v54 = vld [vmem:[%s0 + $0x60] sm:$0xf]
  %v55 = vld [vmem:[%s0 + $0x64] sm:$0xf]
  %v56 = vld [vmem:[%s0 + $0x68] sm:$0xf]
  %v57 = vld [vmem:[%s0 + $0x6c] sm:$0xf]
  %v58 = vld [vmem:[%s0 + $0x70] sm:$0xf]
  %v59 = vld [vmem:[%s0 + $0x74] sm:$0xf]
  %v60 = vld [vmem:[%s0 + $0x78] sm:$0xf]
  %v61 = vld [vmem:[%s0 + $0x7c] sm:$0xf]
  %v62 = vld [vmem:[%s0 + $0x80] sm:$0xf]
  %v63 = vld [vmem:[%s0 + $0x84] sm:$0xf]
  %v64 = vld [vmem:[%s0 + $0x88] sm:$0xf]
  %v65 = vld [vmem:[%s0 + $0x8c] sm:$0xf]
  %v66 = vld [vmem:[%s0 + $0x90] sm:$0xf]
  %v67 = vld [vmem:[%s0 + $0x94] sm:$0xf]
  %v68 = vld [vmem:[%s0 + $0x98] sm:$0xf]
  %v69 = vld [vmem:[%s0 + $0x9c] sm:$0xf]
  %v70 = vld [vmem:[%s0 + $0xa0] sm:$0xf]
  %v71 = vld [vmem:[%s0 + $0xa4] sm:$0xf]
  %v72 = vld [vmem:[%s0 + $0xa8] sm:$0xf]
  %v73 = vld [vmem:[%s0 + $0xac] sm:$0xf]
  %v74 = vld [vmem:[%s0 + $0xb0] sm:$0xf]
  %v75 = vld [vmem:[%s0 + $0xb4] sm:$0xf]
  %v76 = vld [vmem:[%s0 + $0xb8] sm:$0xf]
  %v77 = vld [vmem:[%s0 + $0xbc] sm:$0xf]
  %v78 = vld [vmem:[%s0 + $0xc0] sm:$0xf]
  %v79 = vld [vmem:[%s0 + $0xc4] sm:$0xf]
  %v80 = vld [vmem:[%s0 + $0xc8] sm:$0xf]
  %v81 = vld [vmem:[%s0 + $0xcc] sm:$0xf]
  %v82 = vld [vmem:[%s0 + $0xd0] sm:$0xf]
  %v83 = vld [vmem:[%s0 + $0xd4] sm:$0xf]
  %v84 = vld [vmem:[%s0 + $0xd8] sm:$0xf]
  %v85 = vld [vmem:[%s0 + $0xdc] sm:$0xf]
  %v86 = vld [vmem:[%s0 + $0xe0] sm:$0xf]
  %v87 = vld [vmem:[%s0 + $0xe4] sm:$0xf]
  %v88 = vld [vmem:[%s0 + $0xe8] sm:$0xf]
  %v89 = vld [vmem:[%s0 + $0xec] sm:$0xf]
  %v90 = vld [vmem:[%s0 + $0xf0] sm:$0xf]
  %v91 = vld [vmem:[%s0 + $0xf4] sm:$0xf]
  %v92 = vld [vmem:[%s0 + $0xf8] sm:$0xf]
  %v93 = vld [vmem:[%s0 + $0xfc] sm:$0xf]
  %v94 = vld [vmem:[%s2] sm:$0xf]
  %v95 = vld [vmem:[%s2 + $0x4] sm:$0xf]
  %v96 = vld [vmem:[%s2 + $0x8] sm:$0xf]
  %v97 = vld [vmem:[%s2 + $0xc] sm:$0xf]
  %v98 = vld [vmem:[%s2 + $0x10] sm:$0xf]
  %v99 = vld [vmem:[%s2 + $0x14] sm:$0xf]
  %v100 = vld [vmem:[%s2 + $0x18] sm:$0xf]
  %v101 = vld [vmem:[%s2 + $0x1c] sm:$0xf]
  %v102 = vld [vmem:[%s2 + $0x20] sm:$0xf]
  %v103 = vld [vmem:[%s2 + $0x24] sm:$0x3]
  %v104 = vld [vmem:[%s3] sm:$0x1]
  %v106 = vperm.slane %v104, 0
  %v172 = vunpack.c.l.b16 %v30
  %v173 = vunpack.c.l.b16 %v31
  %v174 = vunpack.c.l.b16 %v32
  %v175 = vunpack.c.l.b16 %v33
  %v176 = vunpack.c.l.b16 %v34
  %v177 = vunpack.c.l.b16 %v35
  %v178 = vunpack.c.l.b16 %v36
  %v179 = vunpack.c.l.b16 %v37
  %v180 = vunpack.c.l.b16 %v38
  %v181 = vunpack.c.l.b16 %v39
  %v182 = vunpack.c.l.b16 %v40
  %v183 = vunpack.c.l.b16 %v41
  %v184 = vunpack.c.l.b16 %v42
  %v185 = vunpack.c.l.b16 %v43
  %v186 = vunpack.c.l.b16 %v44
  %v187 = vunpack.c.l.b16 %v45
  %v188 = vunpack.c.l.b16 %v46
  %v189 = vunpack.c.l.b16 %v47
  %v190 = vunpack.c.l.b16 %v48
  %v191 = vunpack.c.l.b16 %v49
  %v192 = vunpack.c.l.b16 %v50
  %v193 = vunpack.c.l.b16 %v51
  %v194 = vunpack.c.l.b16 %v52
  %v195 = vunpack.c.l.b16 %v53
  %v196 = vunpack.c.l.b16 %v54
  %v197 = vunpack.c.l.b16 %v55
  %v198 = vunpack.c.l.b16 %v56
  %v199 = vunpack.c.l.b16 %v57
  %v200 = vunpack.c.l.b16 %v58
  %v201 = vunpack.c.l.b16 %v59
  %v202 = vunpack.c.l.b16 %v60
  %v203 = vunpack.c.l.b16 %v61
  %v204 = vunpack.c.l.b16 %v62
  %v205 = vunpack.c.l.b16 %v63
  %v206 = vunpack.c.l.b16 %v64
  %v207 = vunpack.c.l.b16 %v65
  %v208 = vunpack.c.l.b16 %v66
  %v209 = vunpack.c.l.b16 %v67
  %v210 = vunpack.c.l.b16 %v68
  %v211 = vunpack.c.l.b16 %v69
  %v212 = vunpack.c.l.b16 %v70
  %v213 = vunpack.c.l.b16 %v71
  %v214 = vunpack.c.l.b16 %v72
  %v215 = vunpack.c.l.b16 %v73
  %v216 = vunpack.c.l.b16 %v74
  %v217 = vunpack.c.l.b16 %v75
  %v218 = vunpack.c.l.b16 %v76
  %v219 = vunpack.c.l.b16 %v77
  %v220 = vunpack.c.l.b16 %v78
  %v221 = vunpack.c.l.b16 %v79
  %v222 = vunpack.c.l.b16 %v80
  %v223 = vunpack.c.l.b16 %v81
  %v224 = vunpack.c.l.b16 %v82
  %v225 = vunpack.c.l.b16 %v83
  %v226 = vunpack.c.l.b16 %v84
  %v227 = vunpack.c.l.b16 %v85
  %v228 = vunpack.c.l.b16 %v86
  %v229 = vunpack.c.l.b16 %v87
  %v230 = vunpack.c.l.b16 %v88
  %v231 = vunpack.c.l.b16 %v89
  %v232 = vunpack.c.l.b16 %v90
  %v233 = vunpack.c.l.b16 %v91
  %v234 = vunpack.c.l.b16 %v92
  %v235 = vunpack.c.l.b16 %v93
  %v236 = vpack.c.b16 %v173, %v172
  %v237 = vpack.c.b16 %v175, %v174
  %v238 = vpack.c.b16 %v177, %v176
  %v239 = vpack.c.b16 %v179, %v178
  %v240 = vpack.c.b16 %v181, %v180
  %v241 = vpack.c.b16 %v183, %v182
  %v242 = vpack.c.b16 %v185, %v184
  %v243 = vpack.c.b16 %v187, %v186
  %v244 = vpack.c.b16 %v189, %v188
  %v245 = vpack.c.b16 %v191, %v190
  %v246 = vpack.c.b16 %v193, %v192
  %v247 = vpack.c.b16 %v195, %v194
  %v248 = vpack.c.b16 %v197, %v196
  %v249 = vpack.c.b16 %v199, %v198
  %v250 = vpack.c.b16 %v201, %v200
  %v251 = vpack.c.b16 %v203, %v202
  %v252 = vpack.c.b16 %v205, %v204
  %v253 = vpack.c.b16 %v207, %v206
  %v254 = vpack.c.b16 %v209, %v208
  %v255 = vpack.c.b16 %v211, %v210
  %v256 = vpack.c.b16 %v213, %v212
  %v257 = vpack.c.b16 %v215, %v214
  %v258 = vpack.c.b16 %v217, %v216
  %v259 = vpack.c.b16 %v219, %v218
  %v260 = vpack.c.b16 %v221, %v220
  %v261 = vpack.c.b16 %v223, %v222
  %v262 = vpack.c.b16 %v225, %v224
  %v263 = vpack.c.b16 %v227, %v226
  %v264 = vpack.c.b16 %v229, %v228
  %v265 = vpack.c.b16 %v231, %v230
  %v266 = vpack.c.b16 %v233, %v232
  %v267 = vpack.c.b16 %v235, %v234
  %v278 = vunpack.c.l.b16 %v94
  %v279 = vunpack.c.l.b16 %v95
  %v280 = vunpack.c.l.b16 %v96
  %v281 = vunpack.c.l.b16 %v97
  %v282 = vunpack.c.l.b16 %v98
  %v283 = vunpack.c.l.b16 %v99
  %v284 = vunpack.c.l.b16 %v100
  %v285 = vunpack.c.l.b16 %v101
  %v286 = vunpack.c.l.b16 %v102
  %v287 = vunpack.c.l.b16 %v103
  %v288 = vpack.c.b16 %v279, %v278
  %v289 = vpack.c.b16 %v281, %v280
  %v290 = vpack.c.b16 %v283, %v282
  %v291 = vpack.c.b16 %v285, %v284
  %v292 = vpack.c.b16 %v287, %v286
  %vm297 = vcmask 621568
  %v299 = vsel %vm297, %v236, 0
  %v302 = vsel %vm297, %v237, 0
  %v305 = vsel %vm297, %v238, 0
  %v308 = vsel %vm297, %v239, 0
  %v311 = vsel %vm297, %v240, 0
  %v314 = vsel %vm297, %v241, 0
  %v317 = vsel %vm297, %v242, 0
  %v320 = vsel %vm297, %v243, 0
  %v323 = vsel %vm297, %v244, 0
  %v326 = vsel %vm297, %v245, 0
  %v329 = vsel %vm297, %v246, 0
  %v332 = vsel %vm297, %v247, 0
  %v335 = vsel %vm297, %v248, 0
  %v338 = vsel %vm297, %v249, 0
  %v341 = vsel %vm297, %v250, 0
  %v344 = vsel %vm297, %v251, 0
  %v347 = vsel %vm297, %v252, 0
  %v350 = vsel %vm297, %v253, 0
  %v353 = vsel %vm297, %v254, 0
  %v356 = vsel %vm297, %v255, 0
  %v359 = vsel %vm297, %v256, 0
  %v362 = vsel %vm297, %v257, 0
  %v365 = vsel %vm297, %v258, 0
  %v368 = vsel %vm297, %v259, 0
  %v371 = vsel %vm297, %v260, 0
  %v374 = vsel %vm297, %v261, 0
  %v377 = vsel %vm297, %v262, 0
  %v380 = vsel %vm297, %v263, 0
  %v383 = vsel %vm297, %v264, 0
  %v386 = vsel %vm297, %v265, 0
  %v389 = vsel %vm297, %v266, 0
  %v392 = vsel %vm297, %v267, 0
  %vm394 = vcmask 1045504
  %v396 = vsel %vm394, %v292, 0
  %398 = vmatpush.bf16.msra.mxu0 0
  %399 = vmatpush.bf16.msra.mxu0 0
  %400 = vmatpush.bf16.msra.mxu0 0
  %401 = vmatpush.bf16.msra.mxu0 %v396
  %402 = vmatpush.bf16.msra.mxu0 %v291
  %403 = vmatpush.bf16.msra.mxu0 %v290
  %404 = vmatpush.bf16.msra.mxu0 %v289
  %405 = vmatpush.bf16.msra.mxu0 %v288
  %406 = vmatmul.bf16.gmra.mxu0 %v299
  %v407 = vpop.f32.mrf.mxu0
  %v408 = vadd.f32 %v106, %v407
  %v409 = vpop.f32.mrf.mxu0
  %v410 = vadd.f32 %v106, %v409
  %411 = vmatmul.bf16.gmra.mxu0 %v302
  %v412 = vpop.f32.mrf.mxu0
  %v413 = vadd.f32 %v106, %v412
  %v414 = vpop.f32.mrf.mxu0
  %v415 = vadd.f32 %v106, %v414
  %416 = vmatmul.bf16.gmra.mxu0 %v305
  %v417 = vpop.f32.mrf.mxu0
  %v418 = vadd.f32 %v106, %v417
  %v419 = vpop.f32.mrf.mxu0
  %v420 = vadd.f32 %v106, %v419
  %421 = vmatmul.bf16.gmra.mxu0 %v308
  %v422 = vpop.f32.mrf.mxu0
  %v423 = vadd.f32 %v106, %v422
  %v424 = vpop.f32.mrf.mxu0
  %v425 = vadd.f32 %v106, %v424
  %426 = vmatmul.bf16.gmra.mxu0 %v311
  %v427 = vpop.f32.mrf.mxu0
  %v428 = vadd.f32 %v106, %v427
  %v429 = vpop.f32.mrf.mxu0
  %v430 = vadd.f32 %v106, %v429
  %431 = vmatmul.bf16.gmra.mxu0 %v314
  %v432 = vpop.f32.mrf.mxu0
  %v433 = vadd.f32 %v106, %v432
  %v434 = vpop.f32.mrf.mxu0
  %v435 = vadd.f32 %v106, %v434
  %436 = vmatmul.bf16.gmra.mxu0 %v317
  %v437 = vpop.f32.mrf.mxu0
  %v438 = vadd.f32 %v106, %v437
  %v439 = vpop.f32.mrf.mxu0
  %v440 = vadd.f32 %v106, %v439
  %441 = vmatmul.bf16.gmra.mxu0 %v320
  %v442 = vpop.f32.mrf.mxu0
  %v443 = vadd.f32 %v106, %v442
  %v444 = vpop.f32.mrf.mxu0
  %v445 = vadd.f32 %v106, %v444
  %446 = vmatmul.bf16.gmra.mxu0 %v323
  %v447 = vpop.f32.mrf.mxu0
  %v448 = vadd.f32 %v106, %v447
  %v449 = vpop.f32.mrf.mxu0
  %v450 = vadd.f32 %v106, %v449
  %451 = vmatmul.bf16.gmra.mxu0 %v326
  %v452 = vpop.f32.mrf.mxu0
  %v453 = vadd.f32 %v106, %v452
  %v454 = vpop.f32.mrf.mxu0
  %v455 = vadd.f32 %v106, %v454
  %456 = vmatmul.bf16.gmra.mxu0 %v329
  %v457 = vpop.f32.mrf.mxu0
  %v458 = vadd.f32 %v106, %v457
  %v459 = vpop.f32.mrf.mxu0
  %v460 = vadd.f32 %v106, %v459
  %461 = vmatmul.bf16.gmra.mxu0 %v332
  %v462 = vpop.f32.mrf.mxu0
  %v463 = vadd.f32 %v106, %v462
  %v464 = vpop.f32.mrf.mxu0
  %v465 = vadd.f32 %v106, %v464
  %466 = vmatmul.bf16.gmra.mxu0 %v335
  %v467 = vpop.f32.mrf.mxu0
  %v468 = vadd.f32 %v106, %v467
  %v469 = vpop.f32.mrf.mxu0
  %v470 = vadd.f32 %v106, %v469
  %471 = vmatmul.bf16.gmra.mxu0 %v338
  %v472 = vpop.f32.mrf.mxu0
  %v473 = vadd.f32 %v106, %v472
  %v474 = vpop.f32.mrf.mxu0
  %v475 = vadd.f32 %v106, %v474
  %476 = vmatmul.bf16.gmra.mxu0 %v341
  %v477 = vpop.f32.mrf.mxu0
  %v478 = vadd.f32 %v106, %v477
  %v479 = vpop.f32.mrf.mxu0
  %v480 = vadd.f32 %v106, %v479
  %481 = vmatmul.bf16.gmra.mxu0 %v344
  %v482 = vpop.f32.mrf.mxu0
  %v483 = vadd.f32 %v106, %v482
  %v484 = vpop.f32.mrf.mxu0
  %v485 = vadd.f32 %v106, %v484
  %486 = vmatmul.bf16.gmra.mxu0 %v347
  %v487 = vpop.f32.mrf.mxu0
  %v488 = vadd.f32 %v106, %v487
  %v489 = vpop.f32.mrf.mxu0
  %v490 = vadd.f32 %v106, %v489
  %491 = vmatmul.bf16.gmra.mxu0 %v350
  %v492 = vpop.f32.mrf.mxu0
  %v493 = vadd.f32 %v106, %v492
  %v494 = vpop.f32.mrf.mxu0
  %v495 = vadd.f32 %v106, %v494
  %496 = vmatmul.bf16.gmra.mxu0 %v353
  %v497 = vpop.f32.mrf.mxu0
  %v498 = vadd.f32 %v106, %v497
  %v499 = vpop.f32.mrf.mxu0
  %v500 = vadd.f32 %v106, %v499
  %501 = vmatmul.bf16.gmra.mxu0 %v356
  %v502 = vpop.f32.mrf.mxu0
  %v503 = vadd.f32 %v106, %v502
  %v504 = vpop.f32.mrf.mxu0
  %v505 = vadd.f32 %v106, %v504
  %506 = vmatmul.bf16.gmra.mxu0 %v359
  %v507 = vpop.f32.mrf.mxu0
  %v508 = vadd.f32 %v106, %v507
  %v509 = vpop.f32.mrf.mxu0
  %v510 = vadd.f32 %v106, %v509
  %511 = vmatmul.bf16.gmra.mxu0 %v362
  %v512 = vpop.f32.mrf.mxu0
  %v513 = vadd.f32 %v106, %v512
  %v514 = vpop.f32.mrf.mxu0
  %v515 = vadd.f32 %v106, %v514
  %516 = vmatmul.bf16.gmra.mxu0 %v365
  %v517 = vpop.f32.mrf.mxu0
  %v518 = vadd.f32 %v106, %v517
  %v519 = vpop.f32.mrf.mxu0
  %v520 = vadd.f32 %v106, %v519
  %521 = vmatmul.bf16.gmra.mxu0 %v368
  %v522 = vpop.f32.mrf.mxu0
  %v523 = vadd.f32 %v106, %v522
  %v524 = vpop.f32.mrf.mxu0
  %v525 = vadd.f32 %v106, %v524
  %526 = vmatmul.bf16.gmra.mxu0 %v371
  %v527 = vpop.f32.mrf.mxu0
  %v528 = vadd.f32 %v106, %v527
  %v529 = vpop.f32.mrf.mxu0
  %v530 = vadd.f32 %v106, %v529
  %531 = vmatmul.bf16.gmra.mxu0 %v374
  %v532 = vpop.f32.mrf.mxu0
  %v533 = vadd.f32 %v106, %v532
  %v534 = vpop.f32.mrf.mxu0
  %v535 = vadd.f32 %v106, %v534
  %536 = vmatmul.bf16.gmra.mxu0 %v377
  %v537 = vpop.f32.mrf.mxu0
  %v538 = vadd.f32 %v106, %v537
  %v539 = vpop.f32.mrf.mxu0
  %v540 = vadd.f32 %v106, %v539
  %541 = vmatmul.bf16.gmra.mxu0 %v380
  %v542 = vpop.f32.mrf.mxu0
  %v543 = vadd.f32 %v106, %v542
  %v544 = vpop.f32.mrf.mxu0
  %v545 = vadd.f32 %v106, %v544
  %546 = vmatmul.bf16.gmra.mxu0 %v383
  %v547 = vpop.f32.mrf.mxu0
  %v548 = vadd.f32 %v106, %v547
  %v549 = vpop.f32.mrf.mxu0
  %v550 = vadd.f32 %v106, %v549
  %551 = vmatmul.bf16.gmra.mxu0 %v386
  %v552 = vpop.f32.mrf.mxu0
  %v553 = vadd.f32 %v106, %v552
  %v554 = vpop.f32.mrf.mxu0
  %v555 = vadd.f32 %v106, %v554
  %556 = vmatmul.bf16.gmra.mxu0 %v389
  %v557 = vpop.f32.mrf.mxu0
  %v558 = vadd.f32 %v106, %v557
  %v559 = vpop.f32.mrf.mxu0
  %v560 = vadd.f32 %v106, %v559
  %561 = vmatmul.bf16.gmra.mxu0 %v392
  %v562 = vpop.f32.mrf.mxu0
  %v563 = vadd.f32 %v106, %v562
  %v564 = vpop.f32.mrf.mxu0
  %v565 = vadd.f32 %v106, %v564
  %566 = vdwg.mxu0
  %v567 = vmax.f32 %v408, 0.0
  %v568 = vmax.f32 %v410, 0.0
  %v569 = vmax.f32 %v413, 0.0
  %v570 = vmax.f32 %v415, 0.0
  %v571 = vmax.f32 %v418, 0.0
  %v572 = vmax.f32 %v420, 0.0
  %v573 = vmax.f32 %v423, 0.0
  %v574 = vmax.f32 %v425, 0.0
  %v575 = vmax.f32 %v428, 0.0
  %v576 = vmax.f32 %v430, 0.0
  %v577 = vmax.f32 %v433, 0.0
  %v578 = vmax.f32 %v435, 0.0
  %v579 = vmax.f32 %v438, 0.0
  %v580 = vmax.f32 %v440, 0.0
  %v581 = vmax.f32 %v443, 0.0
  %v582 = vmax.f32 %v445, 0.0
  %v583 = vmax.f32 %v448, 0.0
  %v584 = vmax.f32 %v450, 0.0
  %v585 = vmax.f32 %v453, 0.0
  %v586 = vmax.f32 %v455, 0.0
  %v587 = vmax.f32 %v458, 0.0
  %v588 = vmax.f32 %v460, 0.0
  %v589 = vmax.f32 %v463, 0.0
  %v590 = vmax.f32 %v465, 0.0
  %v591 = vmax.f32 %v468, 0.0
  %v592 = vmax.f32 %v470, 0.0
  %v593 = vmax.f32 %v473, 0.0
  %v594 = vmax.f32 %v475, 0.0
  %v595 = vmax.f32 %v478, 0.0
  %v596 = vmax.f32 %v480, 0.0
  %v597 = vmax.f32 %v483, 0.0
  %v598 = vmax.f32 %v485, 0.0
  %v599 = vmax.f32 %v488, 0.0
  %v600 = vmax.f32 %v490, 0.0
  %v601 = vmax.f32 %v493, 0.0
  %v602 = vmax.f32 %v495, 0.0
  %v603 = vmax.f32 %v498, 0.0
  %v604 = vmax.f32 %v500, 0.0
  %v605 = vmax.f32 %v503, 0.0
  %v606 = vmax.f32 %v505, 0.0
  %v607 = vmax.f32 %v508, 0.0
  %v608 = vmax.f32 %v510, 0.0
  %v609 = vmax.f32 %v513, 0.0
  %v610 = vmax.f32 %v515, 0.0
  %v611 = vmax.f32 %v518, 0.0
  %v612 = vmax.f32 %v520, 0.0
  %v613 = vmax.f32 %v523, 0.0
  %v614 = vmax.f32 %v525, 0.0
  %v615 = vmax.f32 %v528, 0.0
  %v616 = vmax.f32 %v530, 0.0
  %v617 = vmax.f32 %v533, 0.0
  %v618 = vmax.f32 %v535, 0.0
  %v619 = vmax.f32 %v538, 0.0
  %v620 = vmax.f32 %v540, 0.0
  %v621 = vmax.f32 %v543, 0.0
  %v622 = vmax.f32 %v545, 0.0
  %v623 = vmax.f32 %v548, 0.0
  %v624 = vmax.f32 %v550, 0.0
  %v625 = vmax.f32 %v553, 0.0
  %v626 = vmax.f32 %v555, 0.0
  %v627 = vmax.f32 %v558, 0.0
  %v628 = vmax.f32 %v560, 0.0
  %v629 = vmax.f32 %v563, 0.0
  %v630 = vmax.f32 %v565, 0.0
  %v631 = vpack.c.bf16 %v568, %v567
  %v632 = vpack.c.bf16 %v570, %v569
  %v633 = vpack.c.bf16 %v572, %v571
  %v634 = vpack.c.bf16 %v574, %v573
  %v635 = vpack.c.bf16 %v576, %v575
  %v636 = vpack.c.bf16 %v578, %v577
  %v637 = vpack.c.bf16 %v580, %v579
  %v638 = vpack.c.bf16 %v582, %v581
  %v639 = vpack.c.bf16 %v584, %v583
  %v640 = vpack.c.bf16 %v586, %v585
  %v641 = vpack.c.bf16 %v588, %v587
  %v642 = vpack.c.bf16 %v590, %v589
  %v643 = vpack.c.bf16 %v592, %v591
  %v644 = vpack.c.bf16 %v594, %v593
  %v645 = vpack.c.bf16 %v596, %v595
  %v646 = vpack.c.bf16 %v598, %v597
  %v647 = vpack.c.bf16 %v600, %v599
  %v648 = vpack.c.bf16 %v602, %v601
  %v649 = vpack.c.bf16 %v604, %v603
  %v650 = vpack.c.bf16 %v606, %v605
  %v651 = vpack.c.bf16 %v608, %v607
  %v652 = vpack.c.bf16 %v610, %v609
  %v653 = vpack.c.bf16 %v612, %v611
  %v654 = vpack.c.bf16 %v614, %v613
  %v655 = vpack.c.bf16 %v616, %v615
  %v656 = vpack.c.bf16 %v618, %v617
  %v657 = vpack.c.bf16 %v620, %v619
  %v658 = vpack.c.bf16 %v622, %v621
  %v659 = vpack.c.bf16 %v624, %v623
  %v660 = vpack.c.bf16 %v626, %v625
  %v661 = vpack.c.bf16 %v628, %v627
  %v662 = vpack.c.bf16 %v630, %v629
  %v663 = vld [vmem:[%s4] sm:$0xf]
  %v664 = vld [vmem:[%s4 + $0x4] sm:$0xf]
  %v665 = vld [vmem:[%s4 + $0x8] sm:$0xf]
  %v666 = vld [vmem:[%s4 + $0xc] sm:$0xf]
  %v667 = vld [vmem:[%s5] sm:$0x1]
  %v669 = vperm.slane %v667, 0
  %v675 = vunpack.c.l.b16 %v663
  %v676 = vunpack.c.l.b16 %v664
  %v677 = vunpack.c.l.b16 %v665
  %v678 = vunpack.c.l.b16 %v666
  %v679 = vpack.c.b16 %v676, %v675
  %v680 = vpack.c.b16 %v678, %v677
  %vm683 = vcmask 261120
  %v685 = vsel %vm683, %v631, 0
  %v688 = vsel %vm683, %v632, 0
  %v691 = vsel %vm683, %v633, 0
  %v694 = vsel %vm683, %v634, 0
  %v697 = vsel %vm683, %v635, 0
  %v700 = vsel %vm683, %v636, 0
  %v703 = vsel %vm683, %v637, 0
  %v706 = vsel %vm683, %v638, 0
  %v709 = vsel %vm683, %v639, 0
  %v712 = vsel %vm683, %v640, 0
  %v715 = vsel %vm683, %v641, 0
  %v718 = vsel %vm683, %v642, 0
  %v721 = vsel %vm683, %v643, 0
  %v724 = vsel %vm683, %v644, 0
  %v727 = vsel %vm683, %v645, 0
  %v730 = vsel %vm683, %v646, 0
  %v733 = vsel %vm683, %v647, 0
  %v736 = vsel %vm683, %v648, 0
  %v739 = vsel %vm683, %v649, 0
  %v742 = vsel %vm683, %v650, 0
  %v745 = vsel %vm683, %v651, 0
  %v748 = vsel %vm683, %v652, 0
  %v751 = vsel %vm683, %v653, 0
  %v754 = vsel %vm683, %v654, 0
  %v757 = vsel %vm683, %v655, 0
  %v760 = vsel %vm683, %v656, 0
  %v763 = vsel %vm683, %v657, 0
  %v766 = vsel %vm683, %v658, 0
  %v769 = vsel %vm683, %v659, 0
  %v772 = vsel %vm683, %v660, 0
  %v775 = vsel %vm683, %v661, 0
  %v778 = vsel %vm683, %v662, 0
  %780 = vmatpush.bf16.msra.mxu0 0
  %781 = vmatpush.bf16.msra.mxu0 0
  %782 = vmatpush.bf16.msra.mxu0 0
  %783 = vmatpush.bf16.msra.mxu0 0
  %784 = vmatpush.bf16.msra.mxu0 0
  %785 = vmatpush.bf16.msra.mxu0 0
  %786 = vmatpush.bf16.msra.mxu0 %v680
  %787 = vmatpush.bf16.msra.mxu0 %v679
  %788 = vmatmul.bf16.gmra.mxu0 %v685
  %v789 = vpop.f32.mrf.mxu0
  %v790 = vadd.f32 %v669, %v789
  %v791 = vpop.f32.mrf.mxu0
  %v792 = vadd.f32 %v669, %v791
  %793 = vmatmul.bf16.gmra.mxu0 %v688
  %v794 = vpop.f32.mrf.mxu0
  %v795 = vadd.f32 %v669, %v794
  %v796 = vpop.f32.mrf.mxu0
  %v797 = vadd.f32 %v669, %v796
  %798 = vmatmul.bf16.gmra.mxu0 %v691
  %v799 = vpop.f32.mrf.mxu0
  %v800 = vadd.f32 %v669, %v799
  %v801 = vpop.f32.mrf.mxu0
  %v802 = vadd.f32 %v669, %v801
  %803 = vmatmul.bf16.gmra.mxu0 %v694
  %v804 = vpop.f32.mrf.mxu0
  %v805 = vadd.f32 %v669, %v804
  %v806 = vpop.f32.mrf.mxu0
  %v807 = vadd.f32 %v669, %v806
  %808 = vmatmul.bf16.gmra.mxu0 %v697
  %v809 = vpop.f32.mrf.mxu0
  %v810 = vadd.f32 %v669, %v809
  %v811 = vpop.f32.mrf.mxu0
  %v812 = vadd.f32 %v669, %v811
  %813 = vmatmul.bf16.gmra.mxu0 %v700
  %v814 = vpop.f32.mrf.mxu0
  %v815 = vadd.f32 %v669, %v814
  %v816 = vpop.f32.mrf.mxu0
  %v817 = vadd.f32 %v669, %v816
  %818 = vmatmul.bf16.gmra.mxu0 %v703
  %v819 = vpop.f32.mrf.mxu0
  %v820 = vadd.f32 %v669, %v819
  %v821 = vpop.f32.mrf.mxu0
  %v822 = vadd.f32 %v669, %v821
  %823 = vmatmul.bf16.gmra.mxu0 %v706
  %v824 = vpop.f32.mrf.mxu0
  %v825 = vadd.f32 %v669, %v824
  %v826 = vpop.f32.mrf.mxu0
  %v827 = vadd.f32 %v669, %v826
  %828 = vmatmul.bf16.gmra.mxu0 %v709
  %v829 = vpop.f32.mrf.mxu0
  %v830 = vadd.f32 %v669, %v829
  %v831 = vpop.f32.mrf.mxu0
  %v832 = vadd.f32 %v669, %v831
  %833 = vmatmul.bf16.gmra.mxu0 %v712
  %v834 = vpop.f32.mrf.mxu0
  %v835 = vadd.f32 %v669, %v834
  %v836 = vpop.f32.mrf.mxu0
  %v837 = vadd.f32 %v669, %v836
  %838 = vmatmul.bf16.gmra.mxu0 %v715
  %v839 = vpop.f32.mrf.mxu0
  %v840 = vadd.f32 %v669, %v839
  %v841 = vpop.f32.mrf.mxu0
  %v842 = vadd.f32 %v669, %v841
  %843 = vmatmul.bf16.gmra.mxu0 %v718
  %v844 = vpop.f32.mrf.mxu0
  %v845 = vadd.f32 %v669, %v844
  %v846 = vpop.f32.mrf.mxu0
  %v847 = vadd.f32 %v669, %v846
  %848 = vmatmul.bf16.gmra.mxu0 %v721
  %v849 = vpop.f32.mrf.mxu0
  %v850 = vadd.f32 %v669, %v849
  %v851 = vpop.f32.mrf.mxu0
  %v852 = vadd.f32 %v669, %v851
  %853 = vmatmul.bf16.gmra.mxu0 %v724
  %v854 = vpop.f32.mrf.mxu0
  %v855 = vadd.f32 %v669, %v854
  %v856 = vpop.f32.mrf.mxu0
  %v857 = vadd.f32 %v669, %v856
  %858 = vmatmul.bf16.gmra.mxu0 %v727
  %v859 = vpop.f32.mrf.mxu0
  %v860 = vadd.f32 %v669, %v859
  %v861 = vpop.f32.mrf.mxu0
  %v862 = vadd.f32 %v669, %v861
  %863 = vmatmul.bf16.gmra.mxu0 %v730
  %v864 = vpop.f32.mrf.mxu0
  %v865 = vadd.f32 %v669, %v864
  %v866 = vpop.f32.mrf.mxu0
  %v867 = vadd.f32 %v669, %v866
  %868 = vmatmul.bf16.gmra.mxu0 %v733
  %v869 = vpop.f32.mrf.mxu0
  %v870 = vadd.f32 %v669, %v869
  %v871 = vpop.f32.mrf.mxu0
  %v872 = vadd.f32 %v669, %v871
  %873 = vmatmul.bf16.gmra.mxu0 %v736
  %v874 = vpop.f32.mrf.mxu0
  %v875 = vadd.f32 %v669, %v874
  %v876 = vpop.f32.mrf.mxu0
  %v877 = vadd.f32 %v669, %v876
  %878 = vmatmul.bf16.gmra.mxu0 %v739
  %v879 = vpop.f32.mrf.mxu0
  %v880 = vadd.f32 %v669, %v879
  %v881 = vpop.f32.mrf.mxu0
  %v882 = vadd.f32 %v669, %v881
  %883 = vmatmul.bf16.gmra.mxu0 %v742
  %v884 = vpop.f32.mrf.mxu0
  %v885 = vadd.f32 %v669, %v884
  %v886 = vpop.f32.mrf.mxu0
  %v887 = vadd.f32 %v669, %v886
  %888 = vmatmul.bf16.gmra.mxu0 %v745
  %v889 = vpop.f32.mrf.mxu0
  %v890 = vadd.f32 %v669, %v889
  %v891 = vpop.f32.mrf.mxu0
  %v892 = vadd.f32 %v669, %v891
  %893 = vmatmul.bf16.gmra.mxu0 %v748
  %v894 = vpop.f32.mrf.mxu0
  %v895 = vadd.f32 %v669, %v894
  %v896 = vpop.f32.mrf.mxu0
  %v897 = vadd.f32 %v669, %v896
  %898 = vmatmul.bf16.gmra.mxu0 %v751
  %v899 = vpop.f32.mrf.mxu0
  %v900 = vadd.f32 %v669, %v899
  %v901 = vpop.f32.mrf.mxu0
  %v902 = vadd.f32 %v669, %v901
  %903 = vmatmul.bf16.gmra.mxu0 %v754
  %v904 = vpop.f32.mrf.mxu0
  %v905 = vadd.f32 %v669, %v904
  %v906 = vpop.f32.mrf.mxu0
  %v907 = vadd.f32 %v669, %v906
  %908 = vmatmul.bf16.gmra.mxu0 %v757
  %v909 = vpop.f32.mrf.mxu0
  %v910 = vadd.f32 %v669, %v909
  %v911 = vpop.f32.mrf.mxu0
  %v912 = vadd.f32 %v669, %v911
  %913 = vmatmul.bf16.gmra.mxu0 %v760
  %v914 = vpop.f32.mrf.mxu0
  %v915 = vadd.f32 %v669, %v914
  %v916 = vpop.f32.mrf.mxu0
  %v917 = vadd.f32 %v669, %v916
  %918 = vmatmul.bf16.gmra.mxu0 %v763
  %v919 = vpop.f32.mrf.mxu0
  %v920 = vadd.f32 %v669, %v919
  %v921 = vpop.f32.mrf.mxu0
  %v922 = vadd.f32 %v669, %v921
  %923 = vmatmul.bf16.gmra.mxu0 %v766
  %v924 = vpop.f32.mrf.mxu0
  %v925 = vadd.f32 %v669, %v924
  %v926 = vpop.f32.mrf.mxu0
  %v927 = vadd.f32 %v669, %v926
  %928 = vmatmul.bf16.gmra.mxu0 %v769
  %v929 = vpop.f32.mrf.mxu0
  %v930 = vadd.f32 %v669, %v929
  %v931 = vpop.f32.mrf.mxu0
  %v932 = vadd.f32 %v669, %v931
  %933 = vmatmul.bf16.gmra.mxu0 %v772
  %v934 = vpop.f32.mrf.mxu0
  %v935 = vadd.f32 %v669, %v934
  %v936 = vpop.f32.mrf.mxu0
  %v937 = vadd.f32 %v669, %v936
  %938 = vmatmul.bf16.gmra.mxu0 %v775
  %v939 = vpop.f32.mrf.mxu0
  %v940 = vadd.f32 %v669, %v939
  %v941 = vpop.f32.mrf.mxu0
  %v942 = vadd.f32 %v669, %v941
  %943 = vmatmul.bf16.gmra.mxu0 %v778
  %v944 = vpop.f32.mrf.mxu0
  %v945 = vadd.f32 %v669, %v944
  %v946 = vpop.f32.mrf.mxu0
  %v947 = vadd.f32 %v669, %v946
  %948 = vdwg.mxu0
  %v949 = vmax.f32 %v790, 0.0
  %v950 = vmax.f32 %v792, 0.0
  %v951 = vmax.f32 %v795, 0.0
  %v952 = vmax.f32 %v797, 0.0
  %v953 = vmax.f32 %v800, 0.0
  %v954 = vmax.f32 %v802, 0.0
  %v955 = vmax.f32 %v805, 0.0
  %v956 = vmax.f32 %v807, 0.0
  %v957 = vmax.f32 %v810, 0.0
  %v958 = vmax.f32 %v812, 0.0
  %v959 = vmax.f32 %v815, 0.0
  %v960 = vmax.f32 %v817, 0.0
  %v961 = vmax.f32 %v820, 0.0
  %v962 = vmax.f32 %v822, 0.0
  %v963 = vmax.f32 %v825, 0.0
  %v964 = vmax.f32 %v827, 0.0
  %v965 = vmax.f32 %v830, 0.0
  %v966 = vmax.f32 %v832, 0.0
  %v967 = vmax.f32 %v835, 0.0
  %v968 = vmax.f32 %v837, 0.0
  %v969 = vmax.f32 %v840, 0.0
  %v970 = vmax.f32 %v842, 0.0
  %v971 = vmax.f32 %v845, 0.0
  %v972 = vmax.f32 %v847, 0.0
  %v973 = vmax.f32 %v850, 0.0
  %v974 = vmax.f32 %v852, 0.0
  %v975 = vmax.f32 %v855, 0.0
  %v976 = vmax.f32 %v857, 0.0
  %v977 = vmax.f32 %v860, 0.0
  %v978 = vmax.f32 %v862, 0.0
  %v979 = vmax.f32 %v865, 0.0
  %v980 = vmax.f32 %v867, 0.0
  %v981 = vmax.f32 %v870, 0.0
  %v982 = vmax.f32 %v872, 0.0
  %v983 = vmax.f32 %v875, 0.0
  %v984 = vmax.f32 %v877, 0.0
  %v985 = vmax.f32 %v880, 0.0
  %v986 = vmax.f32 %v882, 0.0
  %v987 = vmax.f32 %v885, 0.0
  %v988 = vmax.f32 %v887, 0.0
  %v989 = vmax.f32 %v890, 0.0
  %v990 = vmax.f32 %v892, 0.0
  %v991 = vmax.f32 %v895, 0.0
  %v992 = vmax.f32 %v897, 0.0
  %v993 = vmax.f32 %v900, 0.0
  %v994 = vmax.f32 %v902, 0.0
  %v995 = vmax.f32 %v905, 0.0
  %v996 = vmax.f32 %v907, 0.0
  %v997 = vmax.f32 %v910, 0.0
  %v998 = vmax.f32 %v912, 0.0
  %v999 = vmax.f32 %v915, 0.0
  %v1000 = vmax.f32 %v917, 0.0
  %v1001 = vmax.f32 %v920, 0.0
  %v1002 = vmax.f32 %v922, 0.0
  %v1003 = vmax.f32 %v925, 0.0
  %v1004 = vmax.f32 %v927, 0.0
  %v1005 = vmax.f32 %v930, 0.0
  %v1006 = vmax.f32 %v932, 0.0
  %v1007 = vmax.f32 %v935, 0.0
  %v1008 = vmax.f32 %v937, 0.0
  %v1009 = vmax.f32 %v940, 0.0
  %v1010 = vmax.f32 %v942, 0.0
  %v1011 = vmax.f32 %v945, 0.0
  %v1012 = vmax.f32 %v947, 0.0
  %v1077 = vrot.slane %v949, 4
  %v1078 = vrot.slane %v950, 4
  %v1079 = vrot.slane %v951, 4
  %v1080 = vrot.slane %v952, 4
  %v1081 = vrot.slane %v953, 4
  %v1082 = vrot.slane %v954, 4
  %v1083 = vrot.slane %v955, 4
  %v1084 = vrot.slane %v956, 4
  %v1085 = vrot.slane %v957, 4
  %v1086 = vrot.slane %v958, 4
  %v1087 = vrot.slane %v959, 4
  %v1088 = vrot.slane %v960, 4
  %v1089 = vrot.slane %v961, 4
  %v1090 = vrot.slane %v962, 4
  %v1091 = vrot.slane %v963, 4
  %v1092 = vrot.slane %v964, 4
  %v1093 = vrot.slane %v965, 4
  %v1094 = vrot.slane %v966, 4
  %v1095 = vrot.slane %v967, 4
  %v1096 = vrot.slane %v968, 4
  %v1097 = vrot.slane %v969, 4
  %v1098 = vrot.slane %v970, 4
  %v1099 = vrot.slane %v971, 4
  %v1100 = vrot.slane %v972, 4
  %v1101 = vrot.slane %v973, 4
  %v1102 = vrot.slane %v974, 4
  %v1103 = vrot.slane %v975, 4
  %v1104 = vrot.slane %v976, 4
  %v1105 = vrot.slane %v977, 4
  %v1106 = vrot.slane %v978, 4
  %v1107 = vrot.slane %v979, 4
  %v1108 = vrot.slane %v980, 4
  %v1109 = vrot.slane %v981, 4
  %v1110 = vrot.slane %v982, 4
  %v1111 = vrot.slane %v983, 4
  %v1112 = vrot.slane %v984, 4
  %v1113 = vrot.slane %v985, 4
  %v1114 = vrot.slane %v986, 4
  %v1115 = vrot.slane %v987, 4
  %v1116 = vrot.slane %v988, 4
  %v1117 = vrot.slane %v989, 4
  %v1118 = vrot.slane %v990, 4
  %v1119 = vrot.slane %v991, 4
  %v1120 = vrot.slane %v992, 4
  %v1121 = vrot.slane %v993, 4
  %v1122 = vrot.slane %v994, 4
  %v1123 = vrot.slane %v995, 4
  %v1124 = vrot.slane %v996, 4
  %v1125 = vrot.slane %v997, 4
  %v1126 = vrot.slane %v998, 4
  %v1127 = vrot.slane %v999, 4
  %v1128 = vrot.slane %v1000, 4
  %v1129 = vrot.slane %v1001, 4
  %v1130 = vrot.slane %v1002, 4
  %v1131 = vrot.slane %v1003, 4
  %v1132 = vrot.slane %v1004, 4
  %v1133 = vrot.slane %v1005, 4
  %v1134 = vrot.slane %v1006, 4
  %v1135 = vrot.slane %v1007, 4
  %v1136 = vrot.slane %v1008, 4
  %v1137 = vrot.slane %v1009, 4
  %v1138 = vrot.slane %v1010, 4
  %v1139 = vrot.slane %v1011, 4
  %v1140 = vrot.slane %v1012, 4
  %v1205 = vld [vmem:[%s1] sm:$0xff]
  %v1206 = vld [vmem:[%s1 + $0x8] sm:$0xff]
  %v1207 = vld [vmem:[%s1 + $0x10] sm:$0xff]
  %v1208 = vld [vmem:[%s1 + $0x18] sm:$0xff]
  %v1209 = vld [vmem:[%s1 + $0x20] sm:$0xff]
  %v1210 = vld [vmem:[%s1 + $0x28] sm:$0xff]
  %v1211 = vld [vmem:[%s1 + $0x30] sm:$0xff]
  %v1212 = vld [vmem:[%s1 + $0x38] sm:$0xff]
  %v1213 = vld [vmem:[%s1 + $0x40] sm:$0xff]
  %v1214 = vld [vmem:[%s1 + $0x48] sm:$0xff]
  %v1215 = vld [vmem:[%s1 + $0x50] sm:$0xff]
  %v1216 = vld [vmem:[%s1 + $0x58] sm:$0xff]
  %v1217 = vld [vmem:[%s1 + $0x60] sm:$0xff]
  %v1218 = vld [vmem:[%s1 + $0x68] sm:$0xff]
  %v1219 = vld [vmem:[%s1 + $0x70] sm:$0xff]
  %v1220 = vld [vmem:[%s1 + $0x78] sm:$0xff]
  %1222 = vset.pattern.permute.xlu0 0
  %1223 = vperm.xlu0 %1222, %v1205
  %v1224 = vpop.permute.xlu0 %1223
  %1226 = vset.pattern.permute.xlu0 0
  %1227 = vperm.xlu0 %1226, %v1206
  %v1228 = vpop.permute.xlu0 %1227
  %1230 = vset.pattern.permute.xlu0 0
  %1231 = vperm.xlu0 %1230, %v1207
  %v1232 = vpop.permute.xlu0 %1231
  %1234 = vset.pattern.permute.xlu0 0
  %1235 = vperm.xlu0 %1234, %v1208
  %v1236 = vpop.permute.xlu0 %1235
  %1238 = vset.pattern.permute.xlu0 0
  %1239 = vperm.xlu0 %1238, %v1209
  %v1240 = vpop.permute.xlu0 %1239
  %1242 = vset.pattern.permute.xlu0 0
  %1243 = vperm.xlu0 %1242, %v1210
  %v1244 = vpop.permute.xlu0 %1243
  %1246 = vset.pattern.permute.xlu0 0
  %1247 = vperm.xlu0 %1246, %v1211
  %v1248 = vpop.permute.xlu0 %1247
  %1250 = vset.pattern.permute.xlu0 0
  %1251 = vperm.xlu0 %1250, %v1212
  %v1252 = vpop.permute.xlu0 %1251
  %1254 = vset.pattern.permute.xlu0 0
  %1255 = vperm.xlu0 %1254, %v1213
  %v1256 = vpop.permute.xlu0 %1255
  %1258 = vset.pattern.permute.xlu0 0
  %1259 = vperm.xlu0 %1258, %v1214
  %v1260 = vpop.permute.xlu0 %1259
  %1262 = vset.pattern.permute.xlu0 0
  %1263 = vperm.xlu0 %1262, %v1215
  %v1264 = vpop.permute.xlu0 %1263
  %1266 = vset.pattern.permute.xlu0 0
  %1267 = vperm.xlu0 %1266, %v1216
  %v1268 = vpop.permute.xlu0 %1267
  %1270 = vset.pattern.permute.xlu0 0
  %1271 = vperm.xlu0 %1270, %v1217
  %v1272 = vpop.permute.xlu0 %1271
  %1274 = vset.pattern.permute.xlu0 0
  %1275 = vperm.xlu0 %1274, %v1218
  %v1276 = vpop.permute.xlu0 %1275
  %1278 = vset.pattern.permute.xlu0 0
  %1279 = vperm.xlu0 %1278, %v1219
  %v1280 = vpop.permute.xlu0 %1279
  %1282 = vset.pattern.permute.xlu0 0
  %1283 = vperm.xlu0 %1282, %v1220
  %v1284 = vpop.permute.xlu0 %1283
  %v1286 = vunpack.c.l.s4 839922192
  %v1287 = vunpack.c.0.s8 %v1286
  %v1288 = vperm.slane %v1224, %v1287
  %v1290 = vunpack.c.l.s4 1985246804
  %v1291 = vunpack.c.0.s8 %v1290
  %v1292 = vperm.slane %v1224, %v1291
  %v1294 = vunpack.c.l.s4 839922192
  %v1295 = vunpack.c.0.s8 %v1294
  %v1296 = vperm.slane %v1228, %v1295
  %v1298 = vunpack.c.l.s4 1985246804
  %v1299 = vunpack.c.0.s8 %v1298
  %v1300 = vperm.slane %v1228, %v1299
  %v1302 = vunpack.c.l.s4 839922192
  %v1303 = vunpack.c.0.s8 %v1302
  %v1304 = vperm.slane %v1232, %v1303
  %v1306 = vunpack.c.l.s4 1985246804
  %v1307 = vunpack.c.0.s8 %v1306
  %v1308 = vperm.slane %v1232, %v1307
  %v1310 = vunpack.c.l.s4 839922192
  %v1311 = vunpack.c.0.s8 %v1310
  %v1312 = vperm.slane %v1236, %v1311
  %v1314 = vunpack.c.l.s4 1985246804
  %v1315 = vunpack.c.0.s8 %v1314
  %v1316 = vperm.slane %v1236, %v1315
  %v1318 = vunpack.c.l.s4 839922192
  %v1319 = vunpack.c.0.s8 %v1318
  %v1320 = vperm.slane %v1240, %v1319
  %v1322 = vunpack.c.l.s4 1985246804
  %v1323 = vunpack.c.0.s8 %v1322
  %v1324 = vperm.slane %v1240, %v1323
  %v1326 = vunpack.c.l.s4 839922192
  %v1327 = vunpack.c.0.s8 %v1326
  %v1328 = vperm.slane %v1244, %v1327
  %v1330 = vunpack.c.l.s4 1985246804
  %v1331 = vunpack.c.0.s8 %v1330
  %v1332 = vperm.slane %v1244, %v1331
  %v1334 = vunpack.c.l.s4 839922192
  %v1335 = vunpack.c.0.s8 %v1334
  %v1336 = vperm.slane %v1248, %v1335
  %v1338 = vunpack.c.l.s4 1985246804
  %v1339 = vunpack.c.0.s8 %v1338
  %v1340 = vperm.slane %v1248, %v1339
  %v1342 = vunpack.c.l.s4 839922192
  %v1343 = vunpack.c.0.s8 %v1342
  %v1344 = vperm.slane %v1252, %v1343
  %v1346 = vunpack.c.l.s4 1985246804
  %v1347 = vunpack.c.0.s8 %v1346
  %v1348 = vperm.slane %v1252, %v1347
  %v1350 = vunpack.c.l.s4 839922192
  %v1351 = vunpack.c.0.s8 %v1350
  %v1352 = vperm.slane %v1256, %v1351
  %v1354 = vunpack.c.l.s4 1985246804
  %v1355 = vunpack.c.0.s8 %v1354
  %v1356 = vperm.slane %v1256, %v1355
  %v1358 = vunpack.c.l.s4 839922192
  %v1359 = vunpack.c.0.s8 %v1358
  %v1360 = vperm.slane %v1260, %v1359
  %v1362 = vunpack.c.l.s4 1985246804
  %v1363 = vunpack.c.0.s8 %v1362
  %v1364 = vperm.slane %v1260, %v1363
  %v1366 = vunpack.c.l.s4 839922192
  %v1367 = vunpack.c.0.s8 %v1366
  %v1368 = vperm.slane %v1264, %v1367
  %v1370 = vunpack.c.l.s4 1985246804
  %v1371 = vunpack.c.0.s8 %v1370
  %v1372 = vperm.slane %v1264, %v1371
  %v1374 = vunpack.c.l.s4 839922192
  %v1375 = vunpack.c.0.s8 %v1374
  %v1376 = vperm.slane %v1268, %v1375
  %v1378 = vunpack.c.l.s4 1985246804
  %v1379 = vunpack.c.0.s8 %v1378
  %v1380 = vperm.slane %v1268, %v1379
  %v1382 = vunpack.c.l.s4 839922192
  %v1383 = vunpack.c.0.s8 %v1382
  %v1384 = vperm.slane %v1272, %v1383
  %v1386 = vunpack.c.l.s4 1985246804
  %v1387 = vunpack.c.0.s8 %v1386
  %v1388 = vperm.slane %v1272, %v1387
  %v1390 = vunpack.c.l.s4 839922192
  %v1391 = vunpack.c.0.s8 %v1390
  %v1392 = vperm.slane %v1276, %v1391
  %v1394 = vunpack.c.l.s4 1985246804
  %v1395 = vunpack.c.0.s8 %v1394
  %v1396 = vperm.slane %v1276, %v1395
  %v1398 = vunpack.c.l.s4 839922192
  %v1399 = vunpack.c.0.s8 %v1398
  %v1400 = vperm.slane %v1280, %v1399
  %v1402 = vunpack.c.l.s4 1985246804
  %v1403 = vunpack.c.0.s8 %v1402
  %v1404 = vperm.slane %v1280, %v1403
  %v1406 = vunpack.c.l.s4 839922192
  %v1407 = vunpack.c.0.s8 %v1406
  %v1408 = vperm.slane %v1284, %v1407
  %v1410 = vunpack.c.l.s4 1985246804
  %v1411 = vunpack.c.0.s8 %v1410
  %v1412 = vperm.slane %v1284, %v1411
  %v1413 = vrot.slane %v1288, 1
  %v1414 = vrot.slane %v1288, 2
  %v1415 = vrot.slane %v1288, 3
  %v1416 = vrot.slane %v1292, 1
  %v1417 = vrot.slane %v1292, 2
  %v1418 = vrot.slane %v1292, 3
  %v1419 = vrot.slane %v1296, 1
  %v1420 = vrot.slane %v1296, 2
  %v1421 = vrot.slane %v1296, 3
  %v1422 = vrot.slane %v1300, 1
  %v1423 = vrot.slane %v1300, 2
  %v1424 = vrot.slane %v1300, 3
  %v1425 = vrot.slane %v1304, 1
  %v1426 = vrot.slane %v1304, 2
  %v1427 = vrot.slane %v1304, 3
  %v1428 = vrot.slane %v1308, 1
  %v1429 = vrot.slane %v1308, 2
  %v1430 = vrot.slane %v1308, 3
  %v1431 = vrot.slane %v1312, 1
  %v1432 = vrot.slane %v1312, 2
  %v1433 = vrot.slane %v1312, 3
  %v1434 = vrot.slane %v1316, 1
  %v1435 = vrot.slane %v1316, 2
  %v1436 = vrot.slane %v1316, 3
  %v1437 = vrot.slane %v1320, 1
  %v1438 = vrot.slane %v1320, 2
  %v1439 = vrot.slane %v1320, 3
  %v1440 = vrot.slane %v1324, 1
  %v1441 = vrot.slane %v1324, 2
  %v1442 = vrot.slane %v1324, 3
  %v1443 = vrot.slane %v1328, 1
  %v1444 = vrot.slane %v1328, 2
  %v1445 = vrot.slane %v1328, 3
  %v1446 = vrot.slane %v1332, 1
  %v1447 = vrot.slane %v1332, 2
  %v1448 = vrot.slane %v1332, 3
  %v1449 = vrot.slane %v1336, 1
  %v1450 = vrot.slane %v1336, 2
  %v1451 = vrot.slane %v1336, 3
  %v1452 = vrot.slane %v1340, 1
  %v1453 = vrot.slane %v1340, 2
  %v1454 = vrot.slane %v1340, 3
  %v1455 = vrot.slane %v1344, 1
  %v1456 = vrot.slane %v1344, 2
  %v1457 = vrot.slane %v1344, 3
  %v1458 = vrot.slane %v1348, 1
  %v1459 = vrot.slane %v1348, 2
  %v1460 = vrot.slane %v1348, 3
  %v1461 = vrot.slane %v1352, 1
  %v1462 = vrot.slane %v1352, 2
  %v1463 = vrot.slane %v1352, 3
  %v1464 = vrot.slane %v1356, 1
  %v1465 = vrot.slane %v1356, 2
  %v1466 = vrot.slane %v1356, 3
  %v1467 = vrot.slane %v1360, 1
  %v1468 = vrot.slane %v1360, 2
  %v1469 = vrot.slane %v1360, 3
  %v1470 = vrot.slane %v1364, 1
  %v1471 = vrot.slane %v1364, 2
  %v1472 = vrot.slane %v1364, 3
  %v1473 = vrot.slane %v1368, 1
  %v1474 = vrot.slane %v1368, 2
  %v1475 = vrot.slane %v1368, 3
  %v1476 = vrot.slane %v1372, 1
  %v1477 = vrot.slane %v1372, 2
  %v1478 = vrot.slane %v1372, 3
  %v1479 = vrot.slane %v1376, 1
  %v1480 = vrot.slane %v1376, 2
  %v1481 = vrot.slane %v1376, 3
  %v1482 = vrot.slane %v1380, 1
  %v1483 = vrot.slane %v1380, 2
  %v1484 = vrot.slane %v1380, 3
  %v1485 = vrot.slane %v1384, 1
  %v1486 = vrot.slane %v1384, 2
  %v1487 = vrot.slane %v1384, 3
  %v1488 = vrot.slane %v1388, 1
  %v1489 = vrot.slane %v1388, 2
  %v1490 = vrot.slane %v1388, 3
  %v1491 = vrot.slane %v1392, 1
  %v1492 = vrot.slane %v1392, 2
  %v1493 = vrot.slane %v1392, 3
  %v1494 = vrot.slane %v1396, 1
  %v1495 = vrot.slane %v1396, 2
  %v1496 = vrot.slane %v1396, 3
  %v1497 = vrot.slane %v1400, 1
  %v1498 = vrot.slane %v1400, 2
  %v1499 = vrot.slane %v1400, 3
  %v1500 = vrot.slane %v1404, 1
  %v1501 = vrot.slane %v1404, 2
  %v1502 = vrot.slane %v1404, 3
  %v1503 = vrot.slane %v1408, 1
  %v1504 = vrot.slane %v1408, 2
  %v1505 = vrot.slane %v1408, 3
  %v1506 = vrot.slane %v1412, 1
  %v1507 = vrot.slane %v1412, 2
  %v1508 = vrot.slane %v1412, 3
  %v1637 = vmul.f32 %v949, %v1288
  %v1638 = vmul.f32 %v1077, %v1413
  %v1639 = vmul.f32 %v950, %v1414
  %v1640 = vmul.f32 %v1078, %v1415
  %v1641 = vmul.f32 %v951, %v1292
  %v1642 = vmul.f32 %v1079, %v1416
  %v1643 = vmul.f32 %v952, %v1417
  %v1644 = vmul.f32 %v1080, %v1418
  %v1645 = vmul.f32 %v953, %v1296
  %v1646 = vmul.f32 %v1081, %v1419
  %v1647 = vmul.f32 %v954, %v1420
  %v1648 = vmul.f32 %v1082, %v1421
  %v1649 = vmul.f32 %v955, %v1300
  %v1650 = vmul.f32 %v1083, %v1422
  %v1651 = vmul.f32 %v956, %v1423
  %v1652 = vmul.f32 %v1084, %v1424
  %v1653 = vmul.f32 %v957, %v1304
  %v1654 = vmul.f32 %v1085, %v1425
  %v1655 = vmul.f32 %v958, %v1426
  %v1656 = vmul.f32 %v1086, %v1427
  %v1657 = vmul.f32 %v959, %v1308
  %v1658 = vmul.f32 %v1087, %v1428
  %v1659 = vmul.f32 %v960, %v1429
  %v1660 = vmul.f32 %v1088, %v1430
  %v1661 = vmul.f32 %v961, %v1312
  %v1662 = vmul.f32 %v1089, %v1431
  %v1663 = vmul.f32 %v962, %v1432
  %v1664 = vmul.f32 %v1090, %v1433
  %v1665 = vmul.f32 %v963, %v1316
  %v1666 = vmul.f32 %v1091, %v1434
  %v1667 = vmul.f32 %v964, %v1435
  %v1668 = vmul.f32 %v1092, %v1436
  %v1669 = vmul.f32 %v965, %v1320
  %v1670 = vmul.f32 %v1093, %v1437
  %v1671 = vmul.f32 %v966, %v1438
  %v1672 = vmul.f32 %v1094, %v1439
  %v1673 = vmul.f32 %v967, %v1324
  %v1674 = vmul.f32 %v1095, %v1440
  %v1675 = vmul.f32 %v968, %v1441
  %v1676 = vmul.f32 %v1096, %v1442
  %v1677 = vmul.f32 %v969, %v1328
  %v1678 = vmul.f32 %v1097, %v1443
  %v1679 = vmul.f32 %v970, %v1444
  %v1680 = vmul.f32 %v1098, %v1445
  %v1681 = vmul.f32 %v971, %v1332
  %v1682 = vmul.f32 %v1099, %v1446
  %v1683 = vmul.f32 %v972, %v1447
  %v1684 = vmul.f32 %v1100, %v1448
  %v1685 = vmul.f32 %v973, %v1336
  %v1686 = vmul.f32 %v1101, %v1449
  %v1687 = vmul.f32 %v974, %v1450
  %v1688 = vmul.f32 %v1102, %v1451
  %v1689 = vmul.f32 %v975, %v1340
  %v1690 = vmul.f32 %v1103, %v1452
  %v1691 = vmul.f32 %v976, %v1453
  %v1692 = vmul.f32 %v1104, %v1454
  %v1693 = vmul.f32 %v977, %v1344
  %v1694 = vmul.f32 %v1105, %v1455
  %v1695 = vmul.f32 %v978, %v1456
  %v1696 = vmul.f32 %v1106, %v1457
  %v1697 = vmul.f32 %v979, %v1348
  %v1698 = vmul.f32 %v1107, %v1458
  %v1699 = vmul.f32 %v980, %v1459
  %v1700 = vmul.f32 %v1108, %v1460
  %v1701 = vmul.f32 %v981, %v1352
  %v1702 = vmul.f32 %v1109, %v1461
  %v1703 = vmul.f32 %v982, %v1462
  %v1704 = vmul.f32 %v1110, %v1463
  %v1705 = vmul.f32 %v983, %v1356
  %v1706 = vmul.f32 %v1111, %v1464
  %v1707 = vmul.f32 %v984, %v1465
  %v1708 = vmul.f32 %v1112, %v1466
  %v1709 = vmul.f32 %v985, %v1360
  %v1710 = vmul.f32 %v1113, %v1467
  %v1711 = vmul.f32 %v986, %v1468
  %v1712 = vmul.f32 %v1114, %v1469
  %v1713 = vmul.f32 %v987, %v1364
  %v1714 = vmul.f32 %v1115, %v1470
  %v1715 = vmul.f32 %v988, %v1471
  %v1716 = vmul.f32 %v1116, %v1472
  %v1717 = vmul.f32 %v989, %v1368
  %v1718 = vmul.f32 %v1117, %v1473
  %v1719 = vmul.f32 %v990, %v1474
  %v1720 = vmul.f32 %v1118, %v1475
  %v1721 = vmul.f32 %v991, %v1372
  %v1722 = vmul.f32 %v1119, %v1476
  %v1723 = vmul.f32 %v992, %v1477
  %v1724 = vmul.f32 %v1120, %v1478
  %v1725 = vmul.f32 %v993, %v1376
  %v1726 = vmul.f32 %v1121, %v1479
  %v1727 = vmul.f32 %v994, %v1480
  %v1728 = vmul.f32 %v1122, %v1481
  %v1729 = vmul.f32 %v995, %v1380
  %v1730 = vmul.f32 %v1123, %v1482
  %v1731 = vmul.f32 %v996, %v1483
  %v1732 = vmul.f32 %v1124, %v1484
  %v1733 = vmul.f32 %v997, %v1384
  %v1734 = vmul.f32 %v1125, %v1485
  %v1735 = vmul.f32 %v998, %v1486
  %v1736 = vmul.f32 %v1126, %v1487
  %v1737 = vmul.f32 %v999, %v1388
  %v1738 = vmul.f32 %v1127, %v1488
  %v1739 = vmul.f32 %v1000, %v1489
  %v1740 = vmul.f32 %v1128, %v1490
  %v1741 = vmul.f32 %v1001, %v1392
  %v1742 = vmul.f32 %v1129, %v1491
  %v1743 = vmul.f32 %v1002, %v1492
  %v1744 = vmul.f32 %v1130, %v1493
  %v1745 = vmul.f32 %v1003, %v1396
  %v1746 = vmul.f32 %v1131, %v1494
  %v1747 = vmul.f32 %v1004, %v1495
  %v1748 = vmul.f32 %v1132, %v1496
  %v1749 = vmul.f32 %v1005, %v1400
  %v1750 = vmul.f32 %v1133, %v1497
  %v1751 = vmul.f32 %v1006, %v1498
  %v1752 = vmul.f32 %v1134, %v1499
  %v1753 = vmul.f32 %v1007, %v1404
  %v1754 = vmul.f32 %v1135, %v1500
  %v1755 = vmul.f32 %v1008, %v1501
  %v1756 = vmul.f32 %v1136, %v1502
  %v1757 = vmul.f32 %v1009, %v1408
  %v1758 = vmul.f32 %v1137, %v1503
  %v1759 = vmul.f32 %v1010, %v1504
  %v1760 = vmul.f32 %v1138, %v1505
  %v1761 = vmul.f32 %v1011, %v1412
  %v1762 = vmul.f32 %v1139, %v1506
  %v1763 = vmul.f32 %v1012, %v1507
  %v1764 = vmul.f32 %v1140, %v1508
  %1765 = vset.pattern.permute.xlu0 1
  %1766 = vperm.xlu0 %1765, %v1205
  %v1767 = vpop.permute.xlu0 %1766
  %1768 = vset.pattern.permute.xlu0 1
  %1769 = vperm.xlu0 %1768, %v1206
  %v1770 = vpop.permute.xlu0 %1769
  %1771 = vset.pattern.permute.xlu0 1
  %1772 = vperm.xlu0 %1771, %v1207
  %v1773 = vpop.permute.xlu0 %1772
  %1774 = vset.pattern.permute.xlu0 1
  %1775 = vperm.xlu0 %1774, %v1208
  %v1776 = vpop.permute.xlu0 %1775
  %1777 = vset.pattern.permute.xlu0 1
  %1778 = vperm.xlu0 %1777, %v1209
  %v1779 = vpop.permute.xlu0 %1778
  %1780 = vset.pattern.permute.xlu0 1
  %1781 = vperm.xlu0 %1780, %v1210
  %v1782 = vpop.permute.xlu0 %1781
  %1783 = vset.pattern.permute.xlu0 1
  %1784 = vperm.xlu0 %1783, %v1211
  %v1785 = vpop.permute.xlu0 %1784
  %1786 = vset.pattern.permute.xlu0 1
  %1787 = vperm.xlu0 %1786, %v1212
  %v1788 = vpop.permute.xlu0 %1787
  %1789 = vset.pattern.permute.xlu0 1
  %1790 = vperm.xlu0 %1789, %v1213
  %v1791 = vpop.permute.xlu0 %1790
  %1792 = vset.pattern.permute.xlu0 1
  %1793 = vperm.xlu0 %1792, %v1214
  %v1794 = vpop.permute.xlu0 %1793
  %1795 = vset.pattern.permute.xlu0 1
  %1796 = vperm.xlu0 %1795, %v1215
  %v1797 = vpop.permute.xlu0 %1796
  %1798 = vset.pattern.permute.xlu0 1
  %1799 = vperm.xlu0 %1798, %v1216
  %v1800 = vpop.permute.xlu0 %1799
  %1801 = vset.pattern.permute.xlu0 1
  %1802 = vperm.xlu0 %1801, %v1217
  %v1803 = vpop.permute.xlu0 %1802
  %1804 = vset.pattern.permute.xlu0 1
  %1805 = vperm.xlu0 %1804, %v1218
  %v1806 = vpop.permute.xlu0 %1805
  %1807 = vset.pattern.permute.xlu0 1
  %1808 = vperm.xlu0 %1807, %v1219
  %v1809 = vpop.permute.xlu0 %1808
  %1810 = vset.pattern.permute.xlu0 1
  %1811 = vperm.xlu0 %1810, %v1220
  %v1812 = vpop.permute.xlu0 %1811
  %v1814 = vunpack.c.l.s4 839922192
  %v1815 = vunpack.c.0.s8 %v1814
  %v1816 = vperm.slane %v1767, %v1815
  %v1818 = vunpack.c.l.s4 1985246804
  %v1819 = vunpack.c.0.s8 %v1818
  %v1820 = vperm.slane %v1767, %v1819
  %v1822 = vunpack.c.l.s4 839922192
  %v1823 = vunpack.c.0.s8 %v1822
  %v1824 = vperm.slane %v1770, %v1823
  %v1826 = vunpack.c.l.s4 1985246804
  %v1827 = vunpack.c.0.s8 %v1826
  %v1828 = vperm.slane %v1770, %v1827
  %v1830 = vunpack.c.l.s4 839922192
  %v1831 = vunpack.c.0.s8 %v1830
  %v1832 = vperm.slane %v1773, %v1831
  %v1834 = vunpack.c.l.s4 1985246804
  %v1835 = vunpack.c.0.s8 %v1834
  %v1836 = vperm.slane %v1773, %v1835
  %v1838 = vunpack.c.l.s4 839922192
  %v1839 = vunpack.c.0.s8 %v1838
  %v1840 = vperm.slane %v1776, %v1839
  %v1842 = vunpack.c.l.s4 1985246804
  %v1843 = vunpack.c.0.s8 %v1842
  %v1844 = vperm.slane %v1776, %v1843
  %v1846 = vunpack.c.l.s4 839922192
  %v1847 = vunpack.c.0.s8 %v1846
  %v1848 = vperm.slane %v1779, %v1847
  %v1850 = vunpack.c.l.s4 1985246804
  %v1851 = vunpack.c.0.s8 %v1850
  %v1852 = vperm.slane %v1779, %v1851
  %v1854 = vunpack.c.l.s4 839922192
  %v1855 = vunpack.c.0.s8 %v1854
  %v1856 = vperm.slane %v1782, %v1855
  %v1858 = vunpack.c.l.s4 1985246804
  %v1859 = vunpack.c.0.s8 %v1858
  %v1860 = vperm.slane %v1782, %v1859
  %v1862 = vunpack.c.l.s4 839922192
  %v1863 = vunpack.c.0.s8 %v1862
  %v1864 = vperm.slane %v1785, %v1863
  %v1866 = vunpack.c.l.s4 1985246804
  %v1867 = vunpack.c.0.s8 %v1866
  %v1868 = vperm.slane %v1785, %v1867
  %v1870 = vunpack.c.l.s4 839922192
  %v1871 = vunpack.c.0.s8 %v1870
  %v1872 = vperm.slane %v1788, %v1871
  %v1874 = vunpack.c.l.s4 1985246804
  %v1875 = vunpack.c.0.s8 %v1874
  %v1876 = vperm.slane %v1788, %v1875
  %v1878 = vunpack.c.l.s4 839922192
  %v1879 = vunpack.c.0.s8 %v1878
  %v1880 = vperm.slane %v1791, %v1879
  %v1882 = vunpack.c.l.s4 1985246804
  %v1883 = vunpack.c.0.s8 %v1882
  %v1884 = vperm.slane %v1791, %v1883
  %v1886 = vunpack.c.l.s4 839922192
  %v1887 = vunpack.c.0.s8 %v1886
  %v1888 = vperm.slane %v1794, %v1887
  %v1890 = vunpack.c.l.s4 1985246804
  %v1891 = vunpack.c.0.s8 %v1890
  %v1892 = vperm.slane %v1794, %v1891
  %v1894 = vunpack.c.l.s4 839922192
  %v1895 = vunpack.c.0.s8 %v1894
  %v1896 = vperm.slane %v1797, %v1895
  %v1898 = vunpack.c.l.s4 1985246804
  %v1899 = vunpack.c.0.s8 %v1898
  %v1900 = vperm.slane %v1797, %v1899
  %v1902 = vunpack.c.l.s4 839922192
  %v1903 = vunpack.c.0.s8 %v1902
  %v1904 = vperm.slane %v1800, %v1903
  %v1906 = vunpack.c.l.s4 1985246804
  %v1907 = vunpack.c.0.s8 %v1906
  %v1908 = vperm.slane %v1800, %v1907
  %v1910 = vunpack.c.l.s4 839922192
  %v1911 = vunpack.c.0.s8 %v1910
  %v1912 = vperm.slane %v1803, %v1911
  %v1914 = vunpack.c.l.s4 1985246804
  %v1915 = vunpack.c.0.s8 %v1914
  %v1916 = vperm.slane %v1803, %v1915
  %v1918 = vunpack.c.l.s4 839922192
  %v1919 = vunpack.c.0.s8 %v1918
  %v1920 = vperm.slane %v1806, %v1919
  %v1922 = vunpack.c.l.s4 1985246804
  %v1923 = vunpack.c.0.s8 %v1922
  %v1924 = vperm.slane %v1806, %v1923
  %v1926 = vunpack.c.l.s4 839922192
  %v1927 = vunpack.c.0.s8 %v1926
  %v1928 = vperm.slane %v1809, %v1927
  %v1930 = vunpack.c.l.s4 1985246804
  %v1931 = vunpack.c.0.s8 %v1930
  %v1932 = vperm.slane %v1809, %v1931
  %v1934 = vunpack.c.l.s4 839922192
  %v1935 = vunpack.c.0.s8 %v1934
  %v1936 = vperm.slane %v1812, %v1935
  %v1938 = vunpack.c.l.s4 1985246804
  %v1939 = vunpack.c.0.s8 %v1938
  %v1940 = vperm.slane %v1812, %v1939
  %v1941 = vrot.slane %v1816, 7
  %v1942 = vrot.slane %v1816, 1
  %v1943 = vrot.slane %v1816, 2
  %v1944 = vrot.slane %v1820, 7
  %v1945 = vrot.slane %v1820, 1
  %v1946 = vrot.slane %v1820, 2
  %v1947 = vrot.slane %v1824, 7
  %v1948 = vrot.slane %v1824, 1
  %v1949 = vrot.slane %v1824, 2
  %v1950 = vrot.slane %v1828, 7
  %v1951 = vrot.slane %v1828, 1
  %v1952 = vrot.slane %v1828, 2
  %v1953 = vrot.slane %v1832, 7
  %v1954 = vrot.slane %v1832, 1
  %v1955 = vrot.slane %v1832, 2
  %v1956 = vrot.slane %v1836, 7
  %v1957 = vrot.slane %v1836, 1
  %v1958 = vrot.slane %v1836, 2
  %v1959 = vrot.slane %v1840, 7
  %v1960 = vrot.slane %v1840, 1
  %v1961 = vrot.slane %v1840, 2
  %v1962 = vrot.slane %v1844, 7
  %v1963 = vrot.slane %v1844, 1
  %v1964 = vrot.slane %v1844, 2
  %v1965 = vrot.slane %v1848, 7
  %v1966 = vrot.slane %v1848, 1
  %v1967 = vrot.slane %v1848, 2
  %v1968 = vrot.slane %v1852, 7
  %v1969 = vrot.slane %v1852, 1
  %v1970 = vrot.slane %v1852, 2
  %v1971 = vrot.slane %v1856, 7
  %v1972 = vrot.slane %v1856, 1
  %v1973 = vrot.slane %v1856, 2
  %v1974 = vrot.slane %v1860, 7
  %v1975 = vrot.slane %v1860, 1
  %v1976 = vrot.slane %v1860, 2
  %v1977 = vrot.slane %v1864, 7
  %v1978 = vrot.slane %v1864, 1
  %v1979 = vrot.slane %v1864, 2
  %v1980 = vrot.slane %v1868, 7
  %v1981 = vrot.slane %v1868, 1
  %v1982 = vrot.slane %v1868, 2
  %v1983 = vrot.slane %v1872, 7
  %v1984 = vrot.slane %v1872, 1
  %v1985 = vrot.slane %v1872, 2
  %v1986 = vrot.slane %v1876, 7
  %v1987 = vrot.slane %v1876, 1
  %v1988 = vrot.slane %v1876, 2
  %v1989 = vrot.slane %v1880, 7
  %v1990 = vrot.slane %v1880, 1
  %v1991 = vrot.slane %v1880, 2
  %v1992 = vrot.slane %v1884, 7
  %v1993 = vrot.slane %v1884, 1
  %v1994 = vrot.slane %v1884, 2
  %v1995 = vrot.slane %v1888, 7
  %v1996 = vrot.slane %v1888, 1
  %v1997 = vrot.slane %v1888, 2
  %v1998 = vrot.slane %v1892, 7
  %v1999 = vrot.slane %v1892, 1
  %v2000 = vrot.slane %v1892, 2
  %v2001 = vrot.slane %v1896, 7
  %v2002 = vrot.slane %v1896, 1
  %v2003 = vrot.slane %v1896, 2
  %v2004 = vrot.slane %v1900, 7
  %v2005 = vrot.slane %v1900, 1
  %v2006 = vrot.slane %v1900, 2
  %v2007 = vrot.slane %v1904, 7
  %v2008 = vrot.slane %v1904, 1
  %v2009 = vrot.slane %v1904, 2
  %v2010 = vrot.slane %v1908, 7
  %v2011 = vrot.slane %v1908, 1
  %v2012 = vrot.slane %v1908, 2
  %v2013 = vrot.slane %v1912, 7
  %v2014 = vrot.slane %v1912, 1
  %v2015 = vrot.slane %v1912, 2
  %v2016 = vrot.slane %v1916, 7
  %v2017 = vrot.slane %v1916, 1
  %v2018 = vrot.slane %v1916, 2
  %v2019 = vrot.slane %v1920, 7
  %v2020 = vrot.slane %v1920, 1
  %v2021 = vrot.slane %v1920, 2
  %v2022 = vrot.slane %v1924, 7
  %v2023 = vrot.slane %v1924, 1
  %v2024 = vrot.slane %v1924, 2
  %v2025 = vrot.slane %v1928, 7
  %v2026 = vrot.slane %v1928, 1
  %v2027 = vrot.slane %v1928, 2
  %v2028 = vrot.slane %v1932, 7
  %v2029 = vrot.slane %v1932, 1
  %v2030 = vrot.slane %v1932, 2
  %v2031 = vrot.slane %v1936, 7
  %v2032 = vrot.slane %v1936, 1
  %v2033 = vrot.slane %v1936, 2
  %v2034 = vrot.slane %v1940, 7
  %v2035 = vrot.slane %v1940, 1
  %v2036 = vrot.slane %v1940, 2
  %v2165 = vmul.f32 %v949, %v1941
  %v2166 = vmul.f32 %v1077, %v1816
  %v2167 = vmul.f32 %v950, %v1942
  %v2168 = vmul.f32 %v1078, %v1943
  %v2169 = vmul.f32 %v951, %v1944
  %v2170 = vmul.f32 %v1079, %v1820
  %v2171 = vmul.f32 %v952, %v1945
  %v2172 = vmul.f32 %v1080, %v1946
  %v2173 = vmul.f32 %v953, %v1947
  %v2174 = vmul.f32 %v1081, %v1824
  %v2175 = vmul.f32 %v954, %v1948
  %v2176 = vmul.f32 %v1082, %v1949
  %v2177 = vmul.f32 %v955, %v1950
  %v2178 = vmul.f32 %v1083, %v1828
  %v2179 = vmul.f32 %v956, %v1951
  %v2180 = vmul.f32 %v1084, %v1952
  %v2181 = vmul.f32 %v957, %v1953
  %v2182 = vmul.f32 %v1085, %v1832
  %v2183 = vmul.f32 %v958, %v1954
  %v2184 = vmul.f32 %v1086, %v1955
  %v2185 = vmul.f32 %v959, %v1956
  %v2186 = vmul.f32 %v1087, %v1836
  %v2187 = vmul.f32 %v960, %v1957
  %v2188 = vmul.f32 %v1088, %v1958
  %v2189 = vmul.f32 %v961, %v1959
  %v2190 = vmul.f32 %v1089, %v1840
  %v2191 = vmul.f32 %v962, %v1960
  %v2192 = vmul.f32 %v1090, %v1961
  %v2193 = vmul.f32 %v963, %v1962
  %v2194 = vmul.f32 %v1091, %v1844
  %v2195 = vmul.f32 %v964, %v1963
  %v2196 = vmul.f32 %v1092, %v1964
  %v2197 = vmul.f32 %v965, %v1965
  %v2198 = vmul.f32 %v1093, %v1848
  %v2199 = vmul.f32 %v966, %v1966
  %v2200 = vmul.f32 %v1094, %v1967
  %v2201 = vmul.f32 %v967, %v1968
  %v2202 = vmul.f32 %v1095, %v1852
  %v2203 = vmul.f32 %v968, %v1969
  %v2204 = vmul.f32 %v1096, %v1970
  %v2205 = vmul.f32 %v969, %v1971
  %v2206 = vmul.f32 %v1097, %v1856
  %v2207 = vmul.f32 %v970, %v1972
  %v2208 = vmul.f32 %v1098, %v1973
  %v2209 = vmul.f32 %v971, %v1974
  %v2210 = vmul.f32 %v1099, %v1860
  %v2211 = vmul.f32 %v972, %v1975
  %v2212 = vmul.f32 %v1100, %v1976
  %v2213 = vmul.f32 %v973, %v1977
  %v2214 = vmul.f32 %v1101, %v1864
  %v2215 = vmul.f32 %v974, %v1978
  %v2216 = vmul.f32 %v1102, %v1979
  %v2217 = vmul.f32 %v975, %v1980
  %v2218 = vmul.f32 %v1103, %v1868
  %v2219 = vmul.f32 %v976, %v1981
  %v2220 = vmul.f32 %v1104, %v1982
  %v2221 = vmul.f32 %v977, %v1983
  %v2222 = vmul.f32 %v1105, %v1872
  %v2223 = vmul.f32 %v978, %v1984
  %v2224 = vmul.f32 %v1106, %v1985
  %v2225 = vmul.f32 %v979, %v1986
  %v2226 = vmul.f32 %v1107, %v1876
  %v2227 = vmul.f32 %v980, %v1987
  %v2228 = vmul.f32 %v1108, %v1988
  %v2229 = vmul.f32 %v981, %v1989
  %v2230 = vmul.f32 %v1109, %v1880
  %v2231 = vmul.f32 %v982, %v1990
  %v2232 = vmul.f32 %v1110, %v1991
  %v2233 = vmul.f32 %v983, %v1992
  %v2234 = vmul.f32 %v1111, %v1884
  %v2235 = vmul.f32 %v984, %v1993
  %v2236 = vmul.f32 %v1112, %v1994
  %v2237 = vmul.f32 %v985, %v1995
  %v2238 = vmul.f32 %v1113, %v1888
  %v2239 = vmul.f32 %v986, %v1996
  %v2240 = vmul.f32 %v1114, %v1997
  %v2241 = vmul.f32 %v987, %v1998
  %v2242 = vmul.f32 %v1115, %v1892
  %v2243 = vmul.f32 %v988, %v1999
  %v2244 = vmul.f32 %v1116, %v2000
  %v2245 = vmul.f32 %v989, %v2001
  %v2246 = vmul.f32 %v1117, %v1896
  %v2247 = vmul.f32 %v990, %v2002
  %v2248 = vmul.f32 %v1118, %v2003
  %v2249 = vmul.f32 %v991, %v2004
  %v2250 = vmul.f32 %v1119, %v1900
  %v2251 = vmul.f32 %v992, %v2005
  %v2252 = vmul.f32 %v1120, %v2006
  %v2253 = vmul.f32 %v993, %v2007
  %v2254 = vmul.f32 %v1121, %v1904
  %v2255 = vmul.f32 %v994, %v2008
  %v2256 = vmul.f32 %v1122, %v2009
  %v2257 = vmul.f32 %v995, %v2010
  %v2258 = vmul.f32 %v1123, %v1908
  %v2259 = vmul.f32 %v996, %v2011
  %v2260 = vmul.f32 %v1124, %v2012
  %v2261 = vmul.f32 %v997, %v2013
  %v2262 = vmul.f32 %v1125, %v1912
  %v2263 = vmul.f32 %v998, %v2014
  %v2264 = vmul.f32 %v1126, %v2015
  %v2265 = vmul.f32 %v999, %v2016
  %v2266 = vmul.f32 %v1127, %v1916
  %v2267 = vmul.f32 %v1000, %v2017
  %v2268 = vmul.f32 %v1128, %v2018
  %v2269 = vmul.f32 %v1001, %v2019
  %v2270 = vmul.f32 %v1129, %v1920
  %v2271 = vmul.f32 %v1002, %v2020
  %v2272 = vmul.f32 %v1130, %v2021
  %v2273 = vmul.f32 %v1003, %v2022
  %v2274 = vmul.f32 %v1131, %v1924
  %v2275 = vmul.f32 %v1004, %v2023
  %v2276 = vmul.f32 %v1132, %v2024
  %v2277 = vmul.f32 %v1005, %v2025
  %v2278 = vmul.f32 %v1133, %v1928
  %v2279 = vmul.f32 %v1006, %v2026
  %v2280 = vmul.f32 %v1134, %v2027
  %v2281 = vmul.f32 %v1007, %v2028
  %v2282 = vmul.f32 %v1135, %v1932
  %v2283 = vmul.f32 %v1008, %v2029
  %v2284 = vmul.f32 %v1136, %v2030
  %v2285 = vmul.f32 %v1009, %v2031
  %v2286 = vmul.f32 %v1137, %v1936
  %v2287 = vmul.f32 %v1010, %v2032
  %v2288 = vmul.f32 %v1138, %v2033
  %v2289 = vmul.f32 %v1011, %v2034
  %v2290 = vmul.f32 %v1139, %v1940
  %v2291 = vmul.f32 %v1012, %v2035
  %v2292 = vmul.f32 %v1140, %v2036
  %v2421 = vrot.slane %v2165, 5
  %v2422 = vrot.slane %v2421, 4
  %v2423 = vrot.slane %v2166, 5
  %v2424 = vrot.slane %v2423, 4
  %v2425 = vrot.slane %v2167, 5
  %v2426 = vrot.slane %v2425, 4
  %v2427 = vrot.slane %v2168, 5
  %v2428 = vrot.slane %v2427, 4
  %v2429 = vrot.slane %v2169, 5
  %v2430 = vrot.slane %v2429, 4
  %v2431 = vrot.slane %v2170, 5
  %v2432 = vrot.slane %v2431, 4
  %v2433 = vrot.slane %v2171, 5
  %v2434 = vrot.slane %v2433, 4
  %v2435 = vrot.slane %v2172, 5
  %v2436 = vrot.slane %v2435, 4
  %v2437 = vrot.slane %v2173, 5
  %v2438 = vrot.slane %v2437, 4
  %v2439 = vrot.slane %v2174, 5
  %v2440 = vrot.slane %v2439, 4
  %v2441 = vrot.slane %v2175, 5
  %v2442 = vrot.slane %v2441, 4
  %v2443 = vrot.slane %v2176, 5
  %v2444 = vrot.slane %v2443, 4
  %v2445 = vrot.slane %v2177, 5
  %v2446 = vrot.slane %v2445, 4
  %v2447 = vrot.slane %v2178, 5
  %v2448 = vrot.slane %v2447, 4
  %v2449 = vrot.slane %v2179, 5
  %v2450 = vrot.slane %v2449, 4
  %v2451 = vrot.slane %v2180, 5
  %v2452 = vrot.slane %v2451, 4
  %v2453 = vrot.slane %v2181, 5
  %v2454 = vrot.slane %v2453, 4
  %v2455 = vrot.slane %v2182, 5
  %v2456 = vrot.slane %v2455, 4
  %v2457 = vrot.slane %v2183, 5
  %v2458 = vrot.slane %v2457, 4
  %v2459 = vrot.slane %v2184, 5
  %v2460 = vrot.slane %v2459, 4
  %v2461 = vrot.slane %v2185, 5
  %v2462 = vrot.slane %v2461, 4
  %v2463 = vrot.slane %v2186, 5
  %v2464 = vrot.slane %v2463, 4
  %v2465 = vrot.slane %v2187, 5
  %v2466 = vrot.slane %v2465, 4
  %v2467 = vrot.slane %v2188, 5
  %v2468 = vrot.slane %v2467, 4
  %v2469 = vrot.slane %v2189, 5
  %v2470 = vrot.slane %v2469, 4
  %v2471 = vrot.slane %v2190, 5
  %v2472 = vrot.slane %v2471, 4
  %v2473 = vrot.slane %v2191, 5
  %v2474 = vrot.slane %v2473, 4
  %v2475 = vrot.slane %v2192, 5
  %v2476 = vrot.slane %v2475, 4
  %v2477 = vrot.slane %v2193, 5
  %v2478 = vrot.slane %v2477, 4
  %v2479 = vrot.slane %v2194, 5
  %v2480 = vrot.slane %v2479, 4
  %v2481 = vrot.slane %v2195, 5
  %v2482 = vrot.slane %v2481, 4
  %v2483 = vrot.slane %v2196, 5
  %v2484 = vrot.slane %v2483, 4
  %v2485 = vrot.slane %v2197, 5
  %v2486 = vrot.slane %v2485, 4
  %v2487 = vrot.slane %v2198, 5
  %v2488 = vrot.slane %v2487, 4
  %v2489 = vrot.slane %v2199, 5
  %v2490 = vrot.slane %v2489, 4
  %v2491 = vrot.slane %v2200, 5
  %v2492 = vrot.slane %v2491, 4
  %v2493 = vrot.slane %v2201, 5
  %v2494 = vrot.slane %v2493, 4
  %v2495 = vrot.slane %v2202, 5
  %v2496 = vrot.slane %v2495, 4
  %v2497 = vrot.slane %v2203, 5
  %v2498 = vrot.slane %v2497, 4
  %v2499 = vrot.slane %v2204, 5
  %v2500 = vrot.slane %v2499, 4
  %v2501 = vrot.slane %v2205, 5
  %v2502 = vrot.slane %v2501, 4
  %v2503 = vrot.slane %v2206, 5
  %v2504 = vrot.slane %v2503, 4
  %v2505 = vrot.slane %v2207, 5
  %v2506 = vrot.slane %v2505, 4
  %v2507 = vrot.slane %v2208, 5
  %v2508 = vrot.slane %v2507, 4
  %v2509 = vrot.slane %v2209, 5
  %v2510 = vrot.slane %v2509, 4
  %v2511 = vrot.slane %v2210, 5
  %v2512 = vrot.slane %v2511, 4
  %v2513 = vrot.slane %v2211, 5
  %v2514 = vrot.slane %v2513, 4
  %v2515 = vrot.slane %v2212, 5
  %v2516 = vrot.slane %v2515, 4
  %v2517 = vrot.slane %v2213, 5
  %v2518 = vrot.slane %v2517, 4
  %v2519 = vrot.slane %v2214, 5
  %v2520 = vrot.slane %v2519, 4
  %v2521 = vrot.slane %v2215, 5
  %v2522 = vrot.slane %v2521, 4
  %v2523 = vrot.slane %v2216, 5
  %v2524 = vrot.slane %v2523, 4
  %v2525 = vrot.slane %v2217, 5
  %v2526 = vrot.slane %v2525, 4
  %v2527 = vrot.slane %v2218, 5
  %v2528 = vrot.slane %v2527, 4
  %v2529 = vrot.slane %v2219, 5
  %v2530 = vrot.slane %v2529, 4
  %v2531 = vrot.slane %v2220, 5
  %v2532 = vrot.slane %v2531, 4
  %v2533 = vrot.slane %v2221, 5
  %v2534 = vrot.slane %v2533, 4
  %v2535 = vrot.slane %v2222, 5
  %v2536 = vrot.slane %v2535, 4
  %v2537 = vrot.slane %v2223, 5
  %v2538 = vrot.slane %v2537, 4
  %v2539 = vrot.slane %v2224, 5
  %v2540 = vrot.slane %v2539, 4
  %v2541 = vrot.slane %v2225, 5
  %v2542 = vrot.slane %v2541, 4
  %v2543 = vrot.slane %v2226, 5
  %v2544 = vrot.slane %v2543, 4
  %v2545 = vrot.slane %v2227, 5
  %v2546 = vrot.slane %v2545, 4
  %v2547 = vrot.slane %v2228, 5
  %v2548 = vrot.slane %v2547, 4
  %v2549 = vrot.slane %v2229, 5
  %v2550 = vrot.slane %v2549, 4
  %v2551 = vrot.slane %v2230, 5
  %v2552 = vrot.slane %v2551, 4
  %v2553 = vrot.slane %v2231, 5
  %v2554 = vrot.slane %v2553, 4
  %v2555 = vrot.slane %v2232, 5
  %v2556 = vrot.slane %v2555, 4
  %v2557 = vrot.slane %v2233, 5
  %v2558 = vrot.slane %v2557, 4
  %v2559 = vrot.slane %v2234, 5
  %v2560 = vrot.slane %v2559, 4
  %v2561 = vrot.slane %v2235, 5
  %v2562 = vrot.slane %v2561, 4
  %v2563 = vrot.slane %v2236, 5
  %v2564 = vrot.slane %v2563, 4
  %v2565 = vrot.slane %v2237, 5
  %v2566 = vrot.slane %v2565, 4
  %v2567 = vrot.slane %v2238, 5
  %v2568 = vrot.slane %v2567, 4
  %v2569 = vrot.slane %v2239, 5
  %v2570 = vrot.slane %v2569, 4
  %v2571 = vrot.slane %v2240, 5
  %v2572 = vrot.slane %v2571, 4
  %v2573 = vrot.slane %v2241, 5
  %v2574 = vrot.slane %v2573, 4
  %v2575 = vrot.slane %v2242, 5
  %v2576 = vrot.slane %v2575, 4
  %v2577 = vrot.slane %v2243, 5
  %v2578 = vrot.slane %v2577, 4
  %v2579 = vrot.slane %v2244, 5
  %v2580 = vrot.slane %v2579, 4
  %v2581 = vrot.slane %v2245, 5
  %v2582 = vrot.slane %v2581, 4
  %v2583 = vrot.slane %v2246, 5
  %v2584 = vrot.slane %v2583, 4
  %v2585 = vrot.slane %v2247, 5
  %v2586 = vrot.slane %v2585, 4
  %v2587 = vrot.slane %v2248, 5
  %v2588 = vrot.slane %v2587, 4
  %v2589 = vrot.slane %v2249, 5
  %v2590 = vrot.slane %v2589, 4
  %v2591 = vrot.slane %v2250, 5
  %v2592 = vrot.slane %v2591, 4
  %v2593 = vrot.slane %v2251, 5
  %v2594 = vrot.slane %v2593, 4
  %v2595 = vrot.slane %v2252, 5
  %v2596 = vrot.slane %v2595, 4
  %v2597 = vrot.slane %v2253, 5
  %v2598 = vrot.slane %v2597, 4
  %v2599 = vrot.slane %v2254, 5
  %v2600 = vrot.slane %v2599, 4
  %v2601 = vrot.slane %v2255, 5
  %v2602 = vrot.slane %v2601, 4
  %v2603 = vrot.slane %v2256, 5
  %v2604 = vrot.slane %v2603, 4
  %v2605 = vrot.slane %v2257, 5
  %v2606 = vrot.slane %v2605, 4
  %v2607 = vrot.slane %v2258, 5
  %v2608 = vrot.slane %v2607, 4
  %v2609 = vrot.slane %v2259, 5
  %v2610 = vrot.slane %v2609, 4
  %v2611 = vrot.slane %v2260, 5
  %v2612 = vrot.slane %v2611, 4
  %v2613 = vrot.slane %v2261, 5
  %v2614 = vrot.slane %v2613, 4
  %v2615 = vrot.slane %v2262, 5
  %v2616 = vrot.slane %v2615, 4
  %v2617 = vrot.slane %v2263, 5
  %v2618 = vrot.slane %v2617, 4
  %v2619 = vrot.slane %v2264, 5
  %v2620 = vrot.slane %v2619, 4
  %v2621 = vrot.slane %v2265, 5
  %v2622 = vrot.slane %v2621, 4
  %v2623 = vrot.slane %v2266, 5
  %v2624 = vrot.slane %v2623, 4
  %v2625 = vrot.slane %v2267, 5
  %v2626 = vrot.slane %v2625, 4
  %v2627 = vrot.slane %v2268, 5
  %v2628 = vrot.slane %v2627, 4
  %v2629 = vrot.slane %v2269, 5
  %v2630 = vrot.slane %v2629, 4
  %v2631 = vrot.slane %v2270, 5
  %v2632 = vrot.slane %v2631, 4
  %v2633 = vrot.slane %v2271, 5
  %v2634 = vrot.slane %v2633, 4
  %v2635 = vrot.slane %v2272, 5
  %v2636 = vrot.slane %v2635, 4
  %v2637 = vrot.slane %v2273, 5
  %v2638 = vrot.slane %v2637, 4
  %v2639 = vrot.slane %v2274, 5
  %v2640 = vrot.slane %v2639, 4
  %v2641 = vrot.slane %v2275, 5
  %v2642 = vrot.slane %v2641, 4
  %v2643 = vrot.slane %v2276, 5
  %v2644 = vrot.slane %v2643, 4
  %v2645 = vrot.slane %v2277, 5
  %v2646 = vrot.slane %v2645, 4
  %v2647 = vrot.slane %v2278, 5
  %v2648 = vrot.slane %v2647, 4
  %v2649 = vrot.slane %v2279, 5
  %v2650 = vrot.slane %v2649, 4
  %v2651 = vrot.slane %v2280, 5
  %v2652 = vrot.slane %v2651, 4
  %v2653 = vrot.slane %v2281, 5
  %v2654 = vrot.slane %v2653, 4
  %v2655 = vrot.slane %v2282, 5
  %v2656 = vrot.slane %v2655, 4
  %v2657 = vrot.slane %v2283, 5
  %v2658 = vrot.slane %v2657, 4
  %v2659 = vrot.slane %v2284, 5
  %v2660 = vrot.slane %v2659, 4
  %v2661 = vrot.slane %v2285, 5
  %v2662 = vrot.slane %v2661, 4
  %v2663 = vrot.slane %v2286, 5
  %v2664 = vrot.slane %v2663, 4
  %v2665 = vrot.slane %v2287, 5
  %v2666 = vrot.slane %v2665, 4
  %v2667 = vrot.slane %v2288, 5
  %v2668 = vrot.slane %v2667, 4
  %v2669 = vrot.slane %v2289, 5
  %v2670 = vrot.slane %v2669, 4
  %v2671 = vrot.slane %v2290, 5
  %v2672 = vrot.slane %v2671, 4
  %v2673 = vrot.slane %v2291, 5
  %v2674 = vrot.slane %v2673, 4
  %v2675 = vrot.slane %v2292, 5
  %v2676 = vrot.slane %v2675, 4
  %v2805 = vadd.f32 %v1637, %v2422
  %v2806 = vadd.f32 %v1638, %v2424
  %v2807 = vadd.f32 %v1639, %v2426
  %v2808 = vadd.f32 %v1640, %v2428
  %v2809 = vadd.f32 %v1641, %v2430
  %v2810 = vadd.f32 %v1642, %v2432
  %v2811 = vadd.f32 %v1643, %v2434
  %v2812 = vadd.f32 %v1644, %v2436
  %v2813 = vadd.f32 %v1645, %v2438
  %v2814 = vadd.f32 %v1646, %v2440
  %v2815 = vadd.f32 %v1647, %v2442
  %v2816 = vadd.f32 %v1648, %v2444
  %v2817 = vadd.f32 %v1649, %v2446
  %v2818 = vadd.f32 %v1650, %v2448
  %v2819 = vadd.f32 %v1651, %v2450
  %v2820 = vadd.f32 %v1652, %v2452
  %v2821 = vadd.f32 %v1653, %v2454
  %v2822 = vadd.f32 %v1654, %v2456
  %v2823 = vadd.f32 %v1655, %v2458
  %v2824 = vadd.f32 %v1656, %v2460
  %v2825 = vadd.f32 %v1657, %v2462
  %v2826 = vadd.f32 %v1658, %v2464
  %v2827 = vadd.f32 %v1659, %v2466
  %v2828 = vadd.f32 %v1660, %v2468
  %v2829 = vadd.f32 %v1661, %v2470
  %v2830 = vadd.f32 %v1662, %v2472
  %v2831 = vadd.f32 %v1663, %v2474
  %v2832 = vadd.f32 %v1664, %v2476
  %v2833 = vadd.f32 %v1665, %v2478
  %v2834 = vadd.f32 %v1666, %v2480
  %v2835 = vadd.f32 %v1667, %v2482
  %v2836 = vadd.f32 %v1668, %v2484
  %v2837 = vadd.f32 %v1669, %v2486
  %v2838 = vadd.f32 %v1670, %v2488
  %v2839 = vadd.f32 %v1671, %v2490
  %v2840 = vadd.f32 %v1672, %v2492
  %v2841 = vadd.f32 %v1673, %v2494
  %v2842 = vadd.f32 %v1674, %v2496
  %v2843 = vadd.f32 %v1675, %v2498
  %v2844 = vadd.f32 %v1676, %v2500
  %v2845 = vadd.f32 %v1677, %v2502
  %v2846 = vadd.f32 %v1678, %v2504
  %v2847 = vadd.f32 %v1679, %v2506
  %v2848 = vadd.f32 %v1680, %v2508
  %v2849 = vadd.f32 %v1681, %v2510
  %v2850 = vadd.f32 %v1682, %v2512
  %v2851 = vadd.f32 %v1683, %v2514
  %v2852 = vadd.f32 %v1684, %v2516
  %v2853 = vadd.f32 %v1685, %v2518
  %v2854 = vadd.f32 %v1686, %v2520
  %v2855 = vadd.f32 %v1687, %v2522
  %v2856 = vadd.f32 %v1688, %v2524
  %v2857 = vadd.f32 %v1689, %v2526
  %v2858 = vadd.f32 %v1690, %v2528
  %v2859 = vadd.f32 %v1691, %v2530
  %v2860 = vadd.f32 %v1692, %v2532
  %v2861 = vadd.f32 %v1693, %v2534
  %v2862 = vadd.f32 %v1694, %v2536
  %v2863 = vadd.f32 %v1695, %v2538
  %v2864 = vadd.f32 %v1696, %v2540
  %v2865 = vadd.f32 %v1697, %v2542
  %v2866 = vadd.f32 %v1698, %v2544
  %v2867 = vadd.f32 %v1699, %v2546
  %v2868 = vadd.f32 %v1700, %v2548
  %v2869 = vadd.f32 %v1701, %v2550
  %v2870 = vadd.f32 %v1702, %v2552
  %v2871 = vadd.f32 %v1703, %v2554
  %v2872 = vadd.f32 %v1704, %v2556
  %v2873 = vadd.f32 %v1705, %v2558
  %v2874 = vadd.f32 %v1706, %v2560
  %v2875 = vadd.f32 %v1707, %v2562
  %v2876 = vadd.f32 %v1708, %v2564
  %v2877 = vadd.f32 %v1709, %v2566
  %v2878 = vadd.f32 %v1710, %v2568
  %v2879 = vadd.f32 %v1711, %v2570
  %v2880 = vadd.f32 %v1712, %v2572
  %v2881 = vadd.f32 %v1713, %v2574
  %v2882 = vadd.f32 %v1714, %v2576
  %v2883 = vadd.f32 %v1715, %v2578
  %v2884 = vadd.f32 %v1716, %v2580
  %v2885 = vadd.f32 %v1717, %v2582
  %v2886 = vadd.f32 %v1718, %v2584
  %v2887 = vadd.f32 %v1719, %v2586
  %v2888 = vadd.f32 %v1720, %v2588
  %v2889 = vadd.f32 %v1721, %v2590
  %v2890 = vadd.f32 %v1722, %v2592
  %v2891 = vadd.f32 %v1723, %v2594
  %v2892 = vadd.f32 %v1724, %v2596
  %v2893 = vadd.f32 %v1725, %v2598
  %v2894 = vadd.f32 %v1726, %v2600
  %v2895 = vadd.f32 %v1727, %v2602
  %v2896 = vadd.f32 %v1728, %v2604
  %v2897 = vadd.f32 %v1729, %v2606
  %v2898 = vadd.f32 %v1730, %v2608
  %v2899 = vadd.f32 %v1731, %v2610
  %v2900 = vadd.f32 %v1732, %v2612
  %v2901 = vadd.f32 %v1733, %v2614
  %v2902 = vadd.f32 %v1734, %v2616
  %v2903 = vadd.f32 %v1735, %v2618
  %v2904 = vadd.f32 %v1736, %v2620
  %v2905 = vadd.f32 %v1737, %v2622
  %v2906 = vadd.f32 %v1738, %v2624
  %v2907 = vadd.f32 %v1739, %v2626
  %v2908 = vadd.f32 %v1740, %v2628
  %v2909 = vadd.f32 %v1741, %v2630
  %v2910 = vadd.f32 %v1742, %v2632
  %v2911 = vadd.f32 %v1743, %v2634
  %v2912 = vadd.f32 %v1744, %v2636
  %v2913 = vadd.f32 %v1745, %v2638
  %v2914 = vadd.f32 %v1746, %v2640
  %v2915 = vadd.f32 %v1747, %v2642
  %v2916 = vadd.f32 %v1748, %v2644
  %v2917 = vadd.f32 %v1749, %v2646
  %v2918 = vadd.f32 %v1750, %v2648
  %v2919 = vadd.f32 %v1751, %v2650
  %v2920 = vadd.f32 %v1752, %v2652
  %v2921 = vadd.f32 %v1753, %v2654
  %v2922 = vadd.f32 %v1754, %v2656
  %v2923 = vadd.f32 %v1755, %v2658
  %v2924 = vadd.f32 %v1756, %v2660
  %v2925 = vadd.f32 %v1757, %v2662
  %v2926 = vadd.f32 %v1758, %v2664
  %v2927 = vadd.f32 %v1759, %v2666
  %v2928 = vadd.f32 %v1760, %v2668
  %v2929 = vadd.f32 %v1761, %v2670
  %v2930 = vadd.f32 %v1762, %v2672
  %v2931 = vadd.f32 %v1763, %v2674
  %v2932 = vadd.f32 %v1764, %v2676
  %2933 = vset.pattern.permute.xlu0 2
  %2934 = vperm.xlu0 %2933, %v1205
  %v2935 = vpop.permute.xlu0 %2934
  %2936 = vset.pattern.permute.xlu0 2
  %2937 = vperm.xlu0 %2936, %v1206
  %v2938 = vpop.permute.xlu0 %2937
  %2939 = vset.pattern.permute.xlu0 2
  %2940 = vperm.xlu0 %2939, %v1207
  %v2941 = vpop.permute.xlu0 %2940
  %2942 = vset.pattern.permute.xlu0 2
  %2943 = vperm.xlu0 %2942, %v1208
  %v2944 = vpop.permute.xlu0 %2943
  %2945 = vset.pattern.permute.xlu0 2
  %2946 = vperm.xlu0 %2945, %v1209
  %v2947 = vpop.permute.xlu0 %2946
  %2948 = vset.pattern.permute.xlu0 2
  %2949 = vperm.xlu0 %2948, %v1210
  %v2950 = vpop.permute.xlu0 %2949
  %2951 = vset.pattern.permute.xlu0 2
  %2952 = vperm.xlu0 %2951, %v1211
  %v2953 = vpop.permute.xlu0 %2952
  %2954 = vset.pattern.permute.xlu0 2
  %2955 = vperm.xlu0 %2954, %v1212
  %v2956 = vpop.permute.xlu0 %2955
  %2957 = vset.pattern.permute.xlu0 2
  %2958 = vperm.xlu0 %2957, %v1213
  %v2959 = vpop.permute.xlu0 %2958
  %2960 = vset.pattern.permute.xlu0 2
  %2961 = vperm.xlu0 %2960, %v1214
  %v2962 = vpop.permute.xlu0 %2961
  %2963 = vset.pattern.permute.xlu0 2
  %2964 = vperm.xlu0 %2963, %v1215
  %v2965 = vpop.permute.xlu0 %2964
  %2966 = vset.pattern.permute.xlu0 2
  %2967 = vperm.xlu0 %2966, %v1216
  %v2968 = vpop.permute.xlu0 %2967
  %2969 = vset.pattern.permute.xlu0 2
  %2970 = vperm.xlu0 %2969, %v1217
  %v2971 = vpop.permute.xlu0 %2970
  %2972 = vset.pattern.permute.xlu0 2
  %2973 = vperm.xlu0 %2972, %v1218
  %v2974 = vpop.permute.xlu0 %2973
  %2975 = vset.pattern.permute.xlu0 2
  %2976 = vperm.xlu0 %2975, %v1219
  %v2977 = vpop.permute.xlu0 %2976
  %2978 = vset.pattern.permute.xlu0 2
  %2979 = vperm.xlu0 %2978, %v1220
  %v2980 = vpop.permute.xlu0 %2979
  %v2982 = vunpack.c.l.s4 839922192
  %v2983 = vunpack.c.0.s8 %v2982
  %v2984 = vperm.slane %v2935, %v2983
  %v2986 = vunpack.c.l.s4 1985246804
  %v2987 = vunpack.c.0.s8 %v2986
  %v2988 = vperm.slane %v2935, %v2987
  %v2990 = vunpack.c.l.s4 839922192
  %v2991 = vunpack.c.0.s8 %v2990
  %v2992 = vperm.slane %v2938, %v2991
  %v2994 = vunpack.c.l.s4 1985246804
  %v2995 = vunpack.c.0.s8 %v2994
  %v2996 = vperm.slane %v2938, %v2995
  %v2998 = vunpack.c.l.s4 839922192
  %v2999 = vunpack.c.0.s8 %v2998
  %v3000 = vperm.slane %v2941, %v2999
  %v3002 = vunpack.c.l.s4 1985246804
  %v3003 = vunpack.c.0.s8 %v3002
  %v3004 = vperm.slane %v2941, %v3003
  %v3006 = vunpack.c.l.s4 839922192
  %v3007 = vunpack.c.0.s8 %v3006
  %v3008 = vperm.slane %v2944, %v3007
  %v3010 = vunpack.c.l.s4 1985246804
  %v3011 = vunpack.c.0.s8 %v3010
  %v3012 = vperm.slane %v2944, %v3011
  %v3014 = vunpack.c.l.s4 839922192
  %v3015 = vunpack.c.0.s8 %v3014
  %v3016 = vperm.slane %v2947, %v3015
  %v3018 = vunpack.c.l.s4 1985246804
  %v3019 = vunpack.c.0.s8 %v3018
  %v3020 = vperm.slane %v2947, %v3019
  %v3022 = vunpack.c.l.s4 839922192
  %v3023 = vunpack.c.0.s8 %v3022
  %v3024 = vperm.slane %v2950, %v3023
  %v3026 = vunpack.c.l.s4 1985246804
  %v3027 = vunpack.c.0.s8 %v3026
  %v3028 = vperm.slane %v2950, %v3027
  %v3030 = vunpack.c.l.s4 839922192
  %v3031 = vunpack.c.0.s8 %v3030
  %v3032 = vperm.slane %v2953, %v3031
  %v3034 = vunpack.c.l.s4 1985246804
  %v3035 = vunpack.c.0.s8 %v3034
  %v3036 = vperm.slane %v2953, %v3035
  %v3038 = vunpack.c.l.s4 839922192
  %v3039 = vunpack.c.0.s8 %v3038
  %v3040 = vperm.slane %v2956, %v3039
  %v3042 = vunpack.c.l.s4 1985246804
  %v3043 = vunpack.c.0.s8 %v3042
  %v3044 = vperm.slane %v2956, %v3043
  %v3046 = vunpack.c.l.s4 839922192
  %v3047 = vunpack.c.0.s8 %v3046
  %v3048 = vperm.slane %v2959, %v3047
  %v3050 = vunpack.c.l.s4 1985246804
  %v3051 = vunpack.c.0.s8 %v3050
  %v3052 = vperm.slane %v2959, %v3051
  %v3054 = vunpack.c.l.s4 839922192
  %v3055 = vunpack.c.0.s8 %v3054
  %v3056 = vperm.slane %v2962, %v3055
  %v3058 = vunpack.c.l.s4 1985246804
  %v3059 = vunpack.c.0.s8 %v3058
  %v3060 = vperm.slane %v2962, %v3059
  %v3062 = vunpack.c.l.s4 839922192
  %v3063 = vunpack.c.0.s8 %v3062
  %v3064 = vperm.slane %v2965, %v3063
  %v3066 = vunpack.c.l.s4 1985246804
  %v3067 = vunpack.c.0.s8 %v3066
  %v3068 = vperm.slane %v2965, %v3067
  %v3070 = vunpack.c.l.s4 839922192
  %v3071 = vunpack.c.0.s8 %v3070
  %v3072 = vperm.slane %v2968, %v3071
  %v3074 = vunpack.c.l.s4 1985246804
  %v3075 = vunpack.c.0.s8 %v3074
  %v3076 = vperm.slane %v2968, %v3075
  %v3078 = vunpack.c.l.s4 839922192
  %v3079 = vunpack.c.0.s8 %v3078
  %v3080 = vperm.slane %v2971, %v3079
  %v3082 = vunpack.c.l.s4 1985246804
  %v3083 = vunpack.c.0.s8 %v3082
  %v3084 = vperm.slane %v2971, %v3083
  %v3086 = vunpack.c.l.s4 839922192
  %v3087 = vunpack.c.0.s8 %v3086
  %v3088 = vperm.slane %v2974, %v3087
  %v3090 = vunpack.c.l.s4 1985246804
  %v3091 = vunpack.c.0.s8 %v3090
  %v3092 = vperm.slane %v2974, %v3091
  %v3094 = vunpack.c.l.s4 839922192
  %v3095 = vunpack.c.0.s8 %v3094
  %v3096 = vperm.slane %v2977, %v3095
  %v3098 = vunpack.c.l.s4 1985246804
  %v3099 = vunpack.c.0.s8 %v3098
  %v3100 = vperm.slane %v2977, %v3099
  %v3102 = vunpack.c.l.s4 839922192
  %v3103 = vunpack.c.0.s8 %v3102
  %v3104 = vperm.slane %v2980, %v3103
  %v3106 = vunpack.c.l.s4 1985246804
  %v3107 = vunpack.c.0.s8 %v3106
  %v3108 = vperm.slane %v2980, %v3107
  %v3109 = vrot.slane %v2984, 6
  %v3110 = vrot.slane %v2984, 7
  %v3111 = vrot.slane %v2984, 1
  %v3112 = vrot.slane %v2988, 6
  %v3113 = vrot.slane %v2988, 7
  %v3114 = vrot.slane %v2988, 1
  %v3115 = vrot.slane %v2992, 6
  %v3116 = vrot.slane %v2992, 7
  %v3117 = vrot.slane %v2992, 1
  %v3118 = vrot.slane %v2996, 6
  %v3119 = vrot.slane %v2996, 7
  %v3120 = vrot.slane %v2996, 1
  %v3121 = vrot.slane %v3000, 6
  %v3122 = vrot.slane %v3000, 7
  %v3123 = vrot.slane %v3000, 1
  %v3124 = vrot.slane %v3004, 6
  %v3125 = vrot.slane %v3004, 7
  %v3126 = vrot.slane %v3004, 1
  %v3127 = vrot.slane %v3008, 6
  %v3128 = vrot.slane %v3008, 7
  %v3129 = vrot.slane %v3008, 1
  %v3130 = vrot.slane %v3012, 6
  %v3131 = vrot.slane %v3012, 7
  %v3132 = vrot.slane %v3012, 1
  %v3133 = vrot.slane %v3016, 6
  %v3134 = vrot.slane %v3016, 7
  %v3135 = vrot.slane %v3016, 1
  %v3136 = vrot.slane %v3020, 6
  %v3137 = vrot.slane %v3020, 7
  %v3138 = vrot.slane %v3020, 1
  %v3139 = vrot.slane %v3024, 6
  %v3140 = vrot.slane %v3024, 7
  %v3141 = vrot.slane %v3024, 1
  %v3142 = vrot.slane %v3028, 6
  %v3143 = vrot.slane %v3028, 7
  %v3144 = vrot.slane %v3028, 1
  %v3145 = vrot.slane %v3032, 6
  %v3146 = vrot.slane %v3032, 7
  %v3147 = vrot.slane %v3032, 1
  %v3148 = vrot.slane %v3036, 6
  %v3149 = vrot.slane %v3036, 7
  %v3150 = vrot.slane %v3036, 1
  %v3151 = vrot.slane %v3040, 6
  %v3152 = vrot.slane %v3040, 7
  %v3153 = vrot.slane %v3040, 1
  %v3154 = vrot.slane %v3044, 6
  %v3155 = vrot.slane %v3044, 7
  %v3156 = vrot.slane %v3044, 1
  %v3157 = vrot.slane %v3048, 6
  %v3158 = vrot.slane %v3048, 7
  %v3159 = vrot.slane %v3048, 1
  %v3160 = vrot.slane %v3052, 6
  %v3161 = vrot.slane %v3052, 7
  %v3162 = vrot.slane %v3052, 1
  %v3163 = vrot.slane %v3056, 6
  %v3164 = vrot.slane %v3056, 7
  %v3165 = vrot.slane %v3056, 1
  %v3166 = vrot.slane %v3060, 6
  %v3167 = vrot.slane %v3060, 7
  %v3168 = vrot.slane %v3060, 1
  %v3169 = vrot.slane %v3064, 6
  %v3170 = vrot.slane %v3064, 7
  %v3171 = vrot.slane %v3064, 1
  %v3172 = vrot.slane %v3068, 6
  %v3173 = vrot.slane %v3068, 7
  %v3174 = vrot.slane %v3068, 1
  %v3175 = vrot.slane %v3072, 6
  %v3176 = vrot.slane %v3072, 7
  %v3177 = vrot.slane %v3072, 1
  %v3178 = vrot.slane %v3076, 6
  %v3179 = vrot.slane %v3076, 7
  %v3180 = vrot.slane %v3076, 1
  %v3181 = vrot.slane %v3080, 6
  %v3182 = vrot.slane %v3080, 7
  %v3183 = vrot.slane %v3080, 1
  %v3184 = vrot.slane %v3084, 6
  %v3185 = vrot.slane %v3084, 7
  %v3186 = vrot.slane %v3084, 1
  %v3187 = vrot.slane %v3088, 6
  %v3188 = vrot.slane %v3088, 7
  %v3189 = vrot.slane %v3088, 1
  %v3190 = vrot.slane %v3092, 6
  %v3191 = vrot.slane %v3092, 7
  %v3192 = vrot.slane %v3092, 1
  %v3193 = vrot.slane %v3096, 6
  %v3194 = vrot.slane %v3096, 7
  %v3195 = vrot.slane %v3096, 1
  %v3196 = vrot.slane %v3100, 6
  %v3197 = vrot.slane %v3100, 7
  %v3198 = vrot.slane %v3100, 1
  %v3199 = vrot.slane %v3104, 6
  %v3200 = vrot.slane %v3104, 7
  %v3201 = vrot.slane %v3104, 1
  %v3202 = vrot.slane %v3108, 6
  %v3203 = vrot.slane %v3108, 7
  %v3204 = vrot.slane %v3108, 1
  %v3333 = vmul.f32 %v949, %v3109
  %v3334 = vmul.f32 %v1077, %v3110
  %v3335 = vmul.f32 %v950, %v2984
  %v3336 = vmul.f32 %v1078, %v3111
  %v3337 = vmul.f32 %v951, %v3112
  %v3338 = vmul.f32 %v1079, %v3113
  %v3339 = vmul.f32 %v952, %v2988
  %v3340 = vmul.f32 %v1080, %v3114
  %v3341 = vmul.f32 %v953, %v3115
  %v3342 = vmul.f32 %v1081, %v3116
  %v3343 = vmul.f32 %v954, %v2992
  %v3344 = vmul.f32 %v1082, %v3117
  %v3345 = vmul.f32 %v955, %v3118
  %v3346 = vmul.f32 %v1083, %v3119
  %v3347 = vmul.f32 %v956, %v2996
  %v3348 = vmul.f32 %v1084, %v3120
  %v3349 = vmul.f32 %v957, %v3121
  %v3350 = vmul.f32 %v1085, %v3122
  %v3351 = vmul.f32 %v958, %v3000
  %v3352 = vmul.f32 %v1086, %v3123
  %v3353 = vmul.f32 %v959, %v3124
  %v3354 = vmul.f32 %v1087, %v3125
  %v3355 = vmul.f32 %v960, %v3004
  %v3356 = vmul.f32 %v1088, %v3126
  %v3357 = vmul.f32 %v961, %v3127
  %v3358 = vmul.f32 %v1089, %v3128
  %v3359 = vmul.f32 %v962, %v3008
  %v3360 = vmul.f32 %v1090, %v3129
  %v3361 = vmul.f32 %v963, %v3130
  %v3362 = vmul.f32 %v1091, %v3131
  %v3363 = vmul.f32 %v964, %v3012
  %v3364 = vmul.f32 %v1092, %v3132
  %v3365 = vmul.f32 %v965, %v3133
  %v3366 = vmul.f32 %v1093, %v3134
  %v3367 = vmul.f32 %v966, %v3016
  %v3368 = vmul.f32 %v1094, %v3135
  %v3369 = vmul.f32 %v967, %v3136
  %v3370 = vmul.f32 %v1095, %v3137
  %v3371 = vmul.f32 %v968, %v3020
  %v3372 = vmul.f32 %v1096, %v3138
  %v3373 = vmul.f32 %v969, %v3139
  %v3374 = vmul.f32 %v1097, %v3140
  %v3375 = vmul.f32 %v970, %v3024
  %v3376 = vmul.f32 %v1098, %v3141
  %v3377 = vmul.f32 %v971, %v3142
  %v3378 = vmul.f32 %v1099, %v3143
  %v3379 = vmul.f32 %v972, %v3028
  %v3380 = vmul.f32 %v1100, %v3144
  %v3381 = vmul.f32 %v973, %v3145
  %v3382 = vmul.f32 %v1101, %v3146
  %v3383 = vmul.f32 %v974, %v3032
  %v3384 = vmul.f32 %v1102, %v3147
  %v3385 = vmul.f32 %v975, %v3148
  %v3386 = vmul.f32 %v1103, %v3149
  %v3387 = vmul.f32 %v976, %v3036
  %v3388 = vmul.f32 %v1104, %v3150
  %v3389 = vmul.f32 %v977, %v3151
  %v3390 = vmul.f32 %v1105, %v3152
  %v3391 = vmul.f32 %v978, %v3040
  %v3392 = vmul.f32 %v1106, %v3153
  %v3393 = vmul.f32 %v979, %v3154
  %v3394 = vmul.f32 %v1107, %v3155
  %v3395 = vmul.f32 %v980, %v3044
  %v3396 = vmul.f32 %v1108, %v3156
  %v3397 = vmul.f32 %v981, %v3157
  %v3398 = vmul.f32 %v1109, %v3158
  %v3399 = vmul.f32 %v982, %v3048
  %v3400 = vmul.f32 %v1110, %v3159
  %v3401 = vmul.f32 %v983, %v3160
  %v3402 = vmul.f32 %v1111, %v3161
  %v3403 = vmul.f32 %v984, %v3052
  %v3404 = vmul.f32 %v1112, %v3162
  %v3405 = vmul.f32 %v985, %v3163
  %v3406 = vmul.f32 %v1113, %v3164
  %v3407 = vmul.f32 %v986, %v3056
  %v3408 = vmul.f32 %v1114, %v3165
  %v3409 = vmul.f32 %v987, %v3166
  %v3410 = vmul.f32 %v1115, %v3167
  %v3411 = vmul.f32 %v988, %v3060
  %v3412 = vmul.f32 %v1116, %v3168
  %v3413 = vmul.f32 %v989, %v3169
  %v3414 = vmul.f32 %v1117, %v3170
  %v3415 = vmul.f32 %v990, %v3064
  %v3416 = vmul.f32 %v1118, %v3171
  %v3417 = vmul.f32 %v991, %v3172
  %v3418 = vmul.f32 %v1119, %v3173
  %v3419 = vmul.f32 %v992, %v3068
  %v3420 = vmul.f32 %v1120, %v3174
  %v3421 = vmul.f32 %v993, %v3175
  %v3422 = vmul.f32 %v1121, %v3176
  %v3423 = vmul.f32 %v994, %v3072
  %v3424 = vmul.f32 %v1122, %v3177
  %v3425 = vmul.f32 %v995, %v3178
  %v3426 = vmul.f32 %v1123, %v3179
  %v3427 = vmul.f32 %v996, %v3076
  %v3428 = vmul.f32 %v1124, %v3180
  %v3429 = vmul.f32 %v997, %v3181
  %v3430 = vmul.f32 %v1125, %v3182
  %v3431 = vmul.f32 %v998, %v3080
  %v3432 = vmul.f32 %v1126, %v3183
  %v3433 = vmul.f32 %v999, %v3184
  %v3434 = vmul.f32 %v1127, %v3185
  %v3435 = vmul.f32 %v1000, %v3084
  %v3436 = vmul.f32 %v1128, %v3186
  %v3437 = vmul.f32 %v1001, %v3187
  %v3438 = vmul.f32 %v1129, %v3188
  %v3439 = vmul.f32 %v1002, %v3088
  %v3440 = vmul.f32 %v1130, %v3189
  %v3441 = vmul.f32 %v1003, %v3190
  %v3442 = vmul.f32 %v1131, %v3191
  %v3443 = vmul.f32 %v1004, %v3092
  %v3444 = vmul.f32 %v1132, %v3192
  %v3445 = vmul.f32 %v1005, %v3193
  %v3446 = vmul.f32 %v1133, %v3194
  %v3447 = vmul.f32 %v1006, %v3096
  %v3448 = vmul.f32 %v1134, %v3195
  %v3449 = vmul.f32 %v1007, %v3196
  %v3450 = vmul.f32 %v1135, %v3197
  %v3451 = vmul.f32 %v1008, %v3100
  %v3452 = vmul.f32 %v1136, %v3198
  %v3453 = vmul.f32 %v1009, %v3199
  %v3454 = vmul.f32 %v1137, %v3200
  %v3455 = vmul.f32 %v1010, %v3104
  %v3456 = vmul.f32 %v1138, %v3201
  %v3457 = vmul.f32 %v1011, %v3202
  %v3458 = vmul.f32 %v1139, %v3203
  %v3459 = vmul.f32 %v1012, %v3108
  %v3460 = vmul.f32 %v1140, %v3204
  %v3589 = vrot.slane %v3333, 6
  %v3590 = vrot.slane %v3589, 4
  %v3591 = vrot.slane %v3334, 6
  %v3592 = vrot.slane %v3591, 4
  %v3593 = vrot.slane %v3335, 6
  %v3594 = vrot.slane %v3593, 4
  %v3595 = vrot.slane %v3336, 6
  %v3596 = vrot.slane %v3595, 4
  %v3597 = vrot.slane %v3337, 6
  %v3598 = vrot.slane %v3597, 4
  %v3599 = vrot.slane %v3338, 6
  %v3600 = vrot.slane %v3599, 4
  %v3601 = vrot.slane %v3339, 6
  %v3602 = vrot.slane %v3601, 4
  %v3603 = vrot.slane %v3340, 6
  %v3604 = vrot.slane %v3603, 4
  %v3605 = vrot.slane %v3341, 6
  %v3606 = vrot.slane %v3605, 4
  %v3607 = vrot.slane %v3342, 6
  %v3608 = vrot.slane %v3607, 4
  %v3609 = vrot.slane %v3343, 6
  %v3610 = vrot.slane %v3609, 4
  %v3611 = vrot.slane %v3344, 6
  %v3612 = vrot.slane %v3611, 4
  %v3613 = vrot.slane %v3345, 6
  %v3614 = vrot.slane %v3613, 4
  %v3615 = vrot.slane %v3346, 6
  %v3616 = vrot.slane %v3615, 4
  %v3617 = vrot.slane %v3347, 6
  %v3618 = vrot.slane %v3617, 4
  %v3619 = vrot.slane %v3348, 6
  %v3620 = vrot.slane %v3619, 4
  %v3621 = vrot.slane %v3349, 6
  %v3622 = vrot.slane %v3621, 4
  %v3623 = vrot.slane %v3350, 6
  %v3624 = vrot.slane %v3623, 4
  %v3625 = vrot.slane %v3351, 6
  %v3626 = vrot.slane %v3625, 4
  %v3627 = vrot.slane %v3352, 6
  %v3628 = vrot.slane %v3627, 4
  %v3629 = vrot.slane %v3353, 6
  %v3630 = vrot.slane %v3629, 4
  %v3631 = vrot.slane %v3354, 6
  %v3632 = vrot.slane %v3631, 4
  %v3633 = vrot.slane %v3355, 6
  %v3634 = vrot.slane %v3633, 4
  %v3635 = vrot.slane %v3356, 6
  %v3636 = vrot.slane %v3635, 4
  %v3637 = vrot.slane %v3357, 6
  %v3638 = vrot.slane %v3637, 4
  %v3639 = vrot.slane %v3358, 6
  %v3640 = vrot.slane %v3639, 4
  %v3641 = vrot.slane %v3359, 6
  %v3642 = vrot.slane %v3641, 4
  %v3643 = vrot.slane %v3360, 6
  %v3644 = vrot.slane %v3643, 4
  %v3645 = vrot.slane %v3361, 6
  %v3646 = vrot.slane %v3645, 4
  %v3647 = vrot.slane %v3362, 6
  %v3648 = vrot.slane %v3647, 4
  %v3649 = vrot.slane %v3363, 6
  %v3650 = vrot.slane %v3649, 4
  %v3651 = vrot.slane %v3364, 6
  %v3652 = vrot.slane %v3651, 4
  %v3653 = vrot.slane %v3365, 6
  %v3654 = vrot.slane %v3653, 4
  %v3655 = vrot.slane %v3366, 6
  %v3656 = vrot.slane %v3655, 4
  %v3657 = vrot.slane %v3367, 6
  %v3658 = vrot.slane %v3657, 4
  %v3659 = vrot.slane %v3368, 6
  %v3660 = vrot.slane %v3659, 4
  %v3661 = vrot.slane %v3369, 6
  %v3662 = vrot.slane %v3661, 4
  %v3663 = vrot.slane %v3370, 6
  %v3664 = vrot.slane %v3663, 4
  %v3665 = vrot.slane %v3371, 6
  %v3666 = vrot.slane %v3665, 4
  %v3667 = vrot.slane %v3372, 6
  %v3668 = vrot.slane %v3667, 4
  %v3669 = vrot.slane %v3373, 6
  %v3670 = vrot.slane %v3669, 4
  %v3671 = vrot.slane %v3374, 6
  %v3672 = vrot.slane %v3671, 4
  %v3673 = vrot.slane %v3375, 6
  %v3674 = vrot.slane %v3673, 4
  %v3675 = vrot.slane %v3376, 6
  %v3676 = vrot.slane %v3675, 4
  %v3677 = vrot.slane %v3377, 6
  %v3678 = vrot.slane %v3677, 4
  %v3679 = vrot.slane %v3378, 6
  %v3680 = vrot.slane %v3679, 4
  %v3681 = vrot.slane %v3379, 6
  %v3682 = vrot.slane %v3681, 4
  %v3683 = vrot.slane %v3380, 6
  %v3684 = vrot.slane %v3683, 4
  %v3685 = vrot.slane %v3381, 6
  %v3686 = vrot.slane %v3685, 4
  %v3687 = vrot.slane %v3382, 6
  %v3688 = vrot.slane %v3687, 4
  %v3689 = vrot.slane %v3383, 6
  %v3690 = vrot.slane %v3689, 4
  %v3691 = vrot.slane %v3384, 6
  %v3692 = vrot.slane %v3691, 4
  %v3693 = vrot.slane %v3385, 6
  %v3694 = vrot.slane %v3693, 4
  %v3695 = vrot.slane %v3386, 6
  %v3696 = vrot.slane %v3695, 4
  %v3697 = vrot.slane %v3387, 6
  %v3698 = vrot.slane %v3697, 4
  %v3699 = vrot.slane %v3388, 6
  %v3700 = vrot.slane %v3699, 4
  %v3701 = vrot.slane %v3389, 6
  %v3702 = vrot.slane %v3701, 4
  %v3703 = vrot.slane %v3390, 6
  %v3704 = vrot.slane %v3703, 4
  %v3705 = vrot.slane %v3391, 6
  %v3706 = vrot.slane %v3705, 4
  %v3707 = vrot.slane %v3392, 6
  %v3708 = vrot.slane %v3707, 4
  %v3709 = vrot.slane %v3393, 6
  %v3710 = vrot.slane %v3709, 4
  %v3711 = vrot.slane %v3394, 6
  %v3712 = vrot.slane %v3711, 4
  %v3713 = vrot.slane %v3395, 6
  %v3714 = vrot.slane %v3713, 4
  %v3715 = vrot.slane %v3396, 6
  %v3716 = vrot.slane %v3715, 4
  %v3717 = vrot.slane %v3397, 6
  %v3718 = vrot.slane %v3717, 4
  %v3719 = vrot.slane %v3398, 6
  %v3720 = vrot.slane %v3719, 4
  %v3721 = vrot.slane %v3399, 6
  %v3722 = vrot.slane %v3721, 4
  %v3723 = vrot.slane %v3400, 6
  %v3724 = vrot.slane %v3723, 4
  %v3725 = vrot.slane %v3401, 6
  %v3726 = vrot.slane %v3725, 4
  %v3727 = vrot.slane %v3402, 6
  %v3728 = vrot.slane %v3727, 4
  %v3729 = vrot.slane %v3403, 6
  %v3730 = vrot.slane %v3729, 4
  %v3731 = vrot.slane %v3404, 6
  %v3732 = vrot.slane %v3731, 4
  %v3733 = vrot.slane %v3405, 6
  %v3734 = vrot.slane %v3733, 4
  %v3735 = vrot.slane %v3406, 6
  %v3736 = vrot.slane %v3735, 4
  %v3737 = vrot.slane %v3407, 6
  %v3738 = vrot.slane %v3737, 4
  %v3739 = vrot.slane %v3408, 6
  %v3740 = vrot.slane %v3739, 4
  %v3741 = vrot.slane %v3409, 6
  %v3742 = vrot.slane %v3741, 4
  %v3743 = vrot.slane %v3410, 6
  %v3744 = vrot.slane %v3743, 4
  %v3745 = vrot.slane %v3411, 6
  %v3746 = vrot.slane %v3745, 4
  %v3747 = vrot.slane %v3412, 6
  %v3748 = vrot.slane %v3747, 4
  %v3749 = vrot.slane %v3413, 6
  %v3750 = vrot.slane %v3749, 4
  %v3751 = vrot.slane %v3414, 6
  %v3752 = vrot.slane %v3751, 4
  %v3753 = vrot.slane %v3415, 6
  %v3754 = vrot.slane %v3753, 4
  %v3755 = vrot.slane %v3416, 6
  %v3756 = vrot.slane %v3755, 4
  %v3757 = vrot.slane %v3417, 6
  %v3758 = vrot.slane %v3757, 4
  %v3759 = vrot.slane %v3418, 6
  %v3760 = vrot.slane %v3759, 4
  %v3761 = vrot.slane %v3419, 6
  %v3762 = vrot.slane %v3761, 4
  %v3763 = vrot.slane %v3420, 6
  %v3764 = vrot.slane %v3763, 4
  %v3765 = vrot.slane %v3421, 6
  %v3766 = vrot.slane %v3765, 4
  %v3767 = vrot.slane %v3422, 6
  %v3768 = vrot.slane %v3767, 4
  %v3769 = vrot.slane %v3423, 6
  %v3770 = vrot.slane %v3769, 4
  %v3771 = vrot.slane %v3424, 6
  %v3772 = vrot.slane %v3771, 4
  %v3773 = vrot.slane %v3425, 6
  %v3774 = vrot.slane %v3773, 4
  %v3775 = vrot.slane %v3426, 6
  %v3776 = vrot.slane %v3775, 4
  %v3777 = vrot.slane %v3427, 6
  %v3778 = vrot.slane %v3777, 4
  %v3779 = vrot.slane %v3428, 6
  %v3780 = vrot.slane %v3779, 4
  %v3781 = vrot.slane %v3429, 6
  %v3782 = vrot.slane %v3781, 4
  %v3783 = vrot.slane %v3430, 6
  %v3784 = vrot.slane %v3783, 4
  %v3785 = vrot.slane %v3431, 6
  %v3786 = vrot.slane %v3785, 4
  %v3787 = vrot.slane %v3432, 6
  %v3788 = vrot.slane %v3787, 4
  %v3789 = vrot.slane %v3433, 6
  %v3790 = vrot.slane %v3789, 4
  %v3791 = vrot.slane %v3434, 6
  %v3792 = vrot.slane %v3791, 4
  %v3793 = vrot.slane %v3435, 6
  %v3794 = vrot.slane %v3793, 4
  %v3795 = vrot.slane %v3436, 6
  %v3796 = vrot.slane %v3795, 4
  %v3797 = vrot.slane %v3437, 6
  %v3798 = vrot.slane %v3797, 4
  %v3799 = vrot.slane %v3438, 6
  %v3800 = vrot.slane %v3799, 4
  %v3801 = vrot.slane %v3439, 6
  %v3802 = vrot.slane %v3801, 4
  %v3803 = vrot.slane %v3440, 6
  %v3804 = vrot.slane %v3803, 4
  %v3805 = vrot.slane %v3441, 6
  %v3806 = vrot.slane %v3805, 4
  %v3807 = vrot.slane %v3442, 6
  %v3808 = vrot.slane %v3807, 4
  %v3809 = vrot.slane %v3443, 6
  %v3810 = vrot.slane %v3809, 4
  %v3811 = vrot.slane %v3444, 6
  %v3812 = vrot.slane %v3811, 4
  %v3813 = vrot.slane %v3445, 6
  %v3814 = vrot.slane %v3813, 4
  %v3815 = vrot.slane %v3446, 6
  %v3816 = vrot.slane %v3815, 4
  %v3817 = vrot.slane %v3447, 6
  %v3818 = vrot.slane %v3817, 4
  %v3819 = vrot.slane %v3448, 6
  %v3820 = vrot.slane %v3819, 4
  %v3821 = vrot.slane %v3449, 6
  %v3822 = vrot.slane %v3821, 4
  %v3823 = vrot.slane %v3450, 6
  %v3824 = vrot.slane %v3823, 4
  %v3825 = vrot.slane %v3451, 6
  %v3826 = vrot.slane %v3825, 4
  %v3827 = vrot.slane %v3452, 6
  %v3828 = vrot.slane %v3827, 4
  %v3829 = vrot.slane %v3453, 6
  %v3830 = vrot.slane %v3829, 4
  %v3831 = vrot.slane %v3454, 6
  %v3832 = vrot.slane %v3831, 4
  %v3833 = vrot.slane %v3455, 6
  %v3834 = vrot.slane %v3833, 4
  %v3835 = vrot.slane %v3456, 6
  %v3836 = vrot.slane %v3835, 4
  %v3837 = vrot.slane %v3457, 6
  %v3838 = vrot.slane %v3837, 4
  %v3839 = vrot.slane %v3458, 6
  %v3840 = vrot.slane %v3839, 4
  %v3841 = vrot.slane %v3459, 6
  %v3842 = vrot.slane %v3841, 4
  %v3843 = vrot.slane %v3460, 6
  %v3844 = vrot.slane %v3843, 4
  %v3973 = vadd.f32 %v2805, %v3590
  %v3974 = vadd.f32 %v2806, %v3592
  %v3975 = vadd.f32 %v2807, %v3594
  %v3976 = vadd.f32 %v2808, %v3596
  %v3977 = vadd.f32 %v2809, %v3598
  %v3978 = vadd.f32 %v2810, %v3600
  %v3979 = vadd.f32 %v2811, %v3602
  %v3980 = vadd.f32 %v2812, %v3604
  %v3981 = vadd.f32 %v2813, %v3606
  %v3982 = vadd.f32 %v2814, %v3608
  %v3983 = vadd.f32 %v2815, %v3610
  %v3984 = vadd.f32 %v2816, %v3612
  %v3985 = vadd.f32 %v2817, %v3614
  %v3986 = vadd.f32 %v2818, %v3616
  %v3987 = vadd.f32 %v2819, %v3618
  %v3988 = vadd.f32 %v2820, %v3620
  %v3989 = vadd.f32 %v2821, %v3622
  %v3990 = vadd.f32 %v2822, %v3624
  %v3991 = vadd.f32 %v2823, %v3626
  %v3992 = vadd.f32 %v2824, %v3628
  %v3993 = vadd.f32 %v2825, %v3630
  %v3994 = vadd.f32 %v2826, %v3632
  %v3995 = vadd.f32 %v2827, %v3634
  %v3996 = vadd.f32 %v2828, %v3636
  %v3997 = vadd.f32 %v2829, %v3638
  %v3998 = vadd.f32 %v2830, %v3640
  %v3999 = vadd.f32 %v2831, %v3642
  %v4000 = vadd.f32 %v2832, %v3644
  %v4001 = vadd.f32 %v2833, %v3646
  %v4002 = vadd.f32 %v2834, %v3648
  %v4003 = vadd.f32 %v2835, %v3650
  %v4004 = vadd.f32 %v2836, %v3652
  %v4005 = vadd.f32 %v2837, %v3654
  %v4006 = vadd.f32 %v2838, %v3656
  %v4007 = vadd.f32 %v2839, %v3658
  %v4008 = vadd.f32 %v2840, %v3660
  %v4009 = vadd.f32 %v2841, %v3662
  %v4010 = vadd.f32 %v2842, %v3664
  %v4011 = vadd.f32 %v2843, %v3666
  %v4012 = vadd.f32 %v2844, %v3668
  %v4013 = vadd.f32 %v2845, %v3670
  %v4014 = vadd.f32 %v2846, %v3672
  %v4015 = vadd.f32 %v2847, %v3674
  %v4016 = vadd.f32 %v2848, %v3676
  %v4017 = vadd.f32 %v2849, %v3678
  %v4018 = vadd.f32 %v2850, %v3680
  %v4019 = vadd.f32 %v2851, %v3682
  %v4020 = vadd.f32 %v2852, %v3684
  %v4021 = vadd.f32 %v2853, %v3686
  %v4022 = vadd.f32 %v2854, %v3688
  %v4023 = vadd.f32 %v2855, %v3690
  %v4024 = vadd.f32 %v2856, %v3692
  %v4025 = vadd.f32 %v2857, %v3694
  %v4026 = vadd.f32 %v2858, %v3696
  %v4027 = vadd.f32 %v2859, %v3698
  %v4028 = vadd.f32 %v2860, %v3700
  %v4029 = vadd.f32 %v2861, %v3702
  %v4030 = vadd.f32 %v2862, %v3704
  %v4031 = vadd.f32 %v2863, %v3706
  %v4032 = vadd.f32 %v2864, %v3708
  %v4033 = vadd.f32 %v2865, %v3710
  %v4034 = vadd.f32 %v2866, %v3712
  %v4035 = vadd.f32 %v2867, %v3714
  %v4036 = vadd.f32 %v2868, %v3716
  %v4037 = vadd.f32 %v2869, %v3718
  %v4038 = vadd.f32 %v2870, %v3720
  %v4039 = vadd.f32 %v2871, %v3722
  %v4040 = vadd.f32 %v2872, %v3724
  %v4041 = vadd.f32 %v2873, %v3726
  %v4042 = vadd.f32 %v2874, %v3728
  %v4043 = vadd.f32 %v2875, %v3730
  %v4044 = vadd.f32 %v2876, %v3732
  %v4045 = vadd.f32 %v2877, %v3734
  %v4046 = vadd.f32 %v2878, %v3736
  %v4047 = vadd.f32 %v2879, %v3738
  %v4048 = vadd.f32 %v2880, %v3740
  %v4049 = vadd.f32 %v2881, %v3742
  %v4050 = vadd.f32 %v2882, %v3744
  %v4051 = vadd.f32 %v2883, %v3746
  %v4052 = vadd.f32 %v2884, %v3748
  %v4053 = vadd.f32 %v2885, %v3750
  %v4054 = vadd.f32 %v2886, %v3752
  %v4055 = vadd.f32 %v2887, %v3754
  %v4056 = vadd.f32 %v2888, %v3756
  %v4057 = vadd.f32 %v2889, %v3758
  %v4058 = vadd.f32 %v2890, %v3760
  %v4059 = vadd.f32 %v2891, %v3762
  %v4060 = vadd.f32 %v2892, %v3764
  %v4061 = vadd.f32 %v2893, %v3766
  %v4062 = vadd.f32 %v2894, %v3768
  %v4063 = vadd.f32 %v2895, %v3770
  %v4064 = vadd.f32 %v2896, %v3772
  %v4065 = vadd.f32 %v2897, %v3774
  %v4066 = vadd.f32 %v2898, %v3776
  %v4067 = vadd.f32 %v2899, %v3778
  %v4068 = vadd.f32 %v2900, %v3780
  %v4069 = vadd.f32 %v2901, %v3782
  %v4070 = vadd.f32 %v2902, %v3784
  %v4071 = vadd.f32 %v2903, %v3786
  %v4072 = vadd.f32 %v2904, %v3788
  %v4073 = vadd.f32 %v2905, %v3790
  %v4074 = vadd.f32 %v2906, %v3792
  %v4075 = vadd.f32 %v2907, %v3794
  %v4076 = vadd.f32 %v2908, %v3796
  %v4077 = vadd.f32 %v2909, %v3798
  %v4078 = vadd.f32 %v2910, %v3800
  %v4079 = vadd.f32 %v2911, %v3802
  %v4080 = vadd.f32 %v2912, %v3804
  %v4081 = vadd.f32 %v2913, %v3806
  %v4082 = vadd.f32 %v2914, %v3808
  %v4083 = vadd.f32 %v2915, %v3810
  %v4084 = vadd.f32 %v2916, %v3812
  %v4085 = vadd.f32 %v2917, %v3814
  %v4086 = vadd.f32 %v2918, %v3816
  %v4087 = vadd.f32 %v2919, %v3818
  %v4088 = vadd.f32 %v2920, %v3820
  %v4089 = vadd.f32 %v2921, %v3822
  %v4090 = vadd.f32 %v2922, %v3824
  %v4091 = vadd.f32 %v2923, %v3826
  %v4092 = vadd.f32 %v2924, %v3828
  %v4093 = vadd.f32 %v2925, %v3830
  %v4094 = vadd.f32 %v2926, %v3832
  %v4095 = vadd.f32 %v2927, %v3834
  %v4096 = vadd.f32 %v2928, %v3836
  %v4097 = vadd.f32 %v2929, %v3838
  %v4098 = vadd.f32 %v2930, %v3840
  %v4099 = vadd.f32 %v2931, %v3842
  %v4100 = vadd.f32 %v2932, %v3844
  %4101 = vset.pattern.permute.xlu0 3
  %4102 = vperm.xlu0 %4101, %v1205
  %v4103 = vpop.permute.xlu0 %4102
  %4104 = vset.pattern.permute.xlu0 3
  %4105 = vperm.xlu0 %4104, %v1206
  %v4106 = vpop.permute.xlu0 %4105
  %4107 = vset.pattern.permute.xlu0 3
  %4108 = vperm.xlu0 %4107, %v1207
  %v4109 = vpop.permute.xlu0 %4108
  %4110 = vset.pattern.permute.xlu0 3
  %4111 = vperm.xlu0 %4110, %v1208
  %v4112 = vpop.permute.xlu0 %4111
  %4113 = vset.pattern.permute.xlu0 3
  %4114 = vperm.xlu0 %4113, %v1209
  %v4115 = vpop.permute.xlu0 %4114
  %4116 = vset.pattern.permute.xlu0 3
  %4117 = vperm.xlu0 %4116, %v1210
  %v4118 = vpop.permute.xlu0 %4117
  %4119 = vset.pattern.permute.xlu0 3
  %4120 = vperm.xlu0 %4119, %v1211
  %v4121 = vpop.permute.xlu0 %4120
  %4122 = vset.pattern.permute.xlu0 3
  %4123 = vperm.xlu0 %4122, %v1212
  %v4124 = vpop.permute.xlu0 %4123
  %4125 = vset.pattern.permute.xlu0 3
  %4126 = vperm.xlu0 %4125, %v1213
  %v4127 = vpop.permute.xlu0 %4126
  %4128 = vset.pattern.permute.xlu0 3
  %4129 = vperm.xlu0 %4128, %v1214
  %v4130 = vpop.permute.xlu0 %4129
  %4131 = vset.pattern.permute.xlu0 3
  %4132 = vperm.xlu0 %4131, %v1215
  %v4133 = vpop.permute.xlu0 %4132
  %4134 = vset.pattern.permute.xlu0 3
  %4135 = vperm.xlu0 %4134, %v1216
  %v4136 = vpop.permute.xlu0 %4135
  %4137 = vset.pattern.permute.xlu0 3
  %4138 = vperm.xlu0 %4137, %v1217
  %v4139 = vpop.permute.xlu0 %4138
  %4140 = vset.pattern.permute.xlu0 3
  %4141 = vperm.xlu0 %4140, %v1218
  %v4142 = vpop.permute.xlu0 %4141
  %4143 = vset.pattern.permute.xlu0 3
  %4144 = vperm.xlu0 %4143, %v1219
  %v4145 = vpop.permute.xlu0 %4144
  %4146 = vset.pattern.permute.xlu0 3
  %4147 = vperm.xlu0 %4146, %v1220
  %v4148 = vpop.permute.xlu0 %4147
  %v4150 = vunpack.c.l.s4 839922192
  %v4151 = vunpack.c.0.s8 %v4150
  %v4152 = vperm.slane %v4103, %v4151
  %v4154 = vunpack.c.l.s4 1985246804
  %v4155 = vunpack.c.0.s8 %v4154
  %v4156 = vperm.slane %v4103, %v4155
  %v4158 = vunpack.c.l.s4 839922192
  %v4159 = vunpack.c.0.s8 %v4158
  %v4160 = vperm.slane %v4106, %v4159
  %v4162 = vunpack.c.l.s4 1985246804
  %v4163 = vunpack.c.0.s8 %v4162
  %v4164 = vperm.slane %v4106, %v4163
  %v4166 = vunpack.c.l.s4 839922192
  %v4167 = vunpack.c.0.s8 %v4166
  %v4168 = vperm.slane %v4109, %v4167
  %v4170 = vunpack.c.l.s4 1985246804
  %v4171 = vunpack.c.0.s8 %v4170
  %v4172 = vperm.slane %v4109, %v4171
  %v4174 = vunpack.c.l.s4 839922192
  %v4175 = vunpack.c.0.s8 %v4174
  %v4176 = vperm.slane %v4112, %v4175
  %v4178 = vunpack.c.l.s4 1985246804
  %v4179 = vunpack.c.0.s8 %v4178
  %v4180 = vperm.slane %v4112, %v4179
  %v4182 = vunpack.c.l.s4 839922192
  %v4183 = vunpack.c.0.s8 %v4182
  %v4184 = vperm.slane %v4115, %v4183
  %v4186 = vunpack.c.l.s4 1985246804
  %v4187 = vunpack.c.0.s8 %v4186
  %v4188 = vperm.slane %v4115, %v4187
  %v4190 = vunpack.c.l.s4 839922192
  %v4191 = vunpack.c.0.s8 %v4190
  %v4192 = vperm.slane %v4118, %v4191
  %v4194 = vunpack.c.l.s4 1985246804
  %v4195 = vunpack.c.0.s8 %v4194
  %v4196 = vperm.slane %v4118, %v4195
  %v4198 = vunpack.c.l.s4 839922192
  %v4199 = vunpack.c.0.s8 %v4198
  %v4200 = vperm.slane %v4121, %v4199
  %v4202 = vunpack.c.l.s4 1985246804
  %v4203 = vunpack.c.0.s8 %v4202
  %v4204 = vperm.slane %v4121, %v4203
  %v4206 = vunpack.c.l.s4 839922192
  %v4207 = vunpack.c.0.s8 %v4206
  %v4208 = vperm.slane %v4124, %v4207
  %v4210 = vunpack.c.l.s4 1985246804
  %v4211 = vunpack.c.0.s8 %v4210
  %v4212 = vperm.slane %v4124, %v4211
  %v4214 = vunpack.c.l.s4 839922192
  %v4215 = vunpack.c.0.s8 %v4214
  %v4216 = vperm.slane %v4127, %v4215
  %v4218 = vunpack.c.l.s4 1985246804
  %v4219 = vunpack.c.0.s8 %v4218
  %v4220 = vperm.slane %v4127, %v4219
  %v4222 = vunpack.c.l.s4 839922192
  %v4223 = vunpack.c.0.s8 %v4222
  %v4224 = vperm.slane %v4130, %v4223
  %v4226 = vunpack.c.l.s4 1985246804
  %v4227 = vunpack.c.0.s8 %v4226
  %v4228 = vperm.slane %v4130, %v4227
  %v4230 = vunpack.c.l.s4 839922192
  %v4231 = vunpack.c.0.s8 %v4230
  %v4232 = vperm.slane %v4133, %v4231
  %v4234 = vunpack.c.l.s4 1985246804
  %v4235 = vunpack.c.0.s8 %v4234
  %v4236 = vperm.slane %v4133, %v4235
  %v4238 = vunpack.c.l.s4 839922192
  %v4239 = vunpack.c.0.s8 %v4238
  %v4240 = vperm.slane %v4136, %v4239
  %v4242 = vunpack.c.l.s4 1985246804
  %v4243 = vunpack.c.0.s8 %v4242
  %v4244 = vperm.slane %v4136, %v4243
  %v4246 = vunpack.c.l.s4 839922192
  %v4247 = vunpack.c.0.s8 %v4246
  %v4248 = vperm.slane %v4139, %v4247
  %v4250 = vunpack.c.l.s4 1985246804
  %v4251 = vunpack.c.0.s8 %v4250
  %v4252 = vperm.slane %v4139, %v4251
  %v4254 = vunpack.c.l.s4 839922192
  %v4255 = vunpack.c.0.s8 %v4254
  %v4256 = vperm.slane %v4142, %v4255
  %v4258 = vunpack.c.l.s4 1985246804
  %v4259 = vunpack.c.0.s8 %v4258
  %v4260 = vperm.slane %v4142, %v4259
  %v4262 = vunpack.c.l.s4 839922192
  %v4263 = vunpack.c.0.s8 %v4262
  %v4264 = vperm.slane %v4145, %v4263
  %v4266 = vunpack.c.l.s4 1985246804
  %v4267 = vunpack.c.0.s8 %v4266
  %v4268 = vperm.slane %v4145, %v4267
  %v4270 = vunpack.c.l.s4 839922192
  %v4271 = vunpack.c.0.s8 %v4270
  %v4272 = vperm.slane %v4148, %v4271
  %v4274 = vunpack.c.l.s4 1985246804
  %v4275 = vunpack.c.0.s8 %v4274
  %v4276 = vperm.slane %v4148, %v4275
  %v4277 = vrot.slane %v4152, 5
  %v4278 = vrot.slane %v4152, 6
  %v4279 = vrot.slane %v4152, 7
  %v4280 = vrot.slane %v4156, 5
  %v4281 = vrot.slane %v4156, 6
  %v4282 = vrot.slane %v4156, 7
  %v4283 = vrot.slane %v4160, 5
  %v4284 = vrot.slane %v4160, 6
  %v4285 = vrot.slane %v4160, 7
  %v4286 = vrot.slane %v4164, 5
  %v4287 = vrot.slane %v4164, 6
  %v4288 = vrot.slane %v4164, 7
  %v4289 = vrot.slane %v4168, 5
  %v4290 = vrot.slane %v4168, 6
  %v4291 = vrot.slane %v4168, 7
  %v4292 = vrot.slane %v4172, 5
  %v4293 = vrot.slane %v4172, 6
  %v4294 = vrot.slane %v4172, 7
  %v4295 = vrot.slane %v4176, 5
  %v4296 = vrot.slane %v4176, 6
  %v4297 = vrot.slane %v4176, 7
  %v4298 = vrot.slane %v4180, 5
  %v4299 = vrot.slane %v4180, 6
  %v4300 = vrot.slane %v4180, 7
  %v4301 = vrot.slane %v4184, 5
  %v4302 = vrot.slane %v4184, 6
  %v4303 = vrot.slane %v4184, 7
  %v4304 = vrot.slane %v4188, 5
  %v4305 = vrot.slane %v4188, 6
  %v4306 = vrot.slane %v4188, 7
  %v4307 = vrot.slane %v4192, 5
  %v4308 = vrot.slane %v4192, 6
  %v4309 = vrot.slane %v4192, 7
  %v4310 = vrot.slane %v4196, 5
  %v4311 = vrot.slane %v4196, 6
  %v4312 = vrot.slane %v4196, 7
  %v4313 = vrot.slane %v4200, 5
  %v4314 = vrot.slane %v4200, 6
  %v4315 = vrot.slane %v4200, 7
  %v4316 = vrot.slane %v4204, 5
  %v4317 = vrot.slane %v4204, 6
  %v4318 = vrot.slane %v4204, 7
  %v4319 = vrot.slane %v4208, 5
  %v4320 = vrot.slane %v4208, 6
  %v4321 = vrot.slane %v4208, 7
  %v4322 = vrot.slane %v4212, 5
  %v4323 = vrot.slane %v4212, 6
  %v4324 = vrot.slane %v4212, 7
  %v4325 = vrot.slane %v4216, 5
  %v4326 = vrot.slane %v4216, 6
  %v4327 = vrot.slane %v4216, 7
  %v4328 = vrot.slane %v4220, 5
  %v4329 = vrot.slane %v4220, 6
  %v4330 = vrot.slane %v4220, 7
  %v4331 = vrot.slane %v4224, 5
  %v4332 = vrot.slane %v4224, 6
  %v4333 = vrot.slane %v4224, 7
  %v4334 = vrot.slane %v4228, 5
  %v4335 = vrot.slane %v4228, 6
  %v4336 = vrot.slane %v4228, 7
  %v4337 = vrot.slane %v4232, 5
  %v4338 = vrot.slane %v4232, 6
  %v4339 = vrot.slane %v4232, 7
  %v4340 = vrot.slane %v4236, 5
  %v4341 = vrot.slane %v4236, 6
  %v4342 = vrot.slane %v4236, 7
  %v4343 = vrot.slane %v4240, 5
  %v4344 = vrot.slane %v4240, 6
  %v4345 = vrot.slane %v4240, 7
  %v4346 = vrot.slane %v4244, 5
  %v4347 = vrot.slane %v4244, 6
  %v4348 = vrot.slane %v4244, 7
  %v4349 = vrot.slane %v4248, 5
  %v4350 = vrot.slane %v4248, 6
  %v4351 = vrot.slane %v4248, 7
  %v4352 = vrot.slane %v4252, 5
  %v4353 = vrot.slane %v4252, 6
  %v4354 = vrot.slane %v4252, 7
  %v4355 = vrot.slane %v4256, 5
  %v4356 = vrot.slane %v4256, 6
  %v4357 = vrot.slane %v4256, 7
  %v4358 = vrot.slane %v4260, 5
  %v4359 = vrot.slane %v4260, 6
  %v4360 = vrot.slane %v4260, 7
  %v4361 = vrot.slane %v4264, 5
  %v4362 = vrot.slane %v4264, 6
  %v4363 = vrot.slane %v4264, 7
  %v4364 = vrot.slane %v4268, 5
  %v4365 = vrot.slane %v4268, 6
  %v4366 = vrot.slane %v4268, 7
  %v4367 = vrot.slane %v4272, 5
  %v4368 = vrot.slane %v4272, 6
  %v4369 = vrot.slane %v4272, 7
  %v4370 = vrot.slane %v4276, 5
  %v4371 = vrot.slane %v4276, 6
  %v4372 = vrot.slane %v4276, 7
  %v4501 = vmul.f32 %v949, %v4277
  %v4502 = vmul.f32 %v1077, %v4278
  %v4503 = vmul.f32 %v950, %v4279
  %v4504 = vmul.f32 %v1078, %v4152
  %v4505 = vmul.f32 %v951, %v4280
  %v4506 = vmul.f32 %v1079, %v4281
  %v4507 = vmul.f32 %v952, %v4282
  %v4508 = vmul.f32 %v1080, %v4156
  %v4509 = vmul.f32 %v953, %v4283
  %v4510 = vmul.f32 %v1081, %v4284
  %v4511 = vmul.f32 %v954, %v4285
  %v4512 = vmul.f32 %v1082, %v4160
  %v4513 = vmul.f32 %v955, %v4286
  %v4514 = vmul.f32 %v1083, %v4287
  %v4515 = vmul.f32 %v956, %v4288
  %v4516 = vmul.f32 %v1084, %v4164
  %v4517 = vmul.f32 %v957, %v4289
  %v4518 = vmul.f32 %v1085, %v4290
  %v4519 = vmul.f32 %v958, %v4291
  %v4520 = vmul.f32 %v1086, %v4168
  %v4521 = vmul.f32 %v959, %v4292
  %v4522 = vmul.f32 %v1087, %v4293
  %v4523 = vmul.f32 %v960, %v4294
  %v4524 = vmul.f32 %v1088, %v4172
  %v4525 = vmul.f32 %v961, %v4295
  %v4526 = vmul.f32 %v1089, %v4296
  %v4527 = vmul.f32 %v962, %v4297
  %v4528 = vmul.f32 %v1090, %v4176
  %v4529 = vmul.f32 %v963, %v4298
  %v4530 = vmul.f32 %v1091, %v4299
  %v4531 = vmul.f32 %v964, %v4300
  %v4532 = vmul.f32 %v1092, %v4180
  %v4533 = vmul.f32 %v965, %v4301
  %v4534 = vmul.f32 %v1093, %v4302
  %v4535 = vmul.f32 %v966, %v4303
  %v4536 = vmul.f32 %v1094, %v4184
  %v4537 = vmul.f32 %v967, %v4304
  %v4538 = vmul.f32 %v1095, %v4305
  %v4539 = vmul.f32 %v968, %v4306
  %v4540 = vmul.f32 %v1096, %v4188
  %v4541 = vmul.f32 %v969, %v4307
  %v4542 = vmul.f32 %v1097, %v4308
  %v4543 = vmul.f32 %v970, %v4309
  %v4544 = vmul.f32 %v1098, %v4192
  %v4545 = vmul.f32 %v971, %v4310
  %v4546 = vmul.f32 %v1099, %v4311
  %v4547 = vmul.f32 %v972, %v4312
  %v4548 = vmul.f32 %v1100, %v4196
  %v4549 = vmul.f32 %v973, %v4313
  %v4550 = vmul.f32 %v1101, %v4314
  %v4551 = vmul.f32 %v974, %v4315
  %v4552 = vmul.f32 %v1102, %v4200
  %v4553 = vmul.f32 %v975, %v4316
  %v4554 = vmul.f32 %v1103, %v4317
  %v4555 = vmul.f32 %v976, %v4318
  %v4556 = vmul.f32 %v1104, %v4204
  %v4557 = vmul.f32 %v977, %v4319
  %v4558 = vmul.f32 %v1105, %v4320
  %v4559 = vmul.f32 %v978, %v4321
  %v4560 = vmul.f32 %v1106, %v4208
  %v4561 = vmul.f32 %v979, %v4322
  %v4562 = vmul.f32 %v1107, %v4323
  %v4563 = vmul.f32 %v980, %v4324
  %v4564 = vmul.f32 %v1108, %v4212
  %v4565 = vmul.f32 %v981, %v4325
  %v4566 = vmul.f32 %v1109, %v4326
  %v4567 = vmul.f32 %v982, %v4327
  %v4568 = vmul.f32 %v1110, %v4216
  %v4569 = vmul.f32 %v983, %v4328
  %v4570 = vmul.f32 %v1111, %v4329
  %v4571 = vmul.f32 %v984, %v4330
  %v4572 = vmul.f32 %v1112, %v4220
  %v4573 = vmul.f32 %v985, %v4331
  %v4574 = vmul.f32 %v1113, %v4332
  %v4575 = vmul.f32 %v986, %v4333
  %v4576 = vmul.f32 %v1114, %v4224
  %v4577 = vmul.f32 %v987, %v4334
  %v4578 = vmul.f32 %v1115, %v4335
  %v4579 = vmul.f32 %v988, %v4336
  %v4580 = vmul.f32 %v1116, %v4228
  %v4581 = vmul.f32 %v989, %v4337
  %v4582 = vmul.f32 %v1117, %v4338
  %v4583 = vmul.f32 %v990, %v4339
  %v4584 = vmul.f32 %v1118, %v4232
  %v4585 = vmul.f32 %v991, %v4340
  %v4586 = vmul.f32 %v1119, %v4341
  %v4587 = vmul.f32 %v992, %v4342
  %v4588 = vmul.f32 %v1120, %v4236
  %v4589 = vmul.f32 %v993, %v4343
  %v4590 = vmul.f32 %v1121, %v4344
  %v4591 = vmul.f32 %v994, %v4345
  %v4592 = vmul.f32 %v1122, %v4240
  %v4593 = vmul.f32 %v995, %v4346
  %v4594 = vmul.f32 %v1123, %v4347
  %v4595 = vmul.f32 %v996, %v4348
  %v4596 = vmul.f32 %v1124, %v4244
  %v4597 = vmul.f32 %v997, %v4349
  %v4598 = vmul.f32 %v1125, %v4350
  %v4599 = vmul.f32 %v998, %v4351
  %v4600 = vmul.f32 %v1126, %v4248
  %v4601 = vmul.f32 %v999, %v4352
  %v4602 = vmul.f32 %v1127, %v4353
  %v4603 = vmul.f32 %v1000, %v4354
  %v4604 = vmul.f32 %v1128, %v4252
  %v4605 = vmul.f32 %v1001, %v4355
  %v4606 = vmul.f32 %v1129, %v4356
  %v4607 = vmul.f32 %v1002, %v4357
  %v4608 = vmul.f32 %v1130, %v4256
  %v4609 = vmul.f32 %v1003, %v4358
  %v4610 = vmul.f32 %v1131, %v4359
  %v4611 = vmul.f32 %v1004, %v4360
  %v4612 = vmul.f32 %v1132, %v4260
  %v4613 = vmul.f32 %v1005, %v4361
  %v4614 = vmul.f32 %v1133, %v4362
  %v4615 = vmul.f32 %v1006, %v4363
  %v4616 = vmul.f32 %v1134, %v4264
  %v4617 = vmul.f32 %v1007, %v4364
  %v4618 = vmul.f32 %v1135, %v4365
  %v4619 = vmul.f32 %v1008, %v4366
  %v4620 = vmul.f32 %v1136, %v4268
  %v4621 = vmul.f32 %v1009, %v4367
  %v4622 = vmul.f32 %v1137, %v4368
  %v4623 = vmul.f32 %v1010, %v4369
  %v4624 = vmul.f32 %v1138, %v4272
  %v4625 = vmul.f32 %v1011, %v4370
  %v4626 = vmul.f32 %v1139, %v4371
  %v4627 = vmul.f32 %v1012, %v4372
  %v4628 = vmul.f32 %v1140, %v4276
  %v4757 = vrot.slane %v4501, 7
  %v4758 = vrot.slane %v4757, 4
  %v4759 = vrot.slane %v4502, 7
  %v4760 = vrot.slane %v4759, 4
  %v4761 = vrot.slane %v4503, 7
  %v4762 = vrot.slane %v4761, 4
  %v4763 = vrot.slane %v4504, 7
  %v4764 = vrot.slane %v4763, 4
  %v4765 = vrot.slane %v4505, 7
  %v4766 = vrot.slane %v4765, 4
  %v4767 = vrot.slane %v4506, 7
  %v4768 = vrot.slane %v4767, 4
  %v4769 = vrot.slane %v4507, 7
  %v4770 = vrot.slane %v4769, 4
  %v4771 = vrot.slane %v4508, 7
  %v4772 = vrot.slane %v4771, 4
  %v4773 = vrot.slane %v4509, 7
  %v4774 = vrot.slane %v4773, 4
  %v4775 = vrot.slane %v4510, 7
  %v4776 = vrot.slane %v4775, 4
  %v4777 = vrot.slane %v4511, 7
  %v4778 = vrot.slane %v4777, 4
  %v4779 = vrot.slane %v4512, 7
  %v4780 = vrot.slane %v4779, 4
  %v4781 = vrot.slane %v4513, 7
  %v4782 = vrot.slane %v4781, 4
  %v4783 = vrot.slane %v4514, 7
  %v4784 = vrot.slane %v4783, 4
  %v4785 = vrot.slane %v4515, 7
  %v4786 = vrot.slane %v4785, 4
  %v4787 = vrot.slane %v4516, 7
  %v4788 = vrot.slane %v4787, 4
  %v4789 = vrot.slane %v4517, 7
  %v4790 = vrot.slane %v4789, 4
  %v4791 = vrot.slane %v4518, 7
  %v4792 = vrot.slane %v4791, 4
  %v4793 = vrot.slane %v4519, 7
  %v4794 = vrot.slane %v4793, 4
  %v4795 = vrot.slane %v4520, 7
  %v4796 = vrot.slane %v4795, 4
  %v4797 = vrot.slane %v4521, 7
  %v4798 = vrot.slane %v4797, 4
  %v4799 = vrot.slane %v4522, 7
  %v4800 = vrot.slane %v4799, 4
  %v4801 = vrot.slane %v4523, 7
  %v4802 = vrot.slane %v4801, 4
  %v4803 = vrot.slane %v4524, 7
  %v4804 = vrot.slane %v4803, 4
  %v4805 = vrot.slane %v4525, 7
  %v4806 = vrot.slane %v4805, 4
  %v4807 = vrot.slane %v4526, 7
  %v4808 = vrot.slane %v4807, 4
  %v4809 = vrot.slane %v4527, 7
  %v4810 = vrot.slane %v4809, 4
  %v4811 = vrot.slane %v4528, 7
  %v4812 = vrot.slane %v4811, 4
  %v4813 = vrot.slane %v4529, 7
  %v4814 = vrot.slane %v4813, 4
  %v4815 = vrot.slane %v4530, 7
  %v4816 = vrot.slane %v4815, 4
  %v4817 = vrot.slane %v4531, 7
  %v4818 = vrot.slane %v4817, 4
  %v4819 = vrot.slane %v4532, 7
  %v4820 = vrot.slane %v4819, 4
  %v4821 = vrot.slane %v4533, 7
  %v4822 = vrot.slane %v4821, 4
  %v4823 = vrot.slane %v4534, 7
  %v4824 = vrot.slane %v4823, 4
  %v4825 = vrot.slane %v4535, 7
  %v4826 = vrot.slane %v4825, 4
  %v4827 = vrot.slane %v4536, 7
  %v4828 = vrot.slane %v4827, 4
  %v4829 = vrot.slane %v4537, 7
  %v4830 = vrot.slane %v4829, 4
  %v4831 = vrot.slane %v4538, 7
  %v4832 = vrot.slane %v4831, 4
  %v4833 = vrot.slane %v4539, 7
  %v4834 = vrot.slane %v4833, 4
  %v4835 = vrot.slane %v4540, 7
  %v4836 = vrot.slane %v4835, 4
  %v4837 = vrot.slane %v4541, 7
  %v4838 = vrot.slane %v4837, 4
  %v4839 = vrot.slane %v4542, 7
  %v4840 = vrot.slane %v4839, 4
  %v4841 = vrot.slane %v4543, 7
  %v4842 = vrot.slane %v4841, 4
  %v4843 = vrot.slane %v4544, 7
  %v4844 = vrot.slane %v4843, 4
  %v4845 = vrot.slane %v4545, 7
  %v4846 = vrot.slane %v4845, 4
  %v4847 = vrot.slane %v4546, 7
  %v4848 = vrot.slane %v4847, 4
  %v4849 = vrot.slane %v4547, 7
  %v4850 = vrot.slane %v4849, 4
  %v4851 = vrot.slane %v4548, 7
  %v4852 = vrot.slane %v4851, 4
  %v4853 = vrot.slane %v4549, 7
  %v4854 = vrot.slane %v4853, 4
  %v4855 = vrot.slane %v4550, 7
  %v4856 = vrot.slane %v4855, 4
  %v4857 = vrot.slane %v4551, 7
  %v4858 = vrot.slane %v4857, 4
  %v4859 = vrot.slane %v4552, 7
  %v4860 = vrot.slane %v4859, 4
  %v4861 = vrot.slane %v4553, 7
  %v4862 = vrot.slane %v4861, 4
  %v4863 = vrot.slane %v4554, 7
  %v4864 = vrot.slane %v4863, 4
  %v4865 = vrot.slane %v4555, 7
  %v4866 = vrot.slane %v4865, 4
  %v4867 = vrot.slane %v4556, 7
  %v4868 = vrot.slane %v4867, 4
  %v4869 = vrot.slane %v4557, 7
  %v4870 = vrot.slane %v4869, 4
  %v4871 = vrot.slane %v4558, 7
  %v4872 = vrot.slane %v4871, 4
  %v4873 = vrot.slane %v4559, 7
  %v4874 = vrot.slane %v4873, 4
  %v4875 = vrot.slane %v4560, 7
  %v4876 = vrot.slane %v4875, 4
  %v4877 = vrot.slane %v4561, 7
  %v4878 = vrot.slane %v4877, 4
  %v4879 = vrot.slane %v4562, 7
  %v4880 = vrot.slane %v4879, 4
  %v4881 = vrot.slane %v4563, 7
  %v4882 = vrot.slane %v4881, 4
  %v4883 = vrot.slane %v4564, 7
  %v4884 = vrot.slane %v4883, 4
  %v4885 = vrot.slane %v4565, 7
  %v4886 = vrot.slane %v4885, 4
  %v4887 = vrot.slane %v4566, 7
  %v4888 = vrot.slane %v4887, 4
  %v4889 = vrot.slane %v4567, 7
  %v4890 = vrot.slane %v4889, 4
  %v4891 = vrot.slane %v4568, 7
  %v4892 = vrot.slane %v4891, 4
  %v4893 = vrot.slane %v4569, 7
  %v4894 = vrot.slane %v4893, 4
  %v4895 = vrot.slane %v4570, 7
  %v4896 = vrot.slane %v4895, 4
  %v4897 = vrot.slane %v4571, 7
  %v4898 = vrot.slane %v4897, 4
  %v4899 = vrot.slane %v4572, 7
  %v4900 = vrot.slane %v4899, 4
  %v4901 = vrot.slane %v4573, 7
  %v4902 = vrot.slane %v4901, 4
  %v4903 = vrot.slane %v4574, 7
  %v4904 = vrot.slane %v4903, 4
  %v4905 = vrot.slane %v4575, 7
  %v4906 = vrot.slane %v4905, 4
  %v4907 = vrot.slane %v4576, 7
  %v4908 = vrot.slane %v4907, 4
  %v4909 = vrot.slane %v4577, 7
  %v4910 = vrot.slane %v4909, 4
  %v4911 = vrot.slane %v4578, 7
  %v4912 = vrot.slane %v4911, 4
  %v4913 = vrot.slane %v4579, 7
  %v4914 = vrot.slane %v4913, 4
  %v4915 = vrot.slane %v4580, 7
  %v4916 = vrot.slane %v4915, 4
  %v4917 = vrot.slane %v4581, 7
  %v4918 = vrot.slane %v4917, 4
  %v4919 = vrot.slane %v4582, 7
  %v4920 = vrot.slane %v4919, 4
  %v4921 = vrot.slane %v4583, 7
  %v4922 = vrot.slane %v4921, 4
  %v4923 = vrot.slane %v4584, 7
  %v4924 = vrot.slane %v4923, 4
  %v4925 = vrot.slane %v4585, 7
  %v4926 = vrot.slane %v4925, 4
  %v4927 = vrot.slane %v4586, 7
  %v4928 = vrot.slane %v4927, 4
  %v4929 = vrot.slane %v4587, 7
  %v4930 = vrot.slane %v4929, 4
  %v4931 = vrot.slane %v4588, 7
  %v4932 = vrot.slane %v4931, 4
  %v4933 = vrot.slane %v4589, 7
  %v4934 = vrot.slane %v4933, 4
  %v4935 = vrot.slane %v4590, 7
  %v4936 = vrot.slane %v4935, 4
  %v4937 = vrot.slane %v4591, 7
  %v4938 = vrot.slane %v4937, 4
  %v4939 = vrot.slane %v4592, 7
  %v4940 = vrot.slane %v4939, 4
  %v4941 = vrot.slane %v4593, 7
  %v4942 = vrot.slane %v4941, 4
  %v4943 = vrot.slane %v4594, 7
  %v4944 = vrot.slane %v4943, 4
  %v4945 = vrot.slane %v4595, 7
  %v4946 = vrot.slane %v4945, 4
  %v4947 = vrot.slane %v4596, 7
  %v4948 = vrot.slane %v4947, 4
  %v4949 = vrot.slane %v4597, 7
  %v4950 = vrot.slane %v4949, 4
  %v4951 = vrot.slane %v4598, 7
  %v4952 = vrot.slane %v4951, 4
  %v4953 = vrot.slane %v4599, 7
  %v4954 = vrot.slane %v4953, 4
  %v4955 = vrot.slane %v4600, 7
  %v4956 = vrot.slane %v4955, 4
  %v4957 = vrot.slane %v4601, 7
  %v4958 = vrot.slane %v4957, 4
  %v4959 = vrot.slane %v4602, 7
  %v4960 = vrot.slane %v4959, 4
  %v4961 = vrot.slane %v4603, 7
  %v4962 = vrot.slane %v4961, 4
  %v4963 = vrot.slane %v4604, 7
  %v4964 = vrot.slane %v4963, 4
  %v4965 = vrot.slane %v4605, 7
  %v4966 = vrot.slane %v4965, 4
  %v4967 = vrot.slane %v4606, 7
  %v4968 = vrot.slane %v4967, 4
  %v4969 = vrot.slane %v4607, 7
  %v4970 = vrot.slane %v4969, 4
  %v4971 = vrot.slane %v4608, 7
  %v4972 = vrot.slane %v4971, 4
  %v4973 = vrot.slane %v4609, 7
  %v4974 = vrot.slane %v4973, 4
  %v4975 = vrot.slane %v4610, 7
  %v4976 = vrot.slane %v4975, 4
  %v4977 = vrot.slane %v4611, 7
  %v4978 = vrot.slane %v4977, 4
  %v4979 = vrot.slane %v4612, 7
  %v4980 = vrot.slane %v4979, 4
  %v4981 = vrot.slane %v4613, 7
  %v4982 = vrot.slane %v4981, 4
  %v4983 = vrot.slane %v4614, 7
  %v4984 = vrot.slane %v4983, 4
  %v4985 = vrot.slane %v4615, 7
  %v4986 = vrot.slane %v4985, 4
  %v4987 = vrot.slane %v4616, 7
  %v4988 = vrot.slane %v4987, 4
  %v4989 = vrot.slane %v4617, 7
  %v4990 = vrot.slane %v4989, 4
  %v4991 = vrot.slane %v4618, 7
  %v4992 = vrot.slane %v4991, 4
  %v4993 = vrot.slane %v4619, 7
  %v4994 = vrot.slane %v4993, 4
  %v4995 = vrot.slane %v4620, 7
  %v4996 = vrot.slane %v4995, 4
  %v4997 = vrot.slane %v4621, 7
  %v4998 = vrot.slane %v4997, 4
  %v4999 = vrot.slane %v4622, 7
  %v5000 = vrot.slane %v4999, 4
  %v5001 = vrot.slane %v4623, 7
  %v5002 = vrot.slane %v5001, 4
  %v5003 = vrot.slane %v4624, 7
  %v5004 = vrot.slane %v5003, 4
  %v5005 = vrot.slane %v4625, 7
  %v5006 = vrot.slane %v5005, 4
  %v5007 = vrot.slane %v4626, 7
  %v5008 = vrot.slane %v5007, 4
  %v5009 = vrot.slane %v4627, 7
  %v5010 = vrot.slane %v5009, 4
  %v5011 = vrot.slane %v4628, 7
  %v5012 = vrot.slane %v5011, 4
  %v5141 = vadd.f32 %v3973, %v4758
  %v5142 = vadd.f32 %v3974, %v4760
  %v5143 = vadd.f32 %v3975, %v4762
  %v5144 = vadd.f32 %v3976, %v4764
  %v5145 = vadd.f32 %v3977, %v4766
  %v5146 = vadd.f32 %v3978, %v4768
  %v5147 = vadd.f32 %v3979, %v4770
  %v5148 = vadd.f32 %v3980, %v4772
  %v5149 = vadd.f32 %v3981, %v4774
  %v5150 = vadd.f32 %v3982, %v4776
  %v5151 = vadd.f32 %v3983, %v4778
  %v5152 = vadd.f32 %v3984, %v4780
  %v5153 = vadd.f32 %v3985, %v4782
  %v5154 = vadd.f32 %v3986, %v4784
  %v5155 = vadd.f32 %v3987, %v4786
  %v5156 = vadd.f32 %v3988, %v4788
  %v5157 = vadd.f32 %v3989, %v4790
  %v5158 = vadd.f32 %v3990, %v4792
  %v5159 = vadd.f32 %v3991, %v4794
  %v5160 = vadd.f32 %v3992, %v4796
  %v5161 = vadd.f32 %v3993, %v4798
  %v5162 = vadd.f32 %v3994, %v4800
  %v5163 = vadd.f32 %v3995, %v4802
  %v5164 = vadd.f32 %v3996, %v4804
  %v5165 = vadd.f32 %v3997, %v4806
  %v5166 = vadd.f32 %v3998, %v4808
  %v5167 = vadd.f32 %v3999, %v4810
  %v5168 = vadd.f32 %v4000, %v4812
  %v5169 = vadd.f32 %v4001, %v4814
  %v5170 = vadd.f32 %v4002, %v4816
  %v5171 = vadd.f32 %v4003, %v4818
  %v5172 = vadd.f32 %v4004, %v4820
  %v5173 = vadd.f32 %v4005, %v4822
  %v5174 = vadd.f32 %v4006, %v4824
  %v5175 = vadd.f32 %v4007, %v4826
  %v5176 = vadd.f32 %v4008, %v4828
  %v5177 = vadd.f32 %v4009, %v4830
  %v5178 = vadd.f32 %v4010, %v4832
  %v5179 = vadd.f32 %v4011, %v4834
  %v5180 = vadd.f32 %v4012, %v4836
  %v5181 = vadd.f32 %v4013, %v4838
  %v5182 = vadd.f32 %v4014, %v4840
  %v5183 = vadd.f32 %v4015, %v4842
  %v5184 = vadd.f32 %v4016, %v4844
  %v5185 = vadd.f32 %v4017, %v4846
  %v5186 = vadd.f32 %v4018, %v4848
  %v5187 = vadd.f32 %v4019, %v4850
  %v5188 = vadd.f32 %v4020, %v4852
  %v5189 = vadd.f32 %v4021, %v4854
  %v5190 = vadd.f32 %v4022, %v4856
  %v5191 = vadd.f32 %v4023, %v4858
  %v5192 = vadd.f32 %v4024, %v4860
  %v5193 = vadd.f32 %v4025, %v4862
  %v5194 = vadd.f32 %v4026, %v4864
  %v5195 = vadd.f32 %v4027, %v4866
  %v5196 = vadd.f32 %v4028, %v4868
  %v5197 = vadd.f32 %v4029, %v4870
  %v5198 = vadd.f32 %v4030, %v4872
  %v5199 = vadd.f32 %v4031, %v4874
  %v5200 = vadd.f32 %v4032, %v4876
  %v5201 = vadd.f32 %v4033, %v4878
  %v5202 = vadd.f32 %v4034, %v4880
  %v5203 = vadd.f32 %v4035, %v4882
  %v5204 = vadd.f32 %v4036, %v4884
  %v5205 = vadd.f32 %v4037, %v4886
  %v5206 = vadd.f32 %v4038, %v4888
  %v5207 = vadd.f32 %v4039, %v4890
  %v5208 = vadd.f32 %v4040, %v4892
  %v5209 = vadd.f32 %v4041, %v4894
  %v5210 = vadd.f32 %v4042, %v4896
  %v5211 = vadd.f32 %v4043, %v4898
  %v5212 = vadd.f32 %v4044, %v4900
  %v5213 = vadd.f32 %v4045, %v4902
  %v5214 = vadd.f32 %v4046, %v4904
  %v5215 = vadd.f32 %v4047, %v4906
  %v5216 = vadd.f32 %v4048, %v4908
  %v5217 = vadd.f32 %v4049, %v4910
  %v5218 = vadd.f32 %v4050, %v4912
  %v5219 = vadd.f32 %v4051, %v4914
  %v5220 = vadd.f32 %v4052, %v4916
  %v5221 = vadd.f32 %v4053, %v4918
  %v5222 = vadd.f32 %v4054, %v4920
  %v5223 = vadd.f32 %v4055, %v4922
  %v5224 = vadd.f32 %v4056, %v4924
  %v5225 = vadd.f32 %v4057, %v4926
  %v5226 = vadd.f32 %v4058, %v4928
  %v5227 = vadd.f32 %v4059, %v4930
  %v5228 = vadd.f32 %v4060, %v4932
  %v5229 = vadd.f32 %v4061, %v4934
  %v5230 = vadd.f32 %v4062, %v4936
  %v5231 = vadd.f32 %v4063, %v4938
  %v5232 = vadd.f32 %v4064, %v4940
  %v5233 = vadd.f32 %v4065, %v4942
  %v5234 = vadd.f32 %v4066, %v4944
  %v5235 = vadd.f32 %v4067, %v4946
  %v5236 = vadd.f32 %v4068, %v4948
  %v5237 = vadd.f32 %v4069, %v4950
  %v5238 = vadd.f32 %v4070, %v4952
  %v5239 = vadd.f32 %v4071, %v4954
  %v5240 = vadd.f32 %v4072, %v4956
  %v5241 = vadd.f32 %v4073, %v4958
  %v5242 = vadd.f32 %v4074, %v4960
  %v5243 = vadd.f32 %v4075, %v4962
  %v5244 = vadd.f32 %v4076, %v4964
  %v5245 = vadd.f32 %v4077, %v4966
  %v5246 = vadd.f32 %v4078, %v4968
  %v5247 = vadd.f32 %v4079, %v4970
  %v5248 = vadd.f32 %v4080, %v4972
  %v5249 = vadd.f32 %v4081, %v4974
  %v5250 = vadd.f32 %v4082, %v4976
  %v5251 = vadd.f32 %v4083, %v4978
  %v5252 = vadd.f32 %v4084, %v4980
  %v5253 = vadd.f32 %v4085, %v4982
  %v5254 = vadd.f32 %v4086, %v4984
  %v5255 = vadd.f32 %v4087, %v4986
  %v5256 = vadd.f32 %v4088, %v4988
  %v5257 = vadd.f32 %v4089, %v4990
  %v5258 = vadd.f32 %v4090, %v4992
  %v5259 = vadd.f32 %v4091, %v4994
  %v5260 = vadd.f32 %v4092, %v4996
  %v5261 = vadd.f32 %v4093, %v4998
  %v5262 = vadd.f32 %v4094, %v5000
  %v5263 = vadd.f32 %v4095, %v5002
  %v5264 = vadd.f32 %v4096, %v5004
  %v5265 = vadd.f32 %v4097, %v5006
  %v5266 = vadd.f32 %v4098, %v5008
  %v5267 = vadd.f32 %v4099, %v5010
  %v5268 = vadd.f32 %v4100, %v5012
  %v5269 = vld [vmem:[%s6] sm:$0xff]
  %v5270 = vld [vmem:[%s6 + $0x8] sm:$0xff]
  %v5271 = vld [vmem:[%s6 + $0x10] sm:$0xff]
  %v5272 = vld [vmem:[%s6 + $0x18] sm:$0xff]
  %v5273 = vld [vmem:[%s7] sm:$0x1]
  %v5275 = vperm.slane %v5273, 0
  %v5405 = vperm.slane %v5141, 0
  %v5406 = vperm.slane %v5142, 0
  %v5407 = vperm.slane %v5143, 0
  %v5408 = vperm.slane %v5144, 0
  %v5409 = vperm.slane %v5145, 0
  %v5410 = vperm.slane %v5146, 0
  %v5411 = vperm.slane %v5147, 0
  %v5412 = vperm.slane %v5148, 0
  %v5413 = vperm.slane %v5149, 0
  %v5414 = vperm.slane %v5150, 0
  %v5415 = vperm.slane %v5151, 0
  %v5416 = vperm.slane %v5152, 0
  %v5417 = vperm.slane %v5153, 0
  %v5418 = vperm.slane %v5154, 0
  %v5419 = vperm.slane %v5155, 0
  %v5420 = vperm.slane %v5156, 0
  %v5421 = vperm.slane %v5157, 0
  %v5422 = vperm.slane %v5158, 0
  %v5423 = vperm.slane %v5159, 0
  %v5424 = vperm.slane %v5160, 0
  %v5425 = vperm.slane %v5161, 0
  %v5426 = vperm.slane %v5162, 0
  %v5427 = vperm.slane %v5163, 0
  %v5428 = vperm.slane %v5164, 0
  %v5429 = vperm.slane %v5165, 0
  %v5430 = vperm.slane %v5166, 0
  %v5431 = vperm.slane %v5167, 0
  %v5432 = vperm.slane %v5168, 0
  %v5433 = vperm.slane %v5169, 0
  %v5434 = vperm.slane %v5170, 0
  %v5435 = vperm.slane %v5171, 0
  %v5436 = vperm.slane %v5172, 0
  %v5437 = vperm.slane %v5173, 0
  %v5438 = vperm.slane %v5174, 0
  %v5439 = vperm.slane %v5175, 0
  %v5440 = vperm.slane %v5176, 0
  %v5441 = vperm.slane %v5177, 0
  %v5442 = vperm.slane %v5178, 0
  %v5443 = vperm.slane %v5179, 0
  %v5444 = vperm.slane %v5180, 0
  %v5445 = vperm.slane %v5181, 0
  %v5446 = vperm.slane %v5182, 0
  %v5447 = vperm.slane %v5183, 0
  %v5448 = vperm.slane %v5184, 0
  %v5449 = vperm.slane %v5185, 0
  %v5450 = vperm.slane %v5186, 0
  %v5451 = vperm.slane %v5187, 0
  %v5452 = vperm.slane %v5188, 0
  %v5453 = vperm.slane %v5189, 0
  %v5454 = vperm.slane %v5190, 0
  %v5455 = vperm.slane %v5191, 0
  %v5456 = vperm.slane %v5192, 0
  %v5457 = vperm.slane %v5193, 0
  %v5458 = vperm.slane %v5194, 0
  %v5459 = vperm.slane %v5195, 0
  %v5460 = vperm.slane %v5196, 0
  %v5461 = vperm.slane %v5197, 0
  %v5462 = vperm.slane %v5198, 0
  %v5463 = vperm.slane %v5199, 0
  %v5464 = vperm.slane %v5200, 0
  %v5465 = vperm.slane %v5201, 0
  %v5466 = vperm.slane %v5202, 0
  %v5467 = vperm.slane %v5203, 0
  %v5468 = vperm.slane %v5204, 0
  %v5469 = vperm.slane %v5205, 0
  %v5470 = vperm.slane %v5206, 0
  %v5471 = vperm.slane %v5207, 0
  %v5472 = vperm.slane %v5208, 0
  %v5473 = vperm.slane %v5209, 0
  %v5474 = vperm.slane %v5210, 0
  %v5475 = vperm.slane %v5211, 0
  %v5476 = vperm.slane %v5212, 0
  %v5477 = vperm.slane %v5213, 0
  %v5478 = vperm.slane %v5214, 0
  %v5479 = vperm.slane %v5215, 0
  %v5480 = vperm.slane %v5216, 0
  %v5481 = vperm.slane %v5217, 0
  %v5482 = vperm.slane %v5218, 0
  %v5483 = vperm.slane %v5219, 0
  %v5484 = vperm.slane %v5220, 0
  %v5485 = vperm.slane %v5221, 0
  %v5486 = vperm.slane %v5222, 0
  %v5487 = vperm.slane %v5223, 0
  %v5488 = vperm.slane %v5224, 0
  %v5489 = vperm.slane %v5225, 0
  %v5490 = vperm.slane %v5226, 0
  %v5491 = vperm.slane %v5227, 0
  %v5492 = vperm.slane %v5228, 0
  %v5493 = vperm.slane %v5229, 0
  %v5494 = vperm.slane %v5230, 0
  %v5495 = vperm.slane %v5231, 0
  %v5496 = vperm.slane %v5232, 0
  %v5497 = vperm.slane %v5233, 0
  %v5498 = vperm.slane %v5234, 0
  %v5499 = vperm.slane %v5235, 0
  %v5500 = vperm.slane %v5236, 0
  %v5501 = vperm.slane %v5237, 0
  %v5502 = vperm.slane %v5238, 0
  %v5503 = vperm.slane %v5239, 0
  %v5504 = vperm.slane %v5240, 0
  %v5505 = vperm.slane %v5241, 0
  %v5506 = vperm.slane %v5242, 0
  %v5507 = vperm.slane %v5243, 0
  %v5508 = vperm.slane %v5244, 0
  %v5509 = vperm.slane %v5245, 0
  %v5510 = vperm.slane %v5246, 0
  %v5511 = vperm.slane %v5247, 0
  %v5512 = vperm.slane %v5248, 0
  %v5513 = vperm.slane %v5249, 0
  %v5514 = vperm.slane %v5250, 0
  %v5515 = vperm.slane %v5251, 0
  %v5516 = vperm.slane %v5252, 0
  %v5517 = vperm.slane %v5253, 0
  %v5518 = vperm.slane %v5254, 0
  %v5519 = vperm.slane %v5255, 0
  %v5520 = vperm.slane %v5256, 0
  %v5521 = vperm.slane %v5257, 0
  %v5522 = vperm.slane %v5258, 0
  %v5523 = vperm.slane %v5259, 0
  %v5524 = vperm.slane %v5260, 0
  %v5525 = vperm.slane %v5261, 0
  %v5526 = vperm.slane %v5262, 0
  %v5527 = vperm.slane %v5263, 0
  %v5528 = vperm.slane %v5264, 0
  %v5529 = vperm.slane %v5265, 0
  %v5530 = vperm.slane %v5266, 0
  %v5531 = vperm.slane %v5267, 0
  %v5532 = vperm.slane %v5268, 0
  %vm5533 = vcmask 1041409
  %v5534 = vsel %vm5533, %v5406, %v5405
  %vm5535 = vcmask 1042434
  %v5536 = vsel %vm5535, %v5407, %v5534
  %vm5537 = vcmask 1043459
  %v5538 = vsel %vm5537, %v5408, %v5536
  %vm5539 = vcmask 1044484
  %v5540 = vsel %vm5539, %v5409, %v5538
  %vm5541 = vcmask 1045509
  %v5542 = vsel %vm5541, %v5410, %v5540
  %vm5543 = vcmask 1046534
  %v5544 = vsel %vm5543, %v5411, %v5542
  %vm5545 = vcmask 1047559
  %v5546 = vsel %vm5545, %v5412, %v5544
  %v5547 = vsel %vm5533, %v5414, %v5413
  %v5548 = vsel %vm5535, %v5415, %v5547
  %v5549 = vsel %vm5537, %v5416, %v5548
  %v5550 = vsel %vm5539, %v5417, %v5549
  %v5551 = vsel %vm5541, %v5418, %v5550
  %v5552 = vsel %vm5543, %v5419, %v5551
  %v5553 = vsel %vm5545, %v5420, %v5552
  %v5554 = vsel %vm5533, %v5422, %v5421
  %v5555 = vsel %vm5535, %v5423, %v5554
  %v5556 = vsel %vm5537, %v5424, %v5555
  %v5557 = vsel %vm5539, %v5425, %v5556
  %v5558 = vsel %vm5541, %v5426, %v5557
  %v5559 = vsel %vm5543, %v5427, %v5558
  %v5560 = vsel %vm5545, %v5428, %v5559
  %v5561 = vsel %vm5533, %v5430, %v5429
  %v5562 = vsel %vm5535, %v5431, %v5561
  %v5563 = vsel %vm5537, %v5432, %v5562
  %v5564 = vsel %vm5539, %v5433, %v5563
  %v5565 = vsel %vm5541, %v5434, %v5564
  %v5566 = vsel %vm5543, %v5435, %v5565
  %v5567 = vsel %vm5545, %v5436, %v5566
  %v5568 = vsel %vm5533, %v5438, %v5437
  %v5569 = vsel %vm5535, %v5439, %v5568
  %v5570 = vsel %vm5537, %v5440, %v5569
  %v5571 = vsel %vm5539, %v5441, %v5570
  %v5572 = vsel %vm5541, %v5442, %v5571
  %v5573 = vsel %vm5543, %v5443, %v5572
  %v5574 = vsel %vm5545, %v5444, %v5573
  %v5575 = vsel %vm5533, %v5446, %v5445
  %v5576 = vsel %vm5535, %v5447, %v5575
  %v5577 = vsel %vm5537, %v5448, %v5576
  %v5578 = vsel %vm5539, %v5449, %v5577
  %v5579 = vsel %vm5541, %v5450, %v5578
  %v5580 = vsel %vm5543, %v5451, %v5579
  %v5581 = vsel %vm5545, %v5452, %v5580
  %v5582 = vsel %vm5533, %v5454, %v5453
  %v5583 = vsel %vm5535, %v5455, %v5582
  %v5584 = vsel %vm5537, %v5456, %v5583
  %v5585 = vsel %vm5539, %v5457, %v5584
  %v5586 = vsel %vm5541, %v5458, %v5585
  %v5587 = vsel %vm5543, %v5459, %v5586
  %v5588 = vsel %vm5545, %v5460, %v5587
  %v5589 = vsel %vm5533, %v5462, %v5461
  %v5590 = vsel %vm5535, %v5463, %v5589
  %v5591 = vsel %vm5537, %v5464, %v5590
  %v5592 = vsel %vm5539, %v5465, %v5591
  %v5593 = vsel %vm5541, %v5466, %v5592
  %v5594 = vsel %vm5543, %v5467, %v5593
  %v5595 = vsel %vm5545, %v5468, %v5594
  %v5596 = vsel %vm5533, %v5470, %v5469
  %v5597 = vsel %vm5535, %v5471, %v5596
  %v5598 = vsel %vm5537, %v5472, %v5597
  %v5599 = vsel %vm5539, %v5473, %v5598
  %v5600 = vsel %vm5541, %v5474, %v5599
  %v5601 = vsel %vm5543, %v5475, %v5600
  %v5602 = vsel %vm5545, %v5476, %v5601
  %v5603 = vsel %vm5533, %v5478, %v5477
  %v5604 = vsel %vm5535, %v5479, %v5603
  %v5605 = vsel %vm5537, %v5480, %v5604
  %v5606 = vsel %vm5539, %v5481, %v5605
  %v5607 = vsel %vm5541, %v5482, %v5606
  %v5608 = vsel %vm5543, %v5483, %v5607
  %v5609 = vsel %vm5545, %v5484, %v5608
  %v5610 = vsel %vm5533, %v5486, %v5485
  %v5611 = vsel %vm5535, %v5487, %v5610
  %v5612 = vsel %vm5537, %v5488, %v5611
  %v5613 = vsel %vm5539, %v5489, %v5612
  %v5614 = vsel %vm5541, %v5490, %v5613
  %v5615 = vsel %vm5543, %v5491, %v5614
  %v5616 = vsel %vm5545, %v5492, %v5615
  %v5617 = vsel %vm5533, %v5494, %v5493
  %v5618 = vsel %vm5535, %v5495, %v5617
  %v5619 = vsel %vm5537, %v5496, %v5618
  %v5620 = vsel %vm5539, %v5497, %v5619
  %v5621 = vsel %vm5541, %v5498, %v5620
  %v5622 = vsel %vm5543, %v5499, %v5621
  %v5623 = vsel %vm5545, %v5500, %v5622
  %v5624 = vsel %vm5533, %v5502, %v5501
  %v5625 = vsel %vm5535, %v5503, %v5624
  %v5626 = vsel %vm5537, %v5504, %v5625
  %v5627 = vsel %vm5539, %v5505, %v5626
  %v5628 = vsel %vm5541, %v5506, %v5627
  %v5629 = vsel %vm5543, %v5507, %v5628
  %v5630 = vsel %vm5545, %v5508, %v5629
  %v5631 = vsel %vm5533, %v5510, %v5509
  %v5632 = vsel %vm5535, %v5511, %v5631
  %v5633 = vsel %vm5537, %v5512, %v5632
  %v5634 = vsel %vm5539, %v5513, %v5633
  %v5635 = vsel %vm5541, %v5514, %v5634
  %v5636 = vsel %vm5543, %v5515, %v5635
  %v5637 = vsel %vm5545, %v5516, %v5636
  %v5638 = vsel %vm5533, %v5518, %v5517
  %v5639 = vsel %vm5535, %v5519, %v5638
  %v5640 = vsel %vm5537, %v5520, %v5639
  %v5641 = vsel %vm5539, %v5521, %v5640
  %v5642 = vsel %vm5541, %v5522, %v5641
  %v5643 = vsel %vm5543, %v5523, %v5642
  %v5644 = vsel %vm5545, %v5524, %v5643
  %v5645 = vsel %vm5533, %v5526, %v5525
  %v5646 = vsel %vm5535, %v5527, %v5645
  %v5647 = vsel %vm5537, %v5528, %v5646
  %v5648 = vsel %vm5539, %v5529, %v5647
  %v5649 = vsel %vm5541, %v5530, %v5648
  %v5650 = vsel %vm5543, %v5531, %v5649
  %v5651 = vsel %vm5545, %v5532, %v5650
  %v5652 = vsel %vm683, %v5546, 0
  %v5654 = vsel %vm683, %v5553, 0
  %v5656 = vsel %vm683, %v5560, 0
  %v5658 = vsel %vm683, %v5567, 0
  %v5660 = vsel %vm683, %v5574, 0
  %v5662 = vsel %vm683, %v5581, 0
  %v5664 = vsel %vm683, %v5588, 0
  %v5666 = vsel %vm683, %v5595, 0
  %v5668 = vsel %vm683, %v5602, 0
  %v5670 = vsel %vm683, %v5609, 0
  %v5672 = vsel %vm683, %v5616, 0
  %v5674 = vsel %vm683, %v5623, 0
  %v5676 = vsel %vm683, %v5630, 0
  %v5678 = vsel %vm683, %v5637, 0
  %v5680 = vsel %vm683, %v5644, 0
  %v5682 = vsel %vm683, %v5651, 0
  %5684 = vmatpush.msra.mxu0 0.0
  %5685 = vmatpush.msra.mxu0 0.0
  %5686 = vmatpush.msra.mxu0 0.0
  %5687 = vmatpush.msra.mxu0 0.0
  %5688 = vmatpush.msra.mxu0 0.0
  %5689 = vmatpush.msra.mxu0 0.0
  %5690 = vmatpush.msra.mxu0 0.0
  %5691 = vmatpush.msra.mxu0 0.0
  %5692 = vmatpush.msra.mxu0 0.0
  %5693 = vmatpush.msra.mxu0 0.0
  %5694 = vmatpush.msra.mxu0 0.0
  %5695 = vmatpush.msra.mxu0 0.0
  %5696 = vmatpush.msra.mxu0 %v5272
  %5697 = vmatpush.msra.mxu0 %v5271
  %5698 = vmatpush.msra.mxu0 %v5270
  %5699 = vmatpush.msra.mxu0 %v5269
  %5700 = vmatmul.f32.gmra.mxu0 %v5652
  %v5701 = vpop.f32.mrf.mxu0
  %v5702 = vadd.f32 %v5275, %v5701
  %5703 = vmatmul.f32.gmra.mxu0 %v5654
  %v5704 = vpop.f32.mrf.mxu0
  %v5705 = vadd.f32 %v5275, %v5704
  %5706 = vmatmul.f32.gmra.mxu0 %v5656
  %v5707 = vpop.f32.mrf.mxu0
  %v5708 = vadd.f32 %v5275, %v5707
  %5709 = vmatmul.f32.gmra.mxu0 %v5658
  %v5710 = vpop.f32.mrf.mxu0
  %v5711 = vadd.f32 %v5275, %v5710
  %5712 = vmatmul.f32.gmra.mxu0 %v5660
  %v5713 = vpop.f32.mrf.mxu0
  %v5714 = vadd.f32 %v5275, %v5713
  %5715 = vmatmul.f32.gmra.mxu0 %v5662
  %v5716 = vpop.f32.mrf.mxu0
  %v5717 = vadd.f32 %v5275, %v5716
  %5718 = vmatmul.f32.gmra.mxu0 %v5664
  %v5719 = vpop.f32.mrf.mxu0
  %v5720 = vadd.f32 %v5275, %v5719
  %5721 = vmatmul.f32.gmra.mxu0 %v5666
  %v5722 = vpop.f32.mrf.mxu0
  %v5723 = vadd.f32 %v5275, %v5722
  %5724 = vmatmul.f32.gmra.mxu0 %v5668
  %v5725 = vpop.f32.mrf.mxu0
  %v5726 = vadd.f32 %v5275, %v5725
  %5727 = vmatmul.f32.gmra.mxu0 %v5670
  %v5728 = vpop.f32.mrf.mxu0
  %v5729 = vadd.f32 %v5275, %v5728
  %5730 = vmatmul.f32.gmra.mxu0 %v5672
  %v5731 = vpop.f32.mrf.mxu0
  %v5732 = vadd.f32 %v5275, %v5731
  %5733 = vmatmul.f32.gmra.mxu0 %v5674
  %v5734 = vpop.f32.mrf.mxu0
  %v5735 = vadd.f32 %v5275, %v5734
  %5736 = vmatmul.f32.gmra.mxu0 %v5676
  %v5737 = vpop.f32.mrf.mxu0
  %v5738 = vadd.f32 %v5275, %v5737
  %5739 = vmatmul.f32.gmra.mxu0 %v5678
  %v5740 = vpop.f32.mrf.mxu0
  %v5741 = vadd.f32 %v5275, %v5740
  %5742 = vmatmul.f32.gmra.mxu0 %v5680
  %v5743 = vpop.f32.mrf.mxu0
  %v5744 = vadd.f32 %v5275, %v5743
  %5745 = vmatmul.f32.gmra.mxu0 %v5682
  %v5746 = vpop.f32.mrf.mxu0
  %v5747 = vadd.f32 %v5275, %v5746
  %5748 = vdwg.mxu0
  %vm5749 = vcmask 64512
  %5750 = vst.msk [vmem:[%s8] sm:$0xff] %vm5749, %v5702
  %5751 = vst.msk [vmem:[%s8 + $0x8] sm:$0xff] %vm5749, %v5705
  %5752 = vst.msk [vmem:[%s8 + $0x10] sm:$0xff] %vm5749, %v5708
  %5753 = vst.msk [vmem:[%s8 + $0x18] sm:$0xff] %vm5749, %v5711
  %5754 = vst.msk [vmem:[%s8 + $0x20] sm:$0xff] %vm5749, %v5714
  %5755 = vst.msk [vmem:[%s8 + $0x28] sm:$0xff] %vm5749, %v5717
  %5756 = vst.msk [vmem:[%s8 + $0x30] sm:$0xff] %vm5749, %v5720
  %5757 = vst.msk [vmem:[%s8 + $0x38] sm:$0xff] %vm5749, %v5723
  %5758 = vst.msk [vmem:[%s8 + $0x40] sm:$0xff] %vm5749, %v5726
  %5759 = vst.msk [vmem:[%s8 + $0x48] sm:$0xff] %vm5749, %v5729
  %5760 = vst.msk [vmem:[%s8 + $0x50] sm:$0xff] %vm5749, %v5732
  %5761 = vst.msk [vmem:[%s8 + $0x58] sm:$0xff] %vm5749, %v5735
  %5762 = vst.msk [vmem:[%s8 + $0x60] sm:$0xff] %vm5749, %v5738
  %5763 = vst.msk [vmem:[%s8 + $0x68] sm:$0xff] %vm5749, %v5741
  %5764 = vst.msk [vmem:[%s8 + $0x70] sm:$0xff] %vm5749, %v5744
  %5765 = vst.msk [vmem:[%s8 + $0x78] sm:$0xff] %vm5749, %v5747
  // Predicated region
  $region34: #{liif_forward.1} parent=0 // pred_check
    _
  $region35: #{liif_forward.1} parent=0 // pred_check_branch
    %5767 = sbr.rel (0) target = $region37
  $region36: #{liif_forward.1} parent=0 // pred_region
    _
  $region37: #{liif_forward.1} parent=0 // pred_fallthru
    _
  // Predicated region
  $region38: #{liif_forward.1} parent=0 // pred_check
    _
  $region39: #{liif_forward.1} parent=0 // pred_check_branch
    %5769 = sbr.rel (0) target = $region41
  $region40: #{liif_forward.1} parent=0 // pred_region
    _
  $region41: #{liif_forward.1} parent=0 // pred_fallthru
    _

</llo_original>
